<compile_context>
chip_gen: v5e
topology: v5e:2x2
jax: 0.10.0
libtpu: 0.0.40
codegen_flags: <defaults>
</compile_context>

<pallas_src>
import functools

import jax
import jax.numpy as jnp
from jax import lax
from jax.experimental import pallas as pl
from jax.experimental.pallas import tpu as pltpu
import numpy as np

_VMEM_LIMIT = 48 * 1024 * 1024  # above default scoped limit, safe on v5e/v6e/v7x


def _round_up(x, m):
    return (x + m - 1) // m * m


def _cdiv(a, b):
    return -(-a // b)


def _pick_row_tile(rows, lanes, cap_bytes=4 << 20):
    """Row tile (multiple of 8) dividing the 8-padded row count, <= ~4 MiB."""
    rows8 = _round_up(rows, 8)
    rt = 8
    while rows8 % (rt * 2) == 0 and (rt * 2) * lanes * 4 <= cap_bytes:
        rt *= 2
    return rt


def _pick_tm(lq_img, hw, t, cin):
    """Lane tile: multiple of the halo width hw, keeping the stacked
    (t*cin, tm) rhs around <= 2 MiB and tm <= ~1024 lanes."""
    cap_lanes = max(hw, ((2 << 20) // max(1, 4 * t * cin)) // hw * hw)
    target = max(hw, min(1024, cap_lanes) // hw * hw)
    return hw * max(1, min(_cdiv(lq_img, hw), target // hw))


def _pick_cout_tile(cout):
    """Bound accumulator/output vreg pressure for wide layers."""
    if cout <= 256:
        return cout, cout
    ct = 256
    return ct, _round_up(cout, ct)


# ------------------------------ Pallas kernels ------------------------------

def _conv_taps_kernel(x0_ref, xh_ref, w_ref, s_ref, o_ref, *, taps, fuse_norm):
    """Conv as one (Cout_t, T*Cin) x (T*Cin, tm) matmul, lane-dense output.

    x0_ref : (1, Q, Cin, tm)  current lane tile (mean-centered if fuse_norm)
    xh_ref : (1, Q, Cin, hw)  narrow halo = lanes immediately after the tile
    w_ref  : (Cout_t, T*Cin)  taps stacked along K (tap-major)
    s_ref  : (1, Cin, 1)      per-(n, c) rsqrt(var + eps)  (read iff fuse_norm)
    o_ref  : (1, Cout_t, tm)
    """
    x0 = x0_ref[0]                                  # (Q, Cin, tm)
    xh = xh_ref[0]                                  # (Q, Cin, hw)
    if fuse_norm:
        inv = s_ref[0]                              # (Cin, 1), inv > 0
        # relu((x - m) * inv) == relu(x - m) * inv ; x is already centered and
        # the zero pad lanes stay exactly 0 after this.
        x0 = jnp.maximum(x0, 0.0) * inv
        xh = jnp.maximum(xh, 0.0) * inv
    pieces = []
    for q, off in taps:                             # static unrolled tap list
        if off == 0:
            pieces.append(x0[q])
        else:
            pieces.append(
                jnp.concatenate([x0[q, :, off:], xh[q, :, :off]], axis=-1))
    rhs = pieces[0] if len(pieces) == 1 else jnp.concatenate(pieces, axis=0)
    o_ref[0] = jnp.dot(w_ref[...], rhs, preferred_element_type=jnp.float32)


def _row_stats_kernel(x_ref, o_ref):
    # Per-row [sum, sum(x^2)] in f32 (single HBM read of the activation).
    x = x_ref[...]
    s1 = jnp.sum(x, axis=-1, keepdims=True)
    s2 = jnp.sum(x * x, axis=-1, keepdims=True)
    o_ref[...] = jnp.concatenate([s1, s2], axis=-1)


def _row_affine_kernel(x_ref, s_ref, o_ref, *, relu):
    # o = [relu]((x - mean_row) * inv_row)
    y = (x_ref[...] - s_ref[:, 0:1]) * s_ref[:, 1:2]
    if relu:
        y = jnp.maximum(y, 0.0)
    o_ref[...] = y


def _row_affine_add_kernel(x_ref, y_ref, s_ref, o_ref):
    # o = y + (x - mean_row) * inv_row   (fused BatchNorm + residual add)
    o_ref[...] = y_ref[...] + (x_ref[...] - s_ref[:, 0:1]) * s_ref[:, 1:2]


# ------------------------------ wrapped ops ---------------------------------

def conv2d_fused(x, w, *, stride=1, norm_stats=None):
    """nn.Conv2d(k, stride, padding=k//2, bias=False) on an NCHW activation,
    optionally fused with a preceding InstanceNorm2d(affine=False) + ReLU whose
    per-(n, c) statistics are given as norm_stats = (mean, inv), each (N, Cin).

    Returns (N, Cout, Ho, Wo) float32.
    """
    N, Cin, H, W = x.shape
    Cout, Cin2, k, k2 = w.shape
    assert Cin2 == Cin and k2 == k
    pad = k // 2
    fuse_norm = norm_stats is not None

    if fuse_norm:
        mean, inv = norm_stats
        # Centering here fuses into the pad/reshape prep pass below, so pad
        # lanes are exactly 0 after the in-kernel relu(.)*inv.
        x = x - mean[:, :, None, None]

    if stride == 1:
        Ho, Wo = H, W
        Hq, Wq = H + 2 * pad, W + 2 * pad
        xp = x if pad == 0 else jnp.pad(
            x, ((0, 0), (0, 0), (pad, pad), (pad, pad)))
        xq = xp.reshape(N, 1, Cin, Hq * Wq)
        taps = tuple((0, kh * Wq + kw) for kh in range(k) for kw in range(k))
        Q = 1
    else:
        assert stride == 2 and k == 3 and H % 2 == 0 and W % 2 == 0, (
            "stride-2 path expects a 3x3 kernel and even spatial dims")
        Ho, Wo = H // 2, W // 2
        Hq, Wq = Ho + 1, Wo + 1
        xp = jnp.pad(x, ((0, 0), (0, 0), (1, 1), (1, 1)))
        # 2x2 parity-quadrant split: stride-2 conv -> stride-1 lane shifts.
        xq = xp.reshape(N, Cin, Hq, 2, Wq, 2).transpose(0, 3, 5, 1, 2, 4)
        xq = xq.reshape(N, 4, Cin, Hq * Wq)
        taps = tuple(((kh % 2) * 2 + (kw % 2), (kh // 2) * Wq + (kw // 2))
                     for kh in range(3) for kw in range(3))
        Q = 4

    T = k * k
    Lq = Hq * Wq                                  # lanes per image (per quad)
    off_max = max(off for _, off in taps)
    hw = max(128, _round_up(off_max + 1, 128))    # narrow halo width >= off_max
    tm = _pick_tm(Lq, hw, T, Cin)                 # tm is a multiple of hw
    G = _cdiv(Lq, tm)
    Lx = (G + 1) * tm                             # room for the last tile's halo
    xq = jnp.pad(xq, ((0, 0), (0, 0), (0, 0), (0, Lx - Lq)))

    # Weights: (Cout, Cin, k, k) -> (Cout_p, T*Cin), tap-major K ordering that
    # matches the in-kernel rhs stacking.
    w2 = jnp.transpose(w.reshape(Cout, Cin, T), (0, 2, 1)).reshape(Cout, T * Cin)
    cout_t, Cout_p = _pick_cout_tile(Cout)
    if Cout_p != Cout:
        w2 = jnp.pad(w2, ((0, Cout_p - Cout), (0, 0)))
    CoT = Cout_p // cout_t

    sarr = (inv if fuse_norm else jnp.ones((N, Cin), jnp.float32)).reshape(N, Cin, 1)
    halo_step = tm // hw

    out = pl.pallas_call(
        functools.partial(_conv_taps_kernel, taps=taps, fuse_norm=fuse_norm),
        out_shape=jax.ShapeDtypeStruct((N, Cout_p, G * tm), jnp.float32),
        grid=(N, G, CoT),            # Cout innermost -> activation tile reused
        in_specs=[
            pl.BlockSpec((1, Q, Cin, tm), lambda n, i, co: (n, 0, 0, i)),
            pl.BlockSpec((1, Q, Cin, hw),
                         lambda n, i, co: (n, 0, 0, (i + 1) * halo_step)),
            pl.BlockSpec((cout_t, T * Cin), lambda n, i, co: (co, 0)),
            pl.BlockSpec((1, Cin, 1), lambda n, i, co: (n, 0, 0)),
        ],
        out_specs=pl.BlockSpec((1, cout_t, tm), lambda n, i, co: (n, co, i)),
        compiler_params=pltpu.CompilerParams(
            dimension_semantics=("parallel", "parallel", "parallel"),
            vmem_limit_bytes=_VMEM_LIMIT),
    )(xq, xq, w2, sarr)

    out = out[:, :Cout, :Lq].reshape(N, Cout, Hq, Wq)[:, :, :Ho, :Wo]
    return out


def _row_stats(x2):
    """Per-row [sum, sum(x^2)] of a (rows, L) array (row-tiled Pallas kernel)."""
    rows, L = x2.shape
    rt = _pick_row_tile(rows, L)
    rows_p = _round_up(rows, rt)
    if rows_p != rows:
        x2 = jnp.pad(x2, ((0, rows_p - rows), (0, 0)))
    s = pl.pallas_call(
        _row_stats_kernel,
        out_shape=jax.ShapeDtypeStruct((rows_p, 2), jnp.float32),
        grid=(rows_p // rt,),
        in_specs=[pl.BlockSpec((rt, L), lambda i: (i, 0))],
        out_specs=pl.BlockSpec((rt, 2), lambda i: (i, 0)),
        compiler_params=pltpu.CompilerParams(
            dimension_semantics=("parallel",), vmem_limit_bytes=_VMEM_LIMIT),
    )(x2)
    return s[:rows]


def instance_norm_stats(x, *, eps=1e-5):
    """Per-(n, c) mean and rsqrt(var + eps) of an NCHW activation, each (N, C)."""
    N, C, H, W = x.shape
    L = H * W
    s = _row_stats(x.reshape(N * C, L)).reshape(N, C, 2)
    mean = s[..., 0] / L
    var = jnp.maximum(s[..., 1] / L - mean * mean, 0.0)
    return mean, lax.rsqrt(var + eps)


def _rows_apply(kernel, arrs, stats):
    rows, L = arrs[0].shape
    rt = _pick_row_tile(rows, L)
    rows_p = _round_up(rows, rt)

    def padr(a):
        return a if rows_p == rows else jnp.pad(a, ((0, rows_p - rows), (0, 0)))

    ins = [padr(a) for a in arrs] + [padr(stats)]
    o = pl.pallas_call(
        kernel,
        out_shape=jax.ShapeDtypeStruct((rows_p, L), jnp.float32),
        grid=(rows_p // rt,),
        in_specs=[pl.BlockSpec((rt, L), lambda i: (i, 0)) for _ in arrs]
                 + [pl.BlockSpec((rt, 2), lambda i: (i, 0))],
        out_specs=pl.BlockSpec((rt, L), lambda i: (i, 0)),
        compiler_params=pltpu.CompilerParams(
            dimension_semantics=("parallel",), vmem_limit_bytes=_VMEM_LIMIT),
    )(*ins)
    return o[:rows]


def instance_norm_relu(x, *, eps=1e-5):
    """Standalone InstanceNorm2d + ReLU (only used when no conv consumes it)."""
    N, C, H, W = x.shape
    mean, inv = instance_norm_stats(x, eps=eps)
    stats = jnp.stack([mean.reshape(-1), inv.reshape(-1)], axis=-1)
    o = _rows_apply(functools.partial(_row_affine_kernel, relu=True),
                    [x.reshape(N * C, H * W)], stats)
    return o.reshape(N, C, H, W)


def batchnorm_add(xd, y, *, eps=1e-5):
    """out = y + BatchNorm2d(xd) (train-mode batch stats, weight=1, bias=0)."""
    N, C, H, W = xd.shape
    L = H * W
    s = _row_stats(xd.reshape(N * C, L)).reshape(N, C, 2).sum(axis=0)   # (C, 2)
    cnt = N * L
    mean = s[:, 0] / cnt
    var = jnp.maximum(s[:, 1] / cnt - mean * mean, 0.0)
    inv = lax.rsqrt(var + eps)
    stats = jnp.tile(jnp.stack([mean, inv], axis=-1), (N, 1))           # (N*C, 2)
    o = _rows_apply(_row_affine_add_kernel,
                    [xd.reshape(N * C, L), y.reshape(N * C, L)], stats)
    return o.reshape(N, C, H, W)


# ---------------------------- module forwards -------------------------------

def residual_bottleneck_forward(x, params, *, eps=1e-5):
    """Residual_Bottleneck(in_ch, downsample=True).forward on an NCHW input."""
    y = conv2d_fused(x, params["conv1"], stride=1,
                     norm_stats=instance_norm_stats(x, eps=eps))   # IN+ReLU+1x1
    y = conv2d_fused(y, params["conv2"], stride=2,
                     norm_stats=instance_norm_stats(y, eps=eps))   # IN+ReLU+3x3 s2
    y = conv2d_fused(y, params["conv3"], stride=1,
                     norm_stats=instance_norm_stats(y, eps=eps))   # IN+ReLU+3x3
    xd = conv2d_fused(x, params["down_conv"], stride=2)            # skip conv
    return batchnorm_add(xd, y, eps=eps)                           # BN + add


def double_conv_forward(x, params, *, eps=1e-5):
    """unet_input_conv / unet_double_conv forward (used when in_ch <= 3)."""
    y = conv2d_fused(x, params["dc_conv1"], stride=1)
    y2 = conv2d_fused(y, params["dc_conv2"], stride=1,
                      norm_stats=instance_norm_stats(y, eps=eps))
    return instance_norm_relu(y2, eps=eps)


def unet_down_conv_forward(x, params, *, in_ch, out_ch, ker=3):
    if in_ch in (1, 2, 3):
        return double_conv_forward(x, params)
    return residual_bottleneck_forward(x, params)


def init_params(key, in_ch, out_ch, ker=3):
    if in_ch in (1, 2, 3):
        k1, k2 = jax.random.split(key)
        return {
            "dc_conv1": 0.1 * jax.random.normal(k1, (out_ch, in_ch, ker, ker), jnp.float32),
            "dc_conv2": 0.1 * jax.random.normal(k2, (out_ch, out_ch, ker, ker), jnp.float32),
        }
    k1, k2, k3, k4 = jax.random.split(key, 4)
    return {
        "conv1": 0.1 * jax.random.normal(k1, (in_ch, in_ch, 1, 1), jnp.float32),
        "conv2": 0.1 * jax.random.normal(k2, (in_ch, in_ch, 3, 3), jnp.float32),
        "conv3": 0.1 * jax.random.normal(k3, (2 * in_ch, in_ch, 3, 3), jnp.float32),
        "down_conv": 0.1 * jax.random.normal(k4, (2 * in_ch, in_ch, 3, 3), jnp.float32),
    }


# --------------------------- pure-JAX reference ------------------------------

def _ref_conv(x, w, stride, pad):
    return lax.conv_general_dilated(
        x, w, (stride, stride), ((pad, pad), (pad, pad)),
        dimension_numbers=("NCHW", "OIHW", "NCHW"))


def _ref_inorm_relu(x, relu=True, eps=1e-5):
    m = jnp.mean(x, axis=(2, 3), keepdims=True)
    v = jnp.mean((x - m) ** 2, axis=(2, 3), keepdims=True)
    y = (x - m) / jnp.sqrt(v + eps)
    return jnp.maximum(y, 0.0) if relu else y


def _ref_residual_bottleneck(x, p, eps=1e-5):
    y = _ref_inorm_relu(x)
    y = _ref_conv(y, p["conv1"], 1, 0)
    y = _ref_inorm_relu(y)
    y = _ref_conv(y, p["conv2"], 2, 1)
    y = _ref_inorm_relu(y)
    y = _ref_conv(y, p["conv3"], 1, 1)
    xd = _ref_conv(x, p["down_conv"], 2, 1)
    m = jnp.mean(xd, axis=(0, 2, 3), keepdims=True)
    v = jnp.mean((xd - m) ** 2, axis=(0, 2, 3), keepdims=True)
    return y + (xd - m) / jnp.sqrt(v + eps)


def _ref_double_conv(x, p, eps=1e-5):
    y = _ref_conv(x, p["dc_conv1"], 1, 1)
    y = _ref_inorm_relu(y, eps=eps)
    y = _ref_conv(y, p["dc_conv2"], 1, 1)
    y = _ref_inorm_relu(y, eps=eps)
    return y


# --------------------------------- main --------------------------------------

if __name__ == "__main__":
    key = jax.random.PRNGKey(0)
    kx, kp, kx2, kp2 = jax.random.split(key, 4)

    # Path 1: in_ch > 3  ->  Residual_Bottleneck(in_ch, downsample=True)
    in_ch, out_ch = 4, 8
    N, H, W = 2, 16, 16
    x = jax.random.normal(kx, (N, in_ch, H, W), jnp.float32)
    params = init_params(kp, in_ch, out_ch)
    fwd = jax.jit(functools.partial(unet_down_conv_forward,
                                    in_ch=in_ch, out_ch=out_ch))
    out = jax.block_until_ready(fwd(x, params))
    assert out.shape == (N, 2 * in_ch, H // 2, W // 2), out.shape
    assert bool(jnp.all(jnp.isfinite(out)))
    ref = jax.block_until_ready(_ref_residual_bottleneck(x, params))
    np.testing.assert_allclose(np.asarray(out), np.asarray(ref),
                               rtol=5e-2, atol=5e-2)

    # Path 2: in_ch <= 3  ->  unet_input_conv (double conv)
    in_ch2, out_ch2 = 3, 8
    x2 = jax.random.normal(kx2, (N, in_ch2, H, W), jnp.float32)
    params2 = init_params(kp2, in_ch2, out_ch2)
    fwd2 = jax.jit(functools.partial(unet_down_conv_forward,
                                     in_ch=in_ch2, out_ch=out_ch2))
    out2 = jax.block_until_ready(fwd2(x2, params2))
    assert out2.shape == (N, out_ch2, H, W), out2.shape
    ref2 = jax.block_until_ready(_ref_double_conv(x2, params2))
    np.testing.assert_allclose(np.asarray(out2), np.asarray(ref2),
                               rtol=5e-2, atol=5e-2)

    print("KERNEL_OK")
</pallas_src>

<mosaic_0001>
module attributes {stable_mosaic.version = 11 : i64} {
  func.func @_row_stats_kernel(%arg0: i32, %arg1: memref<8x256xf32, #tpu.memory_space<vmem>>, %arg2: memref<8x2xf32, #tpu.memory_space<vmem>>) attributes {dimension_semantics = [#tpu.dimension_semantics<parallel>], iteration_bounds = array<i64: 1>, scalar_prefetch = 0 : i64, scratch_operands = 0 : i64, tpu.core_type = #tpu.core_type<tc>, window_params = [{transform_indices = @transform_0, window_bounds = array<i64: 8, 256>}, {transform_indices = @transform_1, window_bounds = array<i64: 8, 2>}]} {
    %c0 = arith.constant 0 : index
    %c0_0 = arith.constant 0 : index
    %0 = vector.load %arg1[%c0, %c0_0] : memref<8x256xf32, #tpu.memory_space<vmem>>, vector<8x256xf32>
    %cst = arith.constant dense<0.000000e+00> : vector<8xf32>
    %1 = vector.multi_reduction <add>, %0, %cst [1] : vector<8x256xf32> to vector<8xf32>
    %2 = vector.shape_cast %1 : vector<8xf32> to vector<8x1xf32>
    %3 = arith.mulf %0, %0 : vector<8x256xf32>
    %cst_1 = arith.constant dense<0.000000e+00> : vector<8xf32>
    %4 = vector.multi_reduction <add>, %3, %cst_1 [1] : vector<8x256xf32> to vector<8xf32>
    %5 = vector.shape_cast %4 : vector<8xf32> to vector<8x1xf32>
    %6 = tpu.concatenate %2, %5 in 1 : vector<8x1xf32>, vector<8x1xf32> -> vector<8x2xf32>
    %c0_2 = arith.constant 0 : index
    %c0_3 = arith.constant 0 : index
    %7 = vector.load %arg2[%c0_2, %c0_3] : memref<8x2xf32, #tpu.memory_space<vmem>>, vector<8x2xf32>
    tpu.vector_store %arg2[%c0_2, %c0_3], %6 {strides = array<i32>} : memref<8x2xf32, #tpu.memory_space<vmem>>, vector<8x2xf32>,
    return
  }
  func.func @transform_0(%arg0: i32) -> (i32, i32) {
    %c0_i32 = arith.constant 0 : i32
    %c0_i32_0 = arith.constant 0 : i32
    return %arg0, %c0_i32 : i32, i32
  }
  func.func @transform_1(%arg0: i32) -> (i32, i32) {
    %c0_i32 = arith.constant 0 : i32
    %c0_i32_0 = arith.constant 0 : i32
    return %arg0, %c0_i32 : i32, i32
  }
}

module attributes {stable_mosaic.version = 11 : i64} {
  func.func @_conv_taps_kernel(%arg0: i32, %arg1: i32, %arg2: i32, %arg3: memref<1x1x4x256xf32, #tpu.memory_space<vmem>>, %arg4: memref<1x1x4x128xf32, #tpu.memory_space<vmem>>, %arg5: memref<4x4xf32, #tpu.memory_space<vmem>>, %arg6: memref<1x4x1xf32, #tpu.memory_space<vmem>>, %arg7: memref<1x4x256xf32, #tpu.memory_space<vmem>>) attributes {dimension_semantics = [#tpu.dimension_semantics<parallel>, #tpu.dimension_semantics<parallel>, #tpu.dimension_semantics<parallel>], iteration_bounds = array<i64: 2, 1, 1>, scalar_prefetch = 0 : i64, scratch_operands = 0 : i64, tpu.core_type = #tpu.core_type<tc>, window_params = [{transform_indices = @transform_0, window_bounds = array<i64: 1, 1, 4, 256>}, {transform_indices = @transform_1, window_bounds = array<i64: 1, 1, 4, 128>}, {transform_indices = @transform_2, window_bounds = array<i64: 4, 4>}, {transform_indices = @transform_3, window_bounds = array<i64: 1, 4, 1>}, {transform_indices = @transform_4, window_bounds = array<i64: 1, 4, 256>}]} {
    %c0 = arith.constant 0 : index
    %c0_0 = arith.constant 0 : index
    %c0_1 = arith.constant 0 : index
    %c0_2 = arith.constant 0 : index
    %0 = vector.load %arg3[%c0, %c0_0, %c0_1, %c0_2] : memref<1x1x4x256xf32, #tpu.memory_space<vmem>>, vector<1x1x4x256xf32>
    %1 = vector.shape_cast %0 : vector<1x1x4x256xf32> to vector<1x4x256xf32>
    %c0_3 = arith.constant 0 : index
    %c0_4 = arith.constant 0 : index
    %c0_5 = arith.constant 0 : index
    %2 = vector.load %arg6[%c0_3, %c0_4, %c0_5] : memref<1x4x1xf32, #tpu.memory_space<vmem>>, vector<1x4x1xf32>
    %3 = vector.shape_cast %2 : vector<1x4x1xf32> to vector<4x1xf32>
    %cst = arith.constant 0.000000e+00 : f32
    %4 = vector.broadcast %cst : f32 to vector<1x4x256xf32>
    %5 = arith.maximumf %1, %4 : vector<1x4x256xf32>
    %6 = vector.shape_cast %3 : vector<4x1xf32> to vector<1x4x1xf32>
    %7 = vector.broadcast %6 : vector<1x4x1xf32> to vector<1x4x256xf32>
    %8 = arith.mulf %5, %7 : vector<1x4x256xf32>
    %9 = vector.shape_cast %8 : vector<1x4x256xf32> to vector<4x256xf32>
    %c0_6 = arith.constant 0 : index
    %c0_7 = arith.constant 0 : index
    %10 = vector.load %arg5[%c0_6, %c0_7] : memref<4x4xf32, #tpu.memory_space<vmem>>, vector<4x4xf32>
    %cst_8 = arith.constant dense<0.000000e+00> : vector<4x256xf32>
    %11 = tpu.matmul %10, %9, %cst_8 {dimension_numbers = #tpu.dot_dimension_numbers<[1], [0], [0], [1], [0, 0, 1, 1], [], []>} : vector<4x4xf32>, vector<4x256xf32>, vector<4x256xf32> -> vector<4x256xf32>
    %c0_9 = arith.constant 0 : index
    %c0_10 = arith.constant 0 : index
    %c0_11 = arith.constant 0 : index
    %12 = vector.load %arg7[%c0_9, %c0_10, %c0_11] : memref<1x4x256xf32, #tpu.memory_space<vmem>>, vector<1x4x256xf32>
    %13 = vector.shape_cast %12 : vector<1x4x256xf32> to vector<4x256xf32>
    %14 = vector.shape_cast %11 : vector<4x256xf32> to vector<1x4x256xf32>
    tpu.vector_store %arg7[%c0_9, %c0_10, %c0_11], %14 {strides = array<i32>} : memref<1x4x256xf32, #tpu.memory_space<vmem>>, vector<1x4x256xf32>,
    return
  }
  func.func @transform_0(%arg0: i32, %arg1: i32, %arg2: i32) -> (i32, i32, i32, i32) {
    %c0_i32 = arith.constant 0 : i32
    %c0_i32_0 = arith.constant 0 : i32
    %c0_i32_1 = arith.constant 0 : i32
    return %arg0, %c0_i32, %c0_i32_0, %arg1 : i32, i32, i32, i32
  }
  func.func @transform_1(%arg0: i32, %arg1: i32, %arg2: i32) -> (i32, i32, i32, i32) {
    %c1_i32 = arith.constant 1 : i32
    %0 = arith.addi %arg1, %c1_i32 : i32
    %c2_i32 = arith.constant 2 : i32
    %1 = arith.muli %0, %c2_i32 : i32
    %c0_i32 = arith.constant 0 : i32
    %c0_i32_0 = arith.constant 0 : i32
    %c0_i32_1 = arith.constant 0 : i32
    return %arg0, %c0_i32, %c0_i32_0, %1 : i32, i32, i32, i32
  }
  func.func @transform_2(%arg0: i32, %arg1: i32, %arg2: i32) -> (i32, i32) {
    %c0_i32 = arith.constant 0 : i32
    %c0_i32_0 = arith.constant 0 : i32
    return %arg2, %c0_i32 : i32, i32
  }
  func.func @transform_3(%arg0: i32, %arg1: i32, %arg2: i32) -> (i32, i32, i32) {
    %c0_i32 = arith.constant 0 : i32
    %c0_i32_0 = arith.constant 0 : i32
    %c0_i32_1 = arith.constant 0 : i32
    return %arg0, %c0_i32, %c0_i32_0 : i32, i32, i32
  }
  func.func @transform_4(%arg0: i32, %arg1: i32, %arg2: i32) -> (i32, i32, i32) {
    %c0_i32 = arith.constant 0 : i32
    return %arg0, %arg2, %arg1 : i32, i32, i32
  }
}

module attributes {stable_mosaic.version = 11 : i64} {
  func.func @_conv_taps_kernel(%arg0: i32, %arg1: i32, %arg2: i32, %arg3: memref<1x4x4x128xf32, #tpu.memory_space<vmem>>, %arg4: memref<1x4x4x128xf32, #tpu.memory_space<vmem>>, %arg5: memref<4x36xf32, #tpu.memory_space<vmem>>, %arg6: memref<1x4x1xf32, #tpu.memory_space<vmem>>, %arg7: memref<1x4x128xf32, #tpu.memory_space<vmem>>) attributes {dimension_semantics = [#tpu.dimension_semantics<parallel>, #tpu.dimension_semantics<parallel>, #tpu.dimension_semantics<parallel>], iteration_bounds = array<i64: 2, 1, 1>, scalar_prefetch = 0 : i64, scratch_operands = 0 : i64, tpu.core_type = #tpu.core_type<tc>, window_params = [{transform_indices = @transform_0, window_bounds = array<i64: 1, 4, 4, 128>}, {transform_indices = @transform_1, window_bounds = array<i64: 1, 4, 4, 128>}, {transform_indices = @transform_2, window_bounds = array<i64: 4, 36>}, {transform_indices = @transform_3, window_bounds = array<i64: 1, 4, 1>}, {transform_indices = @transform_4, window_bounds = array<i64: 1, 4, 128>}]} {
    %c0 = arith.constant 0 : index
    %c0_0 = arith.constant 0 : index
    %c0_1 = arith.constant 0 : index
    %c0_2 = arith.constant 0 : index
    %0 = vector.load %arg3[%c0, %c0_0, %c0_1, %c0_2] : memref<1x4x4x128xf32, #tpu.memory_space<vmem>>, vector<1x4x4x128xf32>
    %1 = vector.shape_cast %0 : vector<1x4x4x128xf32> to vector<4x4x128xf32>
    %c0_3 = arith.constant 0 : index
    %c0_4 = arith.constant 0 : index
    %c0_5 = arith.constant 0 : index
    %c0_6 = arith.constant 0 : index
    %2 = vector.load %arg4[%c0_3, %c0_4, %c0_5, %c0_6] : memref<1x4x4x128xf32, #tpu.memory_space<vmem>>, vector<1x4x4x128xf32>
    %3 = vector.shape_cast %2 : vector<1x4x4x128xf32> to vector<4x4x128xf32>
    %c0_7 = arith.constant 0 : index
    %c0_8 = arith.constant 0 : index
    %c0_9 = arith.constant 0 : index
    %4 = vector.load %arg6[%c0_7, %c0_8, %c0_9] : memref<1x4x1xf32, #tpu.memory_space<vmem>>, vector<1x4x1xf32>
    %5 = vector.shape_cast %4 : vector<1x4x1xf32> to vector<4x1xf32>
    %cst = arith.constant 0.000000e+00 : f32
    %6 = vector.broadcast %cst : f32 to vector<4x4x128xf32>
    %7 = arith.maximumf %1, %6 : vector<4x4x128xf32>
    %8 = vector.shape_cast %5 : vector<4x1xf32> to vector<1x4x1xf32>
    %9 = vector.broadcast %8 : vector<1x4x1xf32> to vector<4x4x128xf32>
    %10 = arith.mulf %7, %9 : vector<4x4x128xf32>
    %cst_10 = arith.constant 0.000000e+00 : f32
    %11 = vector.broadcast %cst_10 : f32 to vector<4x4x128xf32>
    %12 = arith.maximumf %3, %11 : vector<4x4x128xf32>
    %13 = vector.shape_cast %5 : vector<4x1xf32> to vector<1x4x1xf32>
    %14 = vector.broadcast %13 : vector<1x4x1xf32> to vector<4x4x128xf32>
    %15 = arith.mulf %12, %14 : vector<4x4x128xf32>
    %16 = vector.extract_strided_slice %10 {offsets = [0, 0, 0], sizes = [1, 4, 128], strides = [1, 1, 1]} : vector<4x4x128xf32> to vector<1x4x128xf32>
    %17 = vector.shape_cast %16 : vector<1x4x128xf32> to vector<4x128xf32>
    %18 = vector.extract_strided_slice %10 {offsets = [1, 0, 0], sizes = [1, 4, 128], strides = [1, 1, 1]} : vector<4x4x128xf32> to vector<1x4x128xf32>
    %19 = vector.shape_cast %18 : vector<1x4x128xf32> to vector<4x128xf32>
    %20 = vector.extract_strided_slice %10 {offsets = [0, 0, 1], sizes = [1, 4, 127], strides = [1, 1, 1]} : vector<4x4x128xf32> to vector<1x4x127xf32>
    %21 = vector.shape_cast %20 : vector<1x4x127xf32> to vector<4x127xf32>
    %22 = vector.extract_strided_slice %15 {offsets = [0, 0, 0], sizes = [1, 4, 1], strides = [1, 1, 1]} : vector<4x4x128xf32> to vector<1x4x1xf32>
    %23 = vector.shape_cast %22 : vector<1x4x1xf32> to vector<4x1xf32>
    %24 = tpu.concatenate %21, %23 in 1 : vector<4x127xf32>, vector<4x1xf32> -> vector<4x128xf32>
    %25 = vector.extract_strided_slice %10 {offsets = [2, 0, 0], sizes = [1, 4, 128], strides = [1, 1, 1]} : vector<4x4x128xf32> to vector<1x4x128xf32>
    %26 = vector.shape_cast %25 : vector<1x4x128xf32> to vector<4x128xf32>
    %27 = vector.extract_strided_slice %10 {offsets = [3, 0, 0], sizes = [1, 4, 128], strides = [1, 1, 1]} : vector<4x4x128xf32> to vector<1x4x128xf32>
    %28 = vector.shape_cast %27 : vector<1x4x128xf32> to vector<4x128xf32>
    %29 = vector.extract_strided_slice %10 {offsets = [2, 0, 1], sizes = [1, 4, 127], strides = [1, 1, 1]} : vector<4x4x128xf32> to vector<1x4x127xf32>
    %30 = vector.shape_cast %29 : vector<1x4x127xf32> to vector<4x127xf32>
    %31 = vector.extract_strided_slice %15 {offsets = [2, 0, 0], sizes = [1, 4, 1], strides = [1, 1, 1]} : vector<4x4x128xf32> to vector<1x4x1xf32>
    %32 = vector.shape_cast %31 : vector<1x4x1xf32> to vector<4x1xf32>
    %33 = tpu.concatenate %30, %32 in 1 : vector<4x127xf32>, vector<4x1xf32> -> vector<4x128xf32>
    %34 = vector.extract_strided_slice %10 {offsets = [0, 0, 9], sizes = [1, 4, 119], strides = [1, 1, 1]} : vector<4x4x128xf32> to vector<1x4x119xf32>
    %35 = vector.shape_cast %34 : vector<1x4x119xf32> to vector<4x119xf32>
    %36 = vector.extract_strided_slice %15 {offsets = [0, 0, 0], sizes = [1, 4, 9], strides = [1, 1, 1]} : vector<4x4x128xf32> to vector<1x4x9xf32>
    %37 = vector.shape_cast %36 : vector<1x4x9xf32> to vector<4x9xf32>
    %38 = tpu.concatenate %35, %37 in 1 : vector<4x119xf32>, vector<4x9xf32> -> vector<4x128xf32>
    %39 = vector.extract_strided_slice %10 {offsets = [1, 0, 9], sizes = [1, 4, 119], strides = [1, 1, 1]} : vector<4x4x128xf32> to vector<1x4x119xf32>
    %40 = vector.shape_cast %39 : vector<1x4x119xf32> to vector<4x119xf32>
    %41 = vector.extract_strided_slice %15 {offsets = [1, 0, 0], sizes = [1, 4, 9], strides = [1, 1, 1]} : vector<4x4x128xf32> to vector<1x4x9xf32>
    %42 = vector.shape_cast %41 : vector<1x4x9xf32> to vector<4x9xf32>
    %43 = tpu.concatenate %40, %42 in 1 : vector<4x119xf32>, vector<4x9xf32> -> vector<4x128xf32>
    %44 = vector.extract_strided_slice %10 {offsets = [0, 0, 10], sizes = [1, 4, 118], strides = [1, 1, 1]} : vector<4x4x128xf32> to vector<1x4x118xf32>
    %45 = vector.shape_cast %44 : vector<1x4x118xf32> to vector<4x118xf32>
    %46 = vector.extract_strided_slice %15 {offsets = [0, 0, 0], sizes = [1, 4, 10], strides = [1, 1, 1]} : vector<4x4x128xf32> to vector<1x4x10xf32>
    %47 = vector.shape_cast %46 : vector<1x4x10xf32> to vector<4x10xf32>
    %48 = tpu.concatenate %45, %47 in 1 : vector<4x118xf32>, vector<4x10xf32> -> vector<4x128xf32>
    %49 = tpu.concatenate %17, %19, %24, %26, %28, %33, %38, %43, %48 in 0 : vector<4x128xf32>, vector<4x128xf32>, vector<4x128xf32>, vector<4x128xf32>, vector<4x128xf32>, vector<4x128xf32>, vector<4x128xf32>, vector<4x128xf32>, vector<4x128xf32> -> vector<36x128xf32>
    %c0_11 = arith.constant 0 : index
    %c0_12 = arith.constant 0 : index
    %50 = vector.load %arg5[%c0_11, %c0_12] : memref<4x36xf32, #tpu.memory_space<vmem>>, vector<4x36xf32>
    %cst_13 = arith.constant dense<0.000000e+00> : vector<4x128xf32>
    %51 = tpu.matmul %50, %49, %cst_13 {dimension_numbers = #tpu.dot_dimension_numbers<[1], [0], [0], [1], [0, 0, 1, 1], [], []>} : vector<4x36xf32>, vector<36x128xf32>, vector<4x128xf32> -> vector<4x128xf32>
    %c0_14 = arith.constant 0 : index
    %c0_15 = arith.constant 0 : index
    %c0_16 = arith.constant 0 : index
    %52 = vector.load %arg7[%c0_14, %c0_15, %c0_16] : memref<1x4x128xf32, #tpu.memory_space<vmem>>, vector<1x4x128xf32>
    %53 = vector.shape_cast %52 : vector<1x4x128xf32> to vector<4x128xf32>
    %54 = vector.shape_cast %51 : vector<4x128xf32> to vector<1x4x128xf32>
    tpu.vector_store %arg7[%c0_14, %c0_15, %c0_16], %54 {strides = array<i32>} : memref<1x4x128xf32, #tpu.memory_space<vmem>>, vector<1x4x128xf32>,
    return
  }
  func.func @transform_0(%arg0: i32, %arg1: i32, %arg2: i32) -> (i32, i32, i32, i32) {
    %c0_i32 = arith.constant 0 : i32
    %c0_i32_0 = arith.constant 0 : i32
    %c0_i32_1 = arith.constant 0 : i32
    return %arg0, %c0_i32, %c0_i32_0, %arg1 : i32, i32, i32, i32
  }
  func.func @transform_1(%arg0: i32, %arg1: i32, %arg2: i32) -> (i32, i32, i32, i32) {
    %c1_i32 = arith.constant 1 : i32
    %0 = arith.addi %arg1, %c1_i32 : i32
    %c1_i32_0 = arith.constant 1 : i32
    %1 = arith.muli %0, %c1_i32_0 : i32
    %c0_i32 = arith.constant 0 : i32
    %c0_i32_1 = arith.constant 0 : i32
    %c0_i32_2 = arith.constant 0 : i32
    return %arg0, %c0_i32, %c0_i32_1, %1 : i32, i32, i32, i32
  }
  func.func @transform_2(%arg0: i32, %arg1: i32, %arg2: i32) -> (i32, i32) {
    %c0_i32 = arith.constant 0 : i32
    %c0_i32_0 = arith.constant 0 : i32
    return %arg2, %c0_i32 : i32, i32
  }
  func.func @transform_3(%arg0: i32, %arg1: i32, %arg2: i32) -> (i32, i32, i32) {
    %c0_i32 = arith.constant 0 : i32
    %c0_i32_0 = arith.constant 0 : i32
    %c0_i32_1 = arith.constant 0 : i32
    return %arg0, %c0_i32, %c0_i32_0 : i32, i32, i32
  }
  func.func @transform_4(%arg0: i32, %arg1: i32, %arg2: i32) -> (i32, i32, i32) {
    %c0_i32 = arith.constant 0 : i32
    return %arg0, %arg2, %arg1 : i32, i32, i32
  }
}

module attributes {stable_mosaic.version = 11 : i64} {
  func.func @_row_stats_kernel(%arg0: i32, %arg1: memref<8x64xf32, #tpu.memory_space<vmem>>, %arg2: memref<8x2xf32, #tpu.memory_space<vmem>>) attributes {dimension_semantics = [#tpu.dimension_semantics<parallel>], iteration_bounds = array<i64: 1>, scalar_prefetch = 0 : i64, scratch_operands = 0 : i64, tpu.core_type = #tpu.core_type<tc>, window_params = [{transform_indices = @transform_0, window_bounds = array<i64: 8, 64>}, {transform_indices = @transform_1, window_bounds = array<i64: 8, 2>}]} {
    %c0 = arith.constant 0 : index
    %c0_0 = arith.constant 0 : index
    %0 = vector.load %arg1[%c0, %c0_0] : memref<8x64xf32, #tpu.memory_space<vmem>>, vector<8x64xf32>
    %cst = arith.constant dense<0.000000e+00> : vector<8xf32>
    %1 = vector.multi_reduction <add>, %0, %cst [1] : vector<8x64xf32> to vector<8xf32>
    %2 = vector.shape_cast %1 : vector<8xf32> to vector<8x1xf32>
    %3 = arith.mulf %0, %0 : vector<8x64xf32>
    %cst_1 = arith.constant dense<0.000000e+00> : vector<8xf32>
    %4 = vector.multi_reduction <add>, %3, %cst_1 [1] : vector<8x64xf32> to vector<8xf32>
    %5 = vector.shape_cast %4 : vector<8xf32> to vector<8x1xf32>
    %6 = tpu.concatenate %2, %5 in 1 : vector<8x1xf32>, vector<8x1xf32> -> vector<8x2xf32>
    %c0_2 = arith.constant 0 : index
    %c0_3 = arith.constant 0 : index
    %7 = vector.load %arg2[%c0_2, %c0_3] : memref<8x2xf32, #tpu.memory_space<vmem>>, vector<8x2xf32>
    tpu.vector_store %arg2[%c0_2, %c0_3], %6 {strides = array<i32>} : memref<8x2xf32, #tpu.memory_space<vmem>>, vector<8x2xf32>,
    return
  }
  func.func @transform_0(%arg0: i32) -> (i32, i32) {
    %c0_i32 = arith.constant 0 : i32
    %c0_i32_0 = arith.constant 0 : i32
    return %arg0, %c0_i32 : i32, i32
  }
  func.func @transform_1(%arg0: i32) -> (i32, i32) {
    %c0_i32 = arith.constant 0 : i32
    %c0_i32_0 = arith.constant 0 : i32
    return %arg0, %c0_i32 : i32, i32
  }
}

module attributes {stable_mosaic.version = 11 : i64} {
  func.func @_conv_taps_kernel(%arg0: i32, %arg1: i32, %arg2: i32, %arg3: memref<1x1x4x128xf32, #tpu.memory_space<vmem>>, %arg4: memref<1x1x4x128xf32, #tpu.memory_space<vmem>>, %arg5: memref<8x36xf32, #tpu.memory_space<vmem>>, %arg6: memref<1x4x1xf32, #tpu.memory_space<vmem>>, %arg7: memref<1x8x128xf32, #tpu.memory_space<vmem>>) attributes {dimension_semantics = [#tpu.dimension_semantics<parallel>, #tpu.dimension_semantics<parallel>, #tpu.dimension_semantics<parallel>], iteration_bounds = array<i64: 2, 1, 1>, scalar_prefetch = 0 : i64, scratch_operands = 0 : i64, tpu.core_type = #tpu.core_type<tc>, window_params = [{transform_indices = @transform_0, window_bounds = array<i64: 1, 1, 4, 128>}, {transform_indices = @transform_1, window_bounds = array<i64: 1, 1, 4, 128>}, {transform_indices = @transform_2, window_bounds = array<i64: 8, 36>}, {transform_indices = @transform_3, window_bounds = array<i64: 1, 4, 1>}, {transform_indices = @transform_4, window_bounds = array<i64: 1, 8, 128>}]} {
    %c0 = arith.constant 0 : index
    %c0_0 = arith.constant 0 : index
    %c0_1 = arith.constant 0 : index
    %c0_2 = arith.constant 0 : index
    %0 = vector.load %arg3[%c0, %c0_0, %c0_1, %c0_2] : memref<1x1x4x128xf32, #tpu.memory_space<vmem>>, vector<1x1x4x128xf32>
    %1 = vector.shape_cast %0 : vector<1x1x4x128xf32> to vector<1x4x128xf32>
    %c0_3 = arith.constant 0 : index
    %c0_4 = arith.constant 0 : index
    %c0_5 = arith.constant 0 : index
    %c0_6 = arith.constant 0 : index
    %2 = vector.load %arg4[%c0_3, %c0_4, %c0_5, %c0_6] : memref<1x1x4x128xf32, #tpu.memory_space<vmem>>, vector<1x1x4x128xf32>
    %3 = vector.shape_cast %2 : vector<1x1x4x128xf32> to vector<1x4x128xf32>
    %c0_7 = arith.constant 0 : index
    %c0_8 = arith.constant 0 : index
    %c0_9 = arith.constant 0 : index
    %4 = vector.load %arg6[%c0_7, %c0_8, %c0_9] : memref<1x4x1xf32, #tpu.memory_space<vmem>>, vector<1x4x1xf32>
    %5 = vector.shape_cast %4 : vector<1x4x1xf32> to vector<4x1xf32>
    %cst = arith.constant 0.000000e+00 : f32
    %6 = vector.broadcast %cst : f32 to vector<1x4x128xf32>
    %7 = arith.maximumf %1, %6 : vector<1x4x128xf32>
    %8 = vector.shape_cast %5 : vector<4x1xf32> to vector<1x4x1xf32>
    %9 = vector.broadcast %8 : vector<1x4x1xf32> to vector<1x4x128xf32>
    %10 = arith.mulf %7, %9 : vector<1x4x128xf32>
    %cst_10 = arith.constant 0.000000e+00 : f32
    %11 = vector.broadcast %cst_10 : f32 to vector<1x4x128xf32>
    %12 = arith.maximumf %3, %11 : vector<1x4x128xf32>
    %13 = vector.shape_cast %5 : vector<4x1xf32> to vector<1x4x1xf32>
    %14 = vector.broadcast %13 : vector<1x4x1xf32> to vector<1x4x128xf32>
    %15 = arith.mulf %12, %14 : vector<1x4x128xf32>
    %16 = vector.shape_cast %10 : vector<1x4x128xf32> to vector<4x128xf32>
    %17 = vector.extract_strided_slice %10 {offsets = [0, 0, 1], sizes = [1, 4, 127], strides = [1, 1, 1]} : vector<1x4x128xf32> to vector<1x4x127xf32>
    %18 = vector.shape_cast %17 : vector<1x4x127xf32> to vector<4x127xf32>
    %19 = vector.extract_strided_slice %15 {offsets = [0, 0, 0], sizes = [1, 4, 1], strides = [1, 1, 1]} : vector<1x4x128xf32> to vector<1x4x1xf32>
    %20 = vector.shape_cast %19 : vector<1x4x1xf32> to vector<4x1xf32>
    %21 = tpu.concatenate %18, %20 in 1 : vector<4x127xf32>, vector<4x1xf32> -> vector<4x128xf32>
    %22 = vector.extract_strided_slice %10 {offsets = [0, 0, 2], sizes = [1, 4, 126], strides = [1, 1, 1]} : vector<1x4x128xf32> to vector<1x4x126xf32>
    %23 = vector.shape_cast %22 : vector<1x4x126xf32> to vector<4x126xf32>
    %24 = vector.extract_strided_slice %15 {offsets = [0, 0, 0], sizes = [1, 4, 2], strides = [1, 1, 1]} : vector<1x4x128xf32> to vector<1x4x2xf32>
    %25 = vector.shape_cast %24 : vector<1x4x2xf32> to vector<4x2xf32>
    %26 = tpu.concatenate %23, %25 in 1 : vector<4x126xf32>, vector<4x2xf32> -> vector<4x128xf32>
    %27 = vector.extract_strided_slice %10 {offsets = [0, 0, 10], sizes = [1, 4, 118], strides = [1, 1, 1]} : vector<1x4x128xf32> to vector<1x4x118xf32>
    %28 = vector.shape_cast %27 : vector<1x4x118xf32> to vector<4x118xf32>
    %29 = vector.extract_strided_slice %15 {offsets = [0, 0, 0], sizes = [1, 4, 10], strides = [1, 1, 1]} : vector<1x4x128xf32> to vector<1x4x10xf32>
    %30 = vector.shape_cast %29 : vector<1x4x10xf32> to vector<4x10xf32>
    %31 = tpu.concatenate %28, %30 in 1 : vector<4x118xf32>, vector<4x10xf32> -> vector<4x128xf32>
    %32 = vector.extract_strided_slice %10 {offsets = [0, 0, 11], sizes = [1, 4, 117], strides = [1, 1, 1]} : vector<1x4x128xf32> to vector<1x4x117xf32>
    %33 = vector.shape_cast %32 : vector<1x4x117xf32> to vector<4x117xf32>
    %34 = vector.extract_strided_slice %15 {offsets = [0, 0, 0], sizes = [1, 4, 11], strides = [1, 1, 1]} : vector<1x4x128xf32> to vector<1x4x11xf32>
    %35 = vector.shape_cast %34 : vector<1x4x11xf32> to vector<4x11xf32>
    %36 = tpu.concatenate %33, %35 in 1 : vector<4x117xf32>, vector<4x11xf32> -> vector<4x128xf32>
    %37 = vector.extract_strided_slice %10 {offsets = [0, 0, 12], sizes = [1, 4, 116], strides = [1, 1, 1]} : vector<1x4x128xf32> to vector<1x4x116xf32>
    %38 = vector.shape_cast %37 : vector<1x4x116xf32> to vector<4x116xf32>
    %39 = vector.extract_strided_slice %15 {offsets = [0, 0, 0], sizes = [1, 4, 12], strides = [1, 1, 1]} : vector<1x4x128xf32> to vector<1x4x12xf32>
    %40 = vector.shape_cast %39 : vector<1x4x12xf32> to vector<4x12xf32>
    %41 = tpu.concatenate %38, %40 in 1 : vector<4x116xf32>, vector<4x12xf32> -> vector<4x128xf32>
    %42 = vector.extract_strided_slice %10 {offsets = [0, 0, 20], sizes = [1, 4, 108], strides = [1, 1, 1]} : vector<1x4x128xf32> to vector<1x4x108xf32>
    %43 = vector.shape_cast %42 : vector<1x4x108xf32> to vector<4x108xf32>
    %44 = vector.extract_strided_slice %15 {offsets = [0, 0, 0], sizes = [1, 4, 20], strides = [1, 1, 1]} : vector<1x4x128xf32> to vector<1x4x20xf32>
    %45 = vector.shape_cast %44 : vector<1x4x20xf32> to vector<4x20xf32>
    %46 = tpu.concatenate %43, %45 in 1 : vector<4x108xf32>, vector<4x20xf32> -> vector<4x128xf32>
    %47 = vector.extract_strided_slice %10 {offsets = [0, 0, 21], sizes = [1, 4, 107], strides = [1, 1, 1]} : vector<1x4x128xf32> to vector<1x4x107xf32>
    %48 = vector.shape_cast %47 : vector<1x4x107xf32> to vector<4x107xf32>
    %49 = vector.extract_strided_slice %15 {offsets = [0, 0, 0], sizes = [1, 4, 21], strides = [1, 1, 1]} : vector<1x4x128xf32> to vector<1x4x21xf32>
    %50 = vector.shape_cast %49 : vector<1x4x21xf32> to vector<4x21xf32>
    %51 = tpu.concatenate %48, %50 in 1 : vector<4x107xf32>, vector<4x21xf32> -> vector<4x128xf32>
    %52 = vector.extract_strided_slice %10 {offsets = [0, 0, 22], sizes = [1, 4, 106], strides = [1, 1, 1]} : vector<1x4x128xf32> to vector<1x4x106xf32>
    %53 = vector.shape_cast %52 : vector<1x4x106xf32> to vector<4x106xf32>
    %54 = vector.extract_strided_slice %15 {offsets = [0, 0, 0], sizes = [1, 4, 22], strides = [1, 1, 1]} : vector<1x4x128xf32> to vector<1x4x22xf32>
    %55 = vector.shape_cast %54 : vector<1x4x22xf32> to vector<4x22xf32>
    %56 = tpu.concatenate %53, %55 in 1 : vector<4x106xf32>, vector<4x22xf32> -> vector<4x128xf32>
    %57 = tpu.concatenate %16, %21, %26, %31, %36, %41, %46, %51, %56 in 0 : vector<4x128xf32>, vector<4x128xf32>, vector<4x128xf32>, vector<4x128xf32>, vector<4x128xf32>, vector<4x128xf32>, vector<4x128xf32>, vector<4x128xf32>, vector<4x128xf32> -> vector<36x128xf32>
    %c0_11 = arith.constant 0 : index
    %c0_12 = arith.constant 0 : index
    %58 = vector.load %arg5[%c0_11, %c0_12] : memref<8x36xf32, #tpu.memory_space<vmem>>, vector<8x36xf32>
    %cst_13 = arith.constant dense<0.000000e+00> : vector<8x128xf32>
    %59 = tpu.matmul %58, %57, %cst_13 {dimension_numbers = #tpu.dot_dimension_numbers<[1], [0], [0], [1], [0, 0, 1, 1], [], []>} : vector<8x36xf32>, vector<36x128xf32>, vector<8x128xf32> -> vector<8x128xf32>
    %c0_14 = arith.constant 0 : index
    %c0_15 = arith.constant 0 : index
    %c0_16 = arith.constant 0 : index
    %60 = vector.load %arg7[%c0_14, %c0_15, %c0_16] : memref<1x8x128xf32, #tpu.memory_space<vmem>>, vector<1x8x128xf32>
    %61 = vector.shape_cast %60 : vector<1x8x128xf32> to vector<8x128xf32>
    %62 = vector.shape_cast %59 : vector<8x128xf32> to vector<1x8x128xf32>
    tpu.vector_store %arg7[%c0_14, %c0_15, %c0_16], %62 {strides = array<i32>} : memref<1x8x128xf32, #tpu.memory_space<vmem>>, vector<1x8x128xf32>,
    return
  }
  func.func @transform_0(%arg0: i32, %arg1: i32, %arg2: i32) -> (i32, i32, i32, i32) {
    %c0_i32 = arith.constant 0 : i32
    %c0_i32_0 = arith.constant 0 : i32
    %c0_i32_1 = arith.constant 0 : i32
    return %arg0, %c0_i32, %c0_i32_0, %arg1 : i32, i32, i32, i32
  }
  func.func @transform_1(%arg0: i32, %arg1: i32, %arg2: i32) -> (i32, i32, i32, i32) {
    %c1_i32 = arith.constant 1 : i32
    %0 = arith.addi %arg1, %c1_i32 : i32
    %c1_i32_0 = arith.constant 1 : i32
    %1 = arith.muli %0, %c1_i32_0 : i32
    %c0_i32 = arith.constant 0 : i32
    %c0_i32_1 = arith.constant 0 : i32
    %c0_i32_2 = arith.constant 0 : i32
    return %arg0, %c0_i32, %c0_i32_1, %1 : i32, i32, i32, i32
  }
  func.func @transform_2(%arg0: i32, %arg1: i32, %arg2: i32) -> (i32, i32) {
    %c0_i32 = arith.constant 0 : i32
    %c0_i32_0 = arith.constant 0 : i32
    return %arg2, %c0_i32 : i32, i32
  }
  func.func @transform_3(%arg0: i32, %arg1: i32, %arg2: i32) -> (i32, i32, i32) {
    %c0_i32 = arith.constant 0 : i32
    %c0_i32_0 = arith.constant 0 : i32
    %c0_i32_1 = arith.constant 0 : i32
    return %arg0, %c0_i32, %c0_i32_0 : i32, i32, i32
  }
  func.func @transform_4(%arg0: i32, %arg1: i32, %arg2: i32) -> (i32, i32, i32) {
    %c0_i32 = arith.constant 0 : i32
    return %arg0, %arg2, %arg1 : i32, i32, i32
  }
}

module attributes {stable_mosaic.version = 11 : i64} {
  func.func @_conv_taps_kernel(%arg0: i32, %arg1: i32, %arg2: i32, %arg3: memref<1x4x4x128xf32, #tpu.memory_space<vmem>>, %arg4: memref<1x4x4x128xf32, #tpu.memory_space<vmem>>, %arg5: memref<8x36xf32, #tpu.memory_space<vmem>>, %arg6: memref<1x4x1xf32, #tpu.memory_space<vmem>>, %arg7: memref<1x8x128xf32, #tpu.memory_space<vmem>>) attributes {dimension_semantics = [#tpu.dimension_semantics<parallel>, #tpu.dimension_semantics<parallel>, #tpu.dimension_semantics<parallel>], iteration_bounds = array<i64: 2, 1, 1>, scalar_prefetch = 0 : i64, scratch_operands = 0 : i64, tpu.core_type = #tpu.core_type<tc>, window_params = [{transform_indices = @transform_0, window_bounds = array<i64: 1, 4, 4, 128>}, {transform_indices = @transform_1, window_bounds = array<i64: 1, 4, 4, 128>}, {transform_indices = @transform_2, window_bounds = array<i64: 8, 36>}, {transform_indices = @transform_3, window_bounds = array<i64: 1, 4, 1>}, {transform_indices = @transform_4, window_bounds = array<i64: 1, 8, 128>}]} {
    %c0 = arith.constant 0 : index
    %c0_0 = arith.constant 0 : index
    %c0_1 = arith.constant 0 : index
    %c0_2 = arith.constant 0 : index
    %0 = vector.load %arg3[%c0, %c0_0, %c0_1, %c0_2] : memref<1x4x4x128xf32, #tpu.memory_space<vmem>>, vector<1x4x4x128xf32>
    %1 = vector.shape_cast %0 : vector<1x4x4x128xf32> to vector<4x4x128xf32>
    %c0_3 = arith.constant 0 : index
    %c0_4 = arith.constant 0 : index
    %c0_5 = arith.constant 0 : index
    %c0_6 = arith.constant 0 : index
    %2 = vector.load %arg4[%c0_3, %c0_4, %c0_5, %c0_6] : memref<1x4x4x128xf32, #tpu.memory_space<vmem>>, vector<1x4x4x128xf32>
    %3 = vector.shape_cast %2 : vector<1x4x4x128xf32> to vector<4x4x128xf32>
    %4 = vector.extract_strided_slice %1 {offsets = [0, 0, 0], sizes = [1, 4, 128], strides = [1, 1, 1]} : vector<4x4x128xf32> to vector<1x4x128xf32>
    %5 = vector.shape_cast %4 : vector<1x4x128xf32> to vector<4x128xf32>
    %6 = vector.extract_strided_slice %1 {offsets = [1, 0, 0], sizes = [1, 4, 128], strides = [1, 1, 1]} : vector<4x4x128xf32> to vector<1x4x128xf32>
    %7 = vector.shape_cast %6 : vector<1x4x128xf32> to vector<4x128xf32>
    %8 = vector.extract_strided_slice %1 {offsets = [0, 0, 1], sizes = [1, 4, 127], strides = [1, 1, 1]} : vector<4x4x128xf32> to vector<1x4x127xf32>
    %9 = vector.shape_cast %8 : vector<1x4x127xf32> to vector<4x127xf32>
    %10 = vector.extract_strided_slice %3 {offsets = [0, 0, 0], sizes = [1, 4, 1], strides = [1, 1, 1]} : vector<4x4x128xf32> to vector<1x4x1xf32>
    %11 = vector.shape_cast %10 : vector<1x4x1xf32> to vector<4x1xf32>
    %12 = tpu.concatenate %9, %11 in 1 : vector<4x127xf32>, vector<4x1xf32> -> vector<4x128xf32>
    %13 = vector.extract_strided_slice %1 {offsets = [2, 0, 0], sizes = [1, 4, 128], strides = [1, 1, 1]} : vector<4x4x128xf32> to vector<1x4x128xf32>
    %14 = vector.shape_cast %13 : vector<1x4x128xf32> to vector<4x128xf32>
    %15 = vector.extract_strided_slice %1 {offsets = [3, 0, 0], sizes = [1, 4, 128], strides = [1, 1, 1]} : vector<4x4x128xf32> to vector<1x4x128xf32>
    %16 = vector.shape_cast %15 : vector<1x4x128xf32> to vector<4x128xf32>
    %17 = vector.extract_strided_slice %1 {offsets = [2, 0, 1], sizes = [1, 4, 127], strides = [1, 1, 1]} : vector<4x4x128xf32> to vector<1x4x127xf32>
    %18 = vector.shape_cast %17 : vector<1x4x127xf32> to vector<4x127xf32>
    %19 = vector.extract_strided_slice %3 {offsets = [2, 0, 0], sizes = [1, 4, 1], strides = [1, 1, 1]} : vector<4x4x128xf32> to vector<1x4x1xf32>
    %20 = vector.shape_cast %19 : vector<1x4x1xf32> to vector<4x1xf32>
    %21 = tpu.concatenate %18, %20 in 1 : vector<4x127xf32>, vector<4x1xf32> -> vector<4x128xf32>
    %22 = vector.extract_strided_slice %1 {offsets = [0, 0, 9], sizes = [1, 4, 119], strides = [1, 1, 1]} : vector<4x4x128xf32> to vector<1x4x119xf32>
    %23 = vector.shape_cast %22 : vector<1x4x119xf32> to vector<4x119xf32>
    %24 = vector.extract_strided_slice %3 {offsets = [0, 0, 0], sizes = [1, 4, 9], strides = [1, 1, 1]} : vector<4x4x128xf32> to vector<1x4x9xf32>
    %25 = vector.shape_cast %24 : vector<1x4x9xf32> to vector<4x9xf32>
    %26 = tpu.concatenate %23, %25 in 1 : vector<4x119xf32>, vector<4x9xf32> -> vector<4x128xf32>
    %27 = vector.extract_strided_slice %1 {offsets = [1, 0, 9], sizes = [1, 4, 119], strides = [1, 1, 1]} : vector<4x4x128xf32> to vector<1x4x119xf32>
    %28 = vector.shape_cast %27 : vector<1x4x119xf32> to vector<4x119xf32>
    %29 = vector.extract_strided_slice %3 {offsets = [1, 0, 0], sizes = [1, 4, 9], strides = [1, 1, 1]} : vector<4x4x128xf32> to vector<1x4x9xf32>
    %30 = vector.shape_cast %29 : vector<1x4x9xf32> to vector<4x9xf32>
    %31 = tpu.concatenate %28, %30 in 1 : vector<4x119xf32>, vector<4x9xf32> -> vector<4x128xf32>
    %32 = vector.extract_strided_slice %1 {offsets = [0, 0, 10], sizes = [1, 4, 118], strides = [1, 1, 1]} : vector<4x4x128xf32> to vector<1x4x118xf32>
    %33 = vector.shape_cast %32 : vector<1x4x118xf32> to vector<4x118xf32>
    %34 = vector.extract_strided_slice %3 {offsets = [0, 0, 0], sizes = [1, 4, 10], strides = [1, 1, 1]} : vector<4x4x128xf32> to vector<1x4x10xf32>
    %35 = vector.shape_cast %34 : vector<1x4x10xf32> to vector<4x10xf32>
    %36 = tpu.concatenate %33, %35 in 1 : vector<4x118xf32>, vector<4x10xf32> -> vector<4x128xf32>
    %37 = tpu.concatenate %5, %7, %12, %14, %16, %21, %26, %31, %36 in 0 : vector<4x128xf32>, vector<4x128xf32>, vector<4x128xf32>, vector<4x128xf32>, vector<4x128xf32>, vector<4x128xf32>, vector<4x128xf32>, vector<4x128xf32>, vector<4x128xf32> -> vector<36x128xf32>
    %c0_7 = arith.constant 0 : index
    %c0_8 = arith.constant 0 : index
    %38 = vector.load %arg5[%c0_7, %c0_8] : memref<8x36xf32, #tpu.memory_space<vmem>>, vector<8x36xf32>
    %cst = arith.constant dense<0.000000e+00> : vector<8x128xf32>
    %39 = tpu.matmul %38, %37, %cst {dimension_numbers = #tpu.dot_dimension_numbers<[1], [0], [0], [1], [0, 0, 1, 1], [], []>} : vector<8x36xf32>, vector<36x128xf32>, vector<8x128xf32> -> vector<8x128xf32>
    %c0_9 = arith.constant 0 : index
    %c0_10 = arith.constant 0 : index
    %c0_11 = arith.constant 0 : index
    %40 = vector.load %arg7[%c0_9, %c0_10, %c0_11] : memref<1x8x128xf32, #tpu.memory_space<vmem>>, vector<1x8x128xf32>
    %41 = vector.shape_cast %40 : vector<1x8x128xf32> to vector<8x128xf32>
    %42 = vector.shape_cast %39 : vector<8x128xf32> to vector<1x8x128xf32>
    tpu.vector_store %arg7[%c0_9, %c0_10, %c0_11], %42 {strides = array<i32>} : memref<1x8x128xf32, #tpu.memory_space<vmem>>, vector<1x8x128xf32>,
    return
  }
  func.func @transform_0(%arg0: i32, %arg1: i32, %arg2: i32) -> (i32, i32, i32, i32) {
    %c0_i32 = arith.constant 0 : i32
    %c0_i32_0 = arith.constant 0 : i32
    %c0_i32_1 = arith.constant 0 : i32
    return %arg0, %c0_i32, %c0_i32_0, %arg1 : i32, i32, i32, i32
  }
  func.func @transform_1(%arg0: i32, %arg1: i32, %arg2: i32) -> (i32, i32, i32, i32) {
    %c1_i32 = arith.constant 1 : i32
    %0 = arith.addi %arg1, %c1_i32 : i32
    %c1_i32_0 = arith.constant 1 : i32
    %1 = arith.muli %0, %c1_i32_0 : i32
    %c0_i32 = arith.constant 0 : i32
    %c0_i32_1 = arith.constant 0 : i32
    %c0_i32_2 = arith.constant 0 : i32
    return %arg0, %c0_i32, %c0_i32_1, %1 : i32, i32, i32, i32
  }
  func.func @transform_2(%arg0: i32, %arg1: i32, %arg2: i32) -> (i32, i32) {
    %c0_i32 = arith.constant 0 : i32
    %c0_i32_0 = arith.constant 0 : i32
    return %arg2, %c0_i32 : i32, i32
  }
  func.func @transform_3(%arg0: i32, %arg1: i32, %arg2: i32) -> (i32, i32, i32) {
    %c0_i32 = arith.constant 0 : i32
    %c0_i32_0 = arith.constant 0 : i32
    %c0_i32_1 = arith.constant 0 : i32
    return %arg0, %c0_i32, %c0_i32_0 : i32, i32, i32
  }
  func.func @transform_4(%arg0: i32, %arg1: i32, %arg2: i32) -> (i32, i32, i32) {
    %c0_i32 = arith.constant 0 : i32
    return %arg0, %arg2, %arg1 : i32, i32, i32
  }
}

module attributes {stable_mosaic.version = 11 : i64} {
  func.func @_row_stats_kernel(%arg0: i32, %arg1: memref<16x64xf32, #tpu.memory_space<vmem>>, %arg2: memref<16x2xf32, #tpu.memory_space<vmem>>) attributes {dimension_semantics = [#tpu.dimension_semantics<parallel>], iteration_bounds = array<i64: 1>, scalar_prefetch = 0 : i64, scratch_operands = 0 : i64, tpu.core_type = #tpu.core_type<tc>, window_params = [{transform_indices = @transform_0, window_bounds = array<i64: 16, 64>}, {transform_indices = @transform_1, window_bounds = array<i64: 16, 2>}]} {
    %c0 = arith.constant 0 : index
    %c0_0 = arith.constant 0 : index
    %0 = vector.load %arg1[%c0, %c0_0] : memref<16x64xf32, #tpu.memory_space<vmem>>, vector<16x64xf32>
    %cst = arith.constant dense<0.000000e+00> : vector<16xf32>
    %1 = vector.multi_reduction <add>, %0, %cst [1] : vector<16x64xf32> to vector<16xf32>
    %2 = vector.shape_cast %1 : vector<16xf32> to vector<16x1xf32>
    %3 = arith.mulf %0, %0 : vector<16x64xf32>
    %cst_1 = arith.constant dense<0.000000e+00> : vector<16xf32>
    %4 = vector.multi_reduction <add>, %3, %cst_1 [1] : vector<16x64xf32> to vector<16xf32>
    %5 = vector.shape_cast %4 : vector<16xf32> to vector<16x1xf32>
    %6 = tpu.concatenate %2, %5 in 1 : vector<16x1xf32>, vector<16x1xf32> -> vector<16x2xf32>
    %c0_2 = arith.constant 0 : index
    %c0_3 = arith.constant 0 : index
    %7 = vector.load %arg2[%c0_2, %c0_3] : memref<16x2xf32, #tpu.memory_space<vmem>>, vector<16x2xf32>
    tpu.vector_store %arg2[%c0_2, %c0_3], %6 {strides = array<i32>} : memref<16x2xf32, #tpu.memory_space<vmem>>, vector<16x2xf32>,
    return
  }
  func.func @transform_0(%arg0: i32) -> (i32, i32) {
    %c0_i32 = arith.constant 0 : i32
    %c0_i32_0 = arith.constant 0 : i32
    return %arg0, %c0_i32 : i32, i32
  }
  func.func @transform_1(%arg0: i32) -> (i32, i32) {
    %c0_i32 = arith.constant 0 : i32
    %c0_i32_0 = arith.constant 0 : i32
    return %arg0, %c0_i32 : i32, i32
  }
}

module attributes {stable_mosaic.version = 11 : i64} {
  func.func @_row_affine_add_kernel(%arg0: i32, %arg1: memref<16x64xf32, #tpu.memory_space<vmem>>, %arg2: memref<16x64xf32, #tpu.memory_space<vmem>>, %arg3: memref<16x2xf32, #tpu.memory_space<vmem>>, %arg4: memref<16x64xf32, #tpu.memory_space<vmem>>) attributes {dimension_semantics = [#tpu.dimension_semantics<parallel>], iteration_bounds = array<i64: 1>, scalar_prefetch = 0 : i64, scratch_operands = 0 : i64, tpu.core_type = #tpu.core_type<tc>, window_params = [{transform_indices = @transform_0, window_bounds = array<i64: 16, 64>}, {transform_indices = @transform_1, window_bounds = array<i64: 16, 64>}, {transform_indices = @transform_2, window_bounds = array<i64: 16, 2>}, {transform_indices = @transform_3, window_bounds = array<i64: 16, 64>}]} {
    %c0 = arith.constant 0 : index
    %c0_0 = arith.constant 0 : index
    %0 = vector.load %arg2[%c0, %c0_0] : memref<16x64xf32, #tpu.memory_space<vmem>>, vector<16x64xf32>
    %c0_1 = arith.constant 0 : index
    %c0_2 = arith.constant 0 : index
    %1 = vector.load %arg1[%c0_1, %c0_2] : memref<16x64xf32, #tpu.memory_space<vmem>>, vector<16x64xf32>
    %c0_3 = arith.constant 0 : index
    %c0_4 = arith.constant 0 : index
    %2 = vector.load %arg3[%c0_3, %c0_4] : memref<16x2xf32, #tpu.memory_space<vmem>>, vector<16x1xf32>
    %3 = vector.broadcast %2 : vector<16x1xf32> to vector<16x64xf32>
    %4 = arith.subf %1, %3 : vector<16x64xf32>
    %c0_5 = arith.constant 0 : index
    %c1 = arith.constant 1 : index
    %5 = vector.load %arg3[%c0_5, %c1] : memref<16x2xf32, #tpu.memory_space<vmem>>, vector<16x1xf32>
    %6 = vector.broadcast %5 : vector<16x1xf32> to vector<16x64xf32>
    %7 = arith.mulf %4, %6 : vector<16x64xf32>
    %8 = arith.addf %0, %7 : vector<16x64xf32>
    %c0_6 = arith.constant 0 : index
    %c0_7 = arith.constant 0 : index
    %9 = vector.load %arg4[%c0_6, %c0_7] : memref<16x64xf32, #tpu.memory_space<vmem>>, vector<16x64xf32>
    tpu.vector_store %arg4[%c0_6, %c0_7], %8 {strides = array<i32>} : memref<16x64xf32, #tpu.memory_space<vmem>>, vector<16x64xf32>,
    return
  }
  func.func @transform_0(%arg0: i32) -> (i32, i32) {
    %c0_i32 = arith.constant 0 : i32
    %c0_i32_0 = arith.constant 0 : i32
    return %arg0, %c0_i32 : i32, i32
  }
  func.func @transform_1(%arg0: i32) -> (i32, i32) {
    %c0_i32 = arith.constant 0 : i32
    %c0_i32_0 = arith.constant 0 : i32
    return %arg0, %c0_i32 : i32, i32
  }
  func.func @transform_2(%arg0: i32) -> (i32, i32) {
    %c0_i32 = arith.constant 0 : i32
    %c0_i32_0 = arith.constant 0 : i32
    return %arg0, %c0_i32 : i32, i32
  }
  func.func @transform_3(%arg0: i32) -> (i32, i32) {
    %c0_i32 = arith.constant 0 : i32
    %c0_i32_0 = arith.constant 0 : i32
    return %arg0, %c0_i32 : i32, i32
  }
}

</mosaic_0001>

<llo_original>
// kernel: unet_down_conv_forward.9
$region0: #{unet_down_conv_forward.9}
  #allocation0 [shape = 'u32[]', space=smem, size = 0x4, offset = 0x4, fixed_abs, tag = 'smem constant byte address 0x4 - core index']
  #allocation1 [shape = 'u32[72,128]{1,0:T(1,128)}', space=vmem, size = 0x9000, scoped, tag = 'internal scratch']
  %s0 = inlined_call_operand.vmem [shape: f32[8,256], index: 0, kind: input, shape index: {}]
  %s1 = inlined_call_operand.vmem [shape: f32[8,2], index: 1, kind: output, shape index: {}]
  %s2 = sld [smem:[#allocation0]]
  $region14: #{unet_down_conv_forward.9} parent=0
    _
  %s4 = ssub.s32 1, %s2
  %s5 = scalar_select 0, %s4, %s2
  // Predicated region
  $region2: #{unet_down_conv_forward.9} parent=0 // pred_check
    _
  $region3: #{unet_down_conv_forward.9} parent=0 // pred_check_branch
    %7 = sbr.rel (0) target = $region5
  $region4: #{unet_down_conv_forward.9} parent=0 // pred_region
    _
  $region5: #{unet_down_conv_forward.9} parent=0 // pred_fallthru
    _
  %v8 = vld [vmem:[%s0] sm:$0xff]
  %v9 = vld [vmem:[%s0 + $0x8] sm:$0xff]
  %v10 = vadd.f32 %v8, %v9
  %11 = vadd.xlane.f32.xlu0 %v10
  %v12 = vpop.xlane.xlu0 %11
  %v13 = vmul.f32 %v8, %v8
  %v14 = vmul.f32 %v9, %v9
  %v15 = vadd.f32 %v13, %v14
  %16 = vadd.xlane.f32.xlu0 %v15
  %v17 = vpop.xlane.xlu0 %16
  %vm18 = vcmask 7168
  %v19 = vsel %vm18, %v12, %v17
  %vm20 = vcmask 15360
  %21 = vst.msk [vmem:[%s1] sm:$0xff] %vm20, %v19
  // Predicated region
  $region6: #{unet_down_conv_forward.9} parent=0 // pred_check
    _
  $region7: #{unet_down_conv_forward.9} parent=0 // pred_check_branch
    %23 = sbr.rel (0) target = $region9
  $region8: #{unet_down_conv_forward.9} parent=0 // pred_region
    _
  $region9: #{unet_down_conv_forward.9} parent=0 // pred_fallthru
    _
  // Predicated region
  $region10: #{unet_down_conv_forward.9} parent=0 // pred_check
    _
  $region11: #{unet_down_conv_forward.9} parent=0 // pred_check_branch
    %25 = sbr.rel (0) target = $region13
  $region12: #{unet_down_conv_forward.9} parent=0 // pred_region
    _
  $region13: #{unet_down_conv_forward.9} parent=0 // pred_fallthru
    _

// kernel: unet_down_conv_forward.10
$region0: #{unet_down_conv_forward.10}
  #allocation0 [shape = 'u32[]', space=smem, size = 0x4, offset = 0x4, fixed_abs, tag = 'smem constant byte address 0x4 - core index']
  #allocation1 [shape = 'u32[72,128]{1,0:T(1,128)}', space=vmem, size = 0x9000, scoped, tag = 'internal scratch']
  %s0 = inlined_call_operand.vmem [shape: f32[2,1,4,512], index: 0, kind: input, shape index: {}, may-alias: {0,1}]
  %s1 = inlined_call_operand.vmem [shape: f32[2,1,4,512], index: 1, kind: input, shape index: {}, may-alias: {0,1}]
  %s2 = inlined_call_operand.vmem [shape: f32[4,4], index: 2, kind: input, shape index: {}]
  %s3 = inlined_call_operand.vmem [shape: f32[2,4,1], index: 3, kind: input, shape index: {}]
  %s4 = inlined_call_operand.vmem [shape: f32[2,4,256], index: 4, kind: output, shape index: {}]
  %s5 = sld [smem:[#allocation0]]
  $region49: #{unet_down_conv_forward.10} parent=0
    _
  %s7 = ssub.s32 1, %s5
  %s8 = scalar_select 0, %s7, %s5
  loop: start=0, step=1, limit=4
  $region2: #{unet_down_conv_forward.10} parent=0 // loop_pre_header
    _
  $region3: #{unet_down_conv_forward.10} parent=0 // loop_header
    %s10 = sphi 0, %s14
    %p11 = scmp.ge.s32.totalorder %s10, 4
    %s17 = sphi 0, %s36
    %s18 = sphi 0, %s32
    %s19 = sphi 0, %s28
    %s20 = sphi 0, %s17
    %s21 = sphi 0, %s18
    %s22 = sphi 0, %s19
    %s23 = sphi 0, %s20
    %s24 = sphi 0, %s21
    %s25 = sphi 0, %s22
    %s41 = sphi 0, %s43
    %s44 = sphi 0, %s41
    %s45 = sphi 0, %s44
    %s61 = sphi 0, %s45
    %s73 = sphi 0, %s75
    %s76 = sphi 0, %s73
    %s77 = sphi 0, %s76
    %s93 = sphi 0, %s77
    %s99 = sphi 0, %s101
    %s102 = sphi 0, %s99
    %s103 = sphi 0, %s102
    %s119 = sphi 0, %s103
    %s125 = sphi 0, %s127
    %s128 = sphi 0, %s125
    %s129 = sphi 0, %s128
    %s145 = sphi 0, %s129
    %s155 = sphi 0, %s157
    %s158 = sphi 0, %s155
    %s159 = sphi 0, %s158
    %s175 = sphi 0, %s159
  $region4: #{unet_down_conv_forward.10} parent=0 // loop_header_branch
    %13 = sbr.rel (%p11) target = $region8
  $region5: #{unet_down_conv_forward.10} parent=0 // loop_body
    %s15 = ssub.s32 %s10, 1
    %s16 = ssub.s32 %s10, 2
    %s26 = sadd.s32 1, %s19
    %p27 = scmp.ge.s32.totalorder %s26, 1
    %s28 = scalar_select %p27, 0, %s26
    %s29 = sadd.s32 1, %s18
    %s30 = scalar_select %p27, %s29, %s18
    %p31 = scmp.ge.s32.totalorder %s30, 1
    %s32 = scalar_select %p31, 0, %s30
    %s33 = sadd.s32 1, %s17
    %s34 = scalar_select %p31, %s33, %s17
    %p35 = scmp.ge.s32.totalorder %s34, 2
    %s36 = scalar_select %p35, 0, %s34
    %s37 = ssub.s32 %s17, %s36
    %s38 = ssub.s32 %s18, %s32
    %s39 = sor.u32 %s37, %s38
    %p40 = scmp.eq.s32.totalorder %s39, 0
    %s42 = sadd.s32 %s41, 1
    %s43 = scalar_select %p40, %s41, %s42
    %p46 = pneg %p40
    %p47 = scmp.eq.s32.totalorder %s10, 1
    %p48 = por %p46, %p47
    %p49 = scmp.ne.s32.totalorder %s41, %s44
    %p50 = scmp.eq.s32.totalorder %s10, 0
    %p51 = por %p49, %p50
    %p52 = scmp.ne.s32.totalorder %s41, %s44
    %p53 = scmp.eq.s32.totalorder %s15, 1
    %p54 = por %p52, %p53
    %p55 = scmp.ne.s32.totalorder %s44, %s45
    %p56 = scmp.eq.s32.totalorder %s15, 0
    %p57 = por %p55, %p56
    %p58 = scmp.ne.s32.totalorder %s44, %s45
    %p59 = scmp.eq.s32.totalorder %s16, 1
    %p60 = por %p58, %p59
    %p62 = scmp.ne.s32.totalorder %s45, %s61
    %p63 = scmp.eq.s32.totalorder %s16, 0
    %p64 = por %p62, %p63
    %s65 = sadd.s32 %s18, 1
    %s66 = smul.u32 %s65, 2
    %s67 = sadd.s32 %s32, 1
    %s68 = smul.u32 %s67, 2
    %s69 = ssub.s32 %s17, %s36
    %s70 = ssub.s32 %s66, %s68
    %s71 = sor.u32 %s69, %s70
    %p72 = scmp.eq.s32.totalorder %s71, 0
    %s74 = sadd.s32 %s73, 1
    %s75 = scalar_select %p72, %s73, %s74
    %p78 = pneg %p72
    %p79 = scmp.eq.s32.totalorder %s10, 1
    %p80 = por %p78, %p79
    %p81 = scmp.ne.s32.totalorder %s73, %s76
    %p82 = scmp.eq.s32.totalorder %s10, 0
    %p83 = por %p81, %p82
    %p84 = scmp.ne.s32.totalorder %s73, %s76
    %p85 = scmp.eq.s32.totalorder %s15, 1
    %p86 = por %p84, %p85
    %p87 = scmp.ne.s32.totalorder %s76, %s77
    %p88 = scmp.eq.s32.totalorder %s15, 0
    %p89 = por %p87, %p88
    %p90 = scmp.ne.s32.totalorder %s76, %s77
    %p91 = scmp.eq.s32.totalorder %s16, 1
    %p92 = por %p90, %p91
    %p94 = scmp.ne.s32.totalorder %s77, %s93
    %p95 = scmp.eq.s32.totalorder %s16, 0
    %p96 = por %p94, %p95
    %s97 = ssub.s32 %s19, %s28
    %p98 = scmp.eq.s32.totalorder %s97, 0
    %s100 = sadd.s32 %s99, 1
    %s101 = scalar_select %p98, %s99, %s100
    %p104 = pneg %p98
    %p105 = scmp.eq.s32.totalorder %s10, 1
    %p106 = por %p104, %p105
    %p107 = scmp.ne.s32.totalorder %s99, %s102
    %p108 = scmp.eq.s32.totalorder %s10, 0
    %p109 = por %p107, %p108
    %p110 = scmp.ne.s32.totalorder %s99, %s102
    %p111 = scmp.eq.s32.totalorder %s15, 1
    %p112 = por %p110, %p111
    %p113 = scmp.ne.s32.totalorder %s102, %s103
    %p114 = scmp.eq.s32.totalorder %s15, 0
    %p115 = por %p113, %p114
    %p116 = scmp.ne.s32.totalorder %s102, %s103
    %p117 = scmp.eq.s32.totalorder %s16, 1
    %p118 = por %p116, %p117
    %p120 = scmp.ne.s32.totalorder %s103, %s119
    %p121 = scmp.eq.s32.totalorder %s16, 0
    %p122 = por %p120, %p121
    %s123 = ssub.s32 %s17, %s36
    %p124 = scmp.eq.s32.totalorder %s123, 0
    %s126 = sadd.s32 %s125, 1
    %s127 = scalar_select %p124, %s125, %s126
    %p130 = pneg %p124
    %p131 = scmp.eq.s32.totalorder %s10, 1
    %p132 = por %p130, %p131
    %p133 = scmp.ne.s32.totalorder %s125, %s128
    %p134 = scmp.eq.s32.totalorder %s10, 0
    %p135 = por %p133, %p134
    %p136 = scmp.ne.s32.totalorder %s125, %s128
    %p137 = scmp.eq.s32.totalorder %s15, 1
    %p138 = por %p136, %p137
    %p139 = scmp.ne.s32.totalorder %s128, %s129
    %p140 = scmp.eq.s32.totalorder %s15, 0
    %p141 = por %p139, %p140
    %p142 = scmp.ne.s32.totalorder %s128, %s129
    %p143 = scmp.eq.s32.totalorder %s16, 1
    %p144 = por %p142, %p143
    %p146 = scmp.ne.s32.totalorder %s129, %s145
    %p147 = scmp.eq.s32.totalorder %s16, 0
    %p148 = por %p146, %p147
    %s149 = ssub.s32 %s17, %s36
    %s150 = ssub.s32 %s19, %s28
    %s151 = sor.u32 %s149, %s150
    %s152 = ssub.s32 %s18, %s32
    %s153 = sor.u32 %s151, %s152
    %p154 = scmp.eq.s32.totalorder %s153, 0
    %s156 = sadd.s32 %s155, 1
    %s157 = scalar_select %p154, %s155, %s156
    %p160 = pneg %p154
    %p161 = scmp.eq.s32.totalorder %s10, 1
    %p162 = por %p160, %p161
    %p163 = scmp.ne.s32.totalorder %s155, %s158
    %p164 = scmp.eq.s32.totalorder %s10, 0
    %p165 = por %p163, %p164
    %p166 = scmp.ne.s32.totalorder %s155, %s158
    %p167 = scmp.eq.s32.totalorder %s15, 1
    %p168 = por %p166, %p167
    %p169 = scmp.ne.s32.totalorder %s158, %s159
    %p170 = scmp.eq.s32.totalorder %s15, 0
    %p171 = por %p169, %p170
    %p172 = scmp.ne.s32.totalorder %s158, %s159
    %p173 = scmp.eq.s32.totalorder %s16, 1
    %p174 = por %p172, %p173
    %p176 = scmp.ne.s32.totalorder %s159, %s175
    %p177 = scmp.eq.s32.totalorder %s16, 0
    %p178 = por %p176, %p177
    %p179 = scmp.le.s32.totalorder 1, %s10
    %p180 = scmp.lt.s32.totalorder %s10, 3
    %p181 = pnand %p179, %p180
    %p182 = pneg %p181
    // Predicated region
    $region9: #{unet_down_conv_forward.10} parent=5 // pred_check
      _
    $region10: #{unet_down_conv_forward.10} parent=5 // pred_check_branch
      %184 = sbr.rel (%p181) target = $region12
    $region11: #{unet_down_conv_forward.10} parent=5 // pred_region
      %s185 = ssub.s32 %s10, 1
      // Predicated region
      $region13: #{unet_down_conv_forward.10} parent=11 // pred_check
        %p186 = pneg %p115
      $region14: #{unet_down_conv_forward.10} parent=11 // pred_check_branch
        %188 = sbr.rel (%p186) target = $region16
      $region15: #{unet_down_conv_forward.10} parent=11 // pred_region
        %p189 = scmp.lt.s32.totalorder %s22, 0
        %s190 = scalar_select %p189, %s22, 0
        %s191 = smul.addr %s190, 4
        %s192 = scalar_lea.vmem %s2, %s191
      $region16: #{unet_down_conv_forward.10} parent=11 // pred_fallthru
        _
    $region12: #{unet_down_conv_forward.10} parent=5 // pred_fallthru
      _
    %p193 = scmp.lt.s32.totalorder %s10, 2
    // Predicated region
    $region17: #{unet_down_conv_forward.10} parent=5 // pred_check
      %p194 = pneg %p193
    $region18: #{unet_down_conv_forward.10} parent=5 // pred_check_branch
      %196 = sbr.rel (%p194) target = $region20
    $region19: #{unet_down_conv_forward.10} parent=5 // pred_region
      // Predicated region
      $region21: #{unet_down_conv_forward.10} parent=19 // pred_check
        %p197 = pneg %p51
      $region22: #{unet_down_conv_forward.10} parent=19 // pred_check_branch
        %199 = sbr.rel (%p197) target = $region24
      $region23: #{unet_down_conv_forward.10} parent=19 // pred_region
        %s200 = smul.u32 2, %s18
        %p201 = scmp.lt.s32.totalorder %s17, 1
        %s202 = scalar_select %p201, %s17, 1
        %p203 = scmp.lt.s32.totalorder %s200, 3
        %s204 = scalar_select %p203, %s200, 3
        %s205 = smul.addr %s202, 4
        %s206 = sadd.s32 %s204, %s205
        %s207 = smul.addr %s206, 4
        %s208 = scalar_lea.vmem %s0, %s207
        %s209 = smul.u32 2, %s18
      $region24: #{unet_down_conv_forward.10} parent=19 // pred_fallthru
        _
      // Predicated region
      $region25: #{unet_down_conv_forward.10} parent=19 // pred_check
        %p210 = pneg %p83
      $region26: #{unet_down_conv_forward.10} parent=19 // pred_check_branch
        %212 = sbr.rel (%p210) target = $region28
      $region27: #{unet_down_conv_forward.10} parent=19 // pred_region
        %s213 = sadd.s32 %s18, 1
        %s214 = smul.u32 %s213, 2
        %p215 = scmp.lt.s32.totalorder %s17, 1
        %s216 = scalar_select %p215, %s17, 1
        %p217 = scmp.lt.s32.totalorder %s214, 3
        %s218 = scalar_select %p217, %s214, 3
        %s219 = smul.addr %s216, 4
        %s220 = sadd.s32 %s218, %s219
        %s221 = smul.addr %s220, 4
        %s222 = scalar_lea.vmem %s1, %s221
        %s223 = sadd.s32 %s18, 1
        %s224 = smul.u32 %s223, 2
      $region28: #{unet_down_conv_forward.10} parent=19 // pred_fallthru
        _
      // Predicated region
      $region29: #{unet_down_conv_forward.10} parent=19 // pred_check
        %p225 = pneg %p135
      $region30: #{unet_down_conv_forward.10} parent=19 // pred_check_branch
        %227 = sbr.rel (%p225) target = $region32
      $region31: #{unet_down_conv_forward.10} parent=19 // pred_region
        %p228 = scmp.lt.s32.totalorder %s17, 1
        %s229 = scalar_select %p228, %s17, 1
        %s230 = smul.addr %s229, 4
        %s231 = scalar_lea.vmem %s3, %s230
      $region32: #{unet_down_conv_forward.10} parent=19 // pred_fallthru
        _
    $region20: #{unet_down_conv_forward.10} parent=5 // pred_fallthru
      _
    %p232 = scmp.le.s32.totalorder 1, %s10
    %p233 = scmp.lt.s32.totalorder %s10, 3
    %p234 = pnand %p232, %p233
    %p235 = pneg %p234
    // Predicated region
    $region33: #{unet_down_conv_forward.10} parent=5 // pred_check
      _
    $region34: #{unet_down_conv_forward.10} parent=5 // pred_check_branch
      %237 = sbr.rel (%p234) target = $region36
    $region35: #{unet_down_conv_forward.10} parent=5 // pred_region
      %s238 = ssub.s32 %s10, 1
      %s239 = smul.u32 2, %s21
      %p240 = scmp.lt.s32.totalorder %s20, 1
      %s241 = scalar_select %p240, %s20, 1
      %p242 = scmp.lt.s32.totalorder %s239, 3
      %s243 = scalar_select %p242, %s239, 3
      %s244 = smul.addr %s241, 4
      %s245 = sadd.s32 %s243, %s244
      %s246 = smul.addr %s245, 4
      %s247 = scalar_lea.vmem %s0, %s246
      %p248 = pneg %p57
      %p249 = pneg %p54
      %s250 = sadd.s32 %s21, 1
      %s251 = smul.u32 %s250, 2
      %p252 = scmp.lt.s32.totalorder %s20, 1
      %s253 = scalar_select %p252, %s20, 1
      %p254 = scmp.lt.s32.totalorder %s251, 3
      %s255 = scalar_select %p254, %s251, 3
      %s256 = smul.addr %s253, 4
      %s257 = sadd.s32 %s255, %s256
      %s258 = smul.addr %s257, 4
      %s259 = scalar_lea.vmem %s1, %s258
      %p260 = pneg %p89
      %p261 = pneg %p86
      %p262 = scmp.lt.s32.totalorder %s22, 0
      %s263 = scalar_select %p262, %s22, 0
      %s264 = smul.addr %s263, 4
      %s265 = scalar_lea.vmem %s2, %s264
      %p266 = pneg %p115
      %p267 = pneg %p112
      %p268 = scmp.lt.s32.totalorder %s20, 1
      %s269 = scalar_select %p268, %s20, 1
      %s270 = smul.addr %s269, 4
      %s271 = scalar_lea.vmem %s3, %s270
      %p272 = pneg %p141
      %p273 = pneg %p138
      %p274 = pneg %p171
      %p275 = pneg %p168
      %s276 = smul.u32 2, %s21
      %p277 = scmp.lt.s32.totalorder %s20, 1
      %s278 = scalar_select %p277, %s20, 1
      %p279 = scmp.lt.s32.totalorder %s22, 0
      %s280 = scalar_select %p279, %s22, 0
      %p281 = scmp.lt.s32.totalorder %s276, 1
      %s282 = scalar_select %p281, %s276, 1
      %s283 = smul.addr %s280, 2
      %s284 = sadd.s32 %s282, %s283
      %s285 = smul.addr %s278, 2
      %s286 = sadd.s32 %s284, %s285
      %s287 = smul.addr %s286, 4
      %s288 = scalar_lea.vmem %s4, %s287
      %s289 = smul.u32 2, %s21
      %p290 = scmp.lt.s32.totalorder %s20, 1
      %s291 = scalar_select %p290, %s20, 1
      %p292 = scmp.lt.s32.totalorder %s289, 3
      %s293 = scalar_select %p292, %s289, 3
      %s294 = smul.addr %s291, 4
      %s295 = sadd.s32 %s293, %s294
      %s296 = smul.addr %s295, 4
      %s297 = scalar_lea.vmem %s0, %s296
      %s298 = smul.u32 2, %s21
      %s299 = sadd.s32 %s21, 1
      %s300 = smul.u32 %s299, 2
      %p301 = scmp.lt.s32.totalorder %s20, 1
      %s302 = scalar_select %p301, %s20, 1
      %p303 = scmp.lt.s32.totalorder %s300, 3
      %s304 = scalar_select %p303, %s300, 3
      %s305 = smul.addr %s302, 4
      %s306 = sadd.s32 %s304, %s305
      %s307 = smul.addr %s306, 4
      %s308 = scalar_lea.vmem %s1, %s307
      %s309 = sadd.s32 %s21, 1
      %s310 = smul.u32 %s309, 2
      %p311 = scmp.lt.s32.totalorder %s22, 0
      %s312 = scalar_select %p311, %s22, 0
      %s313 = smul.addr %s312, 4
      %s314 = scalar_lea.vmem %s2, %s313
      %p315 = scmp.lt.s32.totalorder %s20, 1
      %s316 = scalar_select %p315, %s20, 1
      %s317 = smul.addr %s316, 4
      %s318 = scalar_lea.vmem %s3, %s317
      %s319 = smul.u32 2, %s21
      %p320 = scmp.lt.s32.totalorder %s20, 1
      %s321 = scalar_select %p320, %s20, 1
      %p322 = scmp.lt.s32.totalorder %s22, 0
      %s323 = scalar_select %p322, %s22, 0
      %p324 = scmp.lt.s32.totalorder %s319, 1
      %s325 = scalar_select %p324, %s319, 1
      %s326 = smul.addr %s323, 2
      %s327 = sadd.s32 %s325, %s326
      %s328 = smul.addr %s321, 2
      %s329 = sadd.s32 %s327, %s328
      %s330 = smul.addr %s329, 4
      %s331 = scalar_lea.vmem %s4, %s330
      %s332 = smul.u32 2, %s21
      %v333 = vld [vmem:[%s297] sm:$0xff]
      %v334 = vld [vmem:[%s318] sm:$0xf]
      %v335 = vmax.f32 %v333, 0.0
      %337 = vset.pattern.permute.xlu0 0
      %338 = vperm.xlu0 %337, %v334
      %v339 = vpop.permute.xlu0 %338
      %v341 = vunpack.c.l.s4 839922192
      %v342 = vunpack.c.0.s8 %v341
      %v343 = vperm.slane %v339, %v342
      %v345 = vmul.f32 %v335, %v343
      %v346 = vld [vmem:[%s314] sm:$0xf]
      %348 = vst [vmem:[#allocation1] ss:$2 sm:$0xff] %v345
      %v349 = vld.sshfl [vmem:[#allocation1] sm:$0xff pattern:$0x75316420]
      %v350 = vld.sshfl [vmem:[#allocation1 + $0x8] sm:$0xff pattern:$0x75316420]
      %vm351 = vcmask 31744
      %v353 = vsel %vm351, %v346, 0
      %vm355 = vcmask 1043456
      %v356 = vsel %vm355, %v349, 0
      %v358 = vsel %vm355, %v350, 0
      %360 = vmatpush.msra.mxu0 0.0
      %361 = vmatpush.msra.mxu0 0.0
      %362 = vmatpush.msra.mxu0 0.0
      %363 = vmatpush.msra.mxu0 0.0
      %364 = vmatpush.msra.mxu0 0.0
      %365 = vmatpush.msra.mxu0 0.0
      %366 = vmatpush.msra.mxu0 0.0
      %367 = vmatpush.msra.mxu0 0.0
      %368 = vmatpush.msra.mxu0 0.0
      %369 = vmatpush.msra.mxu0 0.0
      %370 = vmatpush.msra.mxu0 0.0
      %371 = vmatpush.msra.mxu0 0.0
      %372 = vmatpush.msra.mxu0 0.0
      %373 = vmatpush.msra.mxu0 0.0
      %374 = vmatpush.msra.mxu0 0.0
      %375 = vmatpush.msra.mxu0 %v356
      %376 = vmatmul.f32.gmra.mxu0 %v353
      %v377 = vpop.f32.mrf.mxu0
      %v378 = vadd.f32 0.0, %v377
      %379 = vdwg.mxu0
      %380 = vmatpush.msra.mxu0 0.0
      %381 = vmatpush.msra.mxu0 0.0
      %382 = vmatpush.msra.mxu0 0.0
      %383 = vmatpush.msra.mxu0 0.0
      %384 = vmatpush.msra.mxu0 0.0
      %385 = vmatpush.msra.mxu0 0.0
      %386 = vmatpush.msra.mxu0 0.0
      %387 = vmatpush.msra.mxu0 0.0
      %388 = vmatpush.msra.mxu0 0.0
      %389 = vmatpush.msra.mxu0 0.0
      %390 = vmatpush.msra.mxu0 0.0
      %391 = vmatpush.msra.mxu0 0.0
      %392 = vmatpush.msra.mxu0 0.0
      %393 = vmatpush.msra.mxu0 0.0
      %394 = vmatpush.msra.mxu0 0.0
      %395 = vmatpush.msra.mxu0 %v358
      %396 = vmatmul.f32.gmra.mxu0 %v353
      %v397 = vpop.f32.mrf.mxu0
      %v398 = vadd.f32 0.0, %v397
      %399 = vdwg.mxu0
      %v402 = vrot.slane %v398, 4
      %v403 = vsel %vm355, %v378, %v402
      %405 = vst [vmem:[%s331] sm:$0xff] %v403
      %s406 = smul.u32 2, %s21
      %p407 = scmp.lt.s32.totalorder %s20, 1
      %s408 = scalar_select %p407, %s20, 1
      %p409 = scmp.lt.s32.totalorder %s22, 0
      %s410 = scalar_select %p409, %s22, 0
      %p411 = scmp.lt.s32.totalorder %s406, 1
      %s412 = scalar_select %p411, %s406, 1
      %s413 = smul.addr %s410, 2
      %s414 = sadd.s32 %s412, %s413
      %s415 = smul.addr %s408, 2
      %s416 = sadd.s32 %s414, %s415
      %s417 = smul.addr %s416, 4
      %s418 = scalar_lea.vmem %s4, %s417
      // Predicated region
      $region37: #{unet_down_conv_forward.10} parent=35 // pred_check
        %p419 = pneg %p168
      $region38: #{unet_down_conv_forward.10} parent=35 // pred_check_branch
        %421 = sbr.rel (%p419) target = $region40
      $region39: #{unet_down_conv_forward.10} parent=35 // pred_region
        %s422 = smul.u32 2, %s21
      $region40: #{unet_down_conv_forward.10} parent=35 // pred_fallthru
        _
    $region36: #{unet_down_conv_forward.10} parent=5 // pred_fallthru
      _
    %p423 = scmp.le.s32.totalorder 2, %s10
    // Predicated region
    $region41: #{unet_down_conv_forward.10} parent=5 // pred_check
      %p424 = pneg %p423
    $region42: #{unet_down_conv_forward.10} parent=5 // pred_check_branch
      %426 = sbr.rel (%p424) target = $region44
    $region43: #{unet_down_conv_forward.10} parent=5 // pred_region
      %s427 = ssub.s32 %s10, 2
      // Predicated region
      $region45: #{unet_down_conv_forward.10} parent=43 // pred_check
        %p428 = pneg %p174
      $region46: #{unet_down_conv_forward.10} parent=43 // pred_check_branch
        %430 = sbr.rel (%p428) target = $region48
      $region47: #{unet_down_conv_forward.10} parent=43 // pred_region
        %s431 = smul.u32 2, %s24
        %p432 = scmp.lt.s32.totalorder %s23, 1
        %s433 = scalar_select %p432, %s23, 1
        %p434 = scmp.lt.s32.totalorder %s25, 0
        %s435 = scalar_select %p434, %s25, 0
        %p436 = scmp.lt.s32.totalorder %s431, 1
        %s437 = scalar_select %p436, %s431, 1
        %s438 = smul.addr %s435, 2
        %s439 = sadd.s32 %s437, %s438
        %s440 = smul.addr %s433, 2
        %s441 = sadd.s32 %s439, %s440
        %s442 = smul.addr %s441, 4
        %s443 = scalar_lea.vmem %s4, %s442
      $region48: #{unet_down_conv_forward.10} parent=43 // pred_fallthru
        _
    $region44: #{unet_down_conv_forward.10} parent=5 // pred_fallthru
      _
  $region6: #{unet_down_conv_forward.10} parent=0 // loop_footer
    %s14 = sadd.s32 1, %s10
  $region7: #{unet_down_conv_forward.10} parent=0 // loop_footer_branch
    %9 = sbr.rel target = $region3
  $region8: #{unet_down_conv_forward.10} parent=0 // loop_exit
    _

// kernel: unet_down_conv_forward.12
$region0: #{unet_down_conv_forward.12}
  #allocation0 [shape = 'u32[]', space=smem, size = 0x4, offset = 0x4, fixed_abs, tag = 'smem constant byte address 0x4 - core index']
  #allocation1 [shape = 'u32[72,128]{1,0:T(1,128)}', space=vmem, size = 0x9000, scoped, tag = 'internal scratch']
  %s0 = inlined_call_operand.vmem [shape: f32[2,4,4,256], index: 0, kind: input, shape index: {}, may-alias: {0,1}]
  %s1 = inlined_call_operand.vmem [shape: f32[2,4,4,256], index: 1, kind: input, shape index: {}, may-alias: {0,1}]
  %s2 = inlined_call_operand.vmem [shape: f32[4,36], index: 2, kind: input, shape index: {}]
  %s3 = inlined_call_operand.vmem [shape: f32[2,4,1], index: 3, kind: input, shape index: {}]
  %s4 = inlined_call_operand.vmem [shape: f32[2,4,128], index: 4, kind: output, shape index: {}]
  %s5 = sld [smem:[#allocation0]]
  $region131: #{unet_down_conv_forward.12} parent=0
    _
  %s7 = ssub.s32 1, %s5
  %s8 = scalar_select 0, %s7, %s5
  $region1: #{unet_down_conv_forward.12} parent=0
    #allocation2 [shape = 'u8[16384]{0}', space=vmem, size = 0x4000, scoped, tag = 'input window, operand 0']
    #allocation3 [shape = 'u8[16384]{0}', space=vmem, size = 0x4000, scoped, tag = 'input window, operand 1']
    loop: start=0, step=1, limit=4
    $region2: #{unet_down_conv_forward.12} parent=1 // loop_pre_header
      _
    $region3: #{unet_down_conv_forward.12} parent=1 // loop_header
      %s10 = sphi 0, %s14
      %p11 = scmp.ge.s32.totalorder %s10, 4
      %s17 = sphi 0, %s36
      %s18 = sphi 0, %s32
      %s19 = sphi 0, %s28
      %s20 = sphi 0, %s17
      %s21 = sphi 0, %s18
      %s22 = sphi 0, %s19
      %s23 = sphi 0, %s20
      %s24 = sphi 0, %s21
      %s25 = sphi 0, %s22
      %s41 = sphi 0, %s43
      %s44 = sphi 0, %s41
      %s45 = sphi 0, %s44
      %s61 = sphi 0, %s45
      %s71 = sphi 0, %s73
      %s74 = sphi 0, %s71
      %s75 = sphi 0, %s74
      %s91 = sphi 0, %s75
      %s97 = sphi 0, %s99
      %s100 = sphi 0, %s97
      %s101 = sphi 0, %s100
      %s117 = sphi 0, %s101
      %s123 = sphi 0, %s125
      %s126 = sphi 0, %s123
      %s127 = sphi 0, %s126
      %s143 = sphi 0, %s127
      %s153 = sphi 0, %s155
      %s156 = sphi 0, %s153
      %s157 = sphi 0, %s156
      %s173 = sphi 0, %s157
    $region4: #{unet_down_conv_forward.12} parent=1 // loop_header_branch
      %13 = sbr.rel (%p11) target = $region8
    $region5: #{unet_down_conv_forward.12} parent=1 // loop_body
      %s15 = ssub.s32 %s10, 1
      %s16 = ssub.s32 %s10, 2
      %s26 = sadd.s32 1, %s19
      %p27 = scmp.ge.s32.totalorder %s26, 1
      %s28 = scalar_select %p27, 0, %s26
      %s29 = sadd.s32 1, %s18
      %s30 = scalar_select %p27, %s29, %s18
      %p31 = scmp.ge.s32.totalorder %s30, 1
      %s32 = scalar_select %p31, 0, %s30
      %s33 = sadd.s32 1, %s17
      %s34 = scalar_select %p31, %s33, %s17
      %p35 = scmp.ge.s32.totalorder %s34, 2
      %s36 = scalar_select %p35, 0, %s34
      %s37 = ssub.s32 %s17, %s36
      %s38 = ssub.s32 %s18, %s32
      %s39 = sor.u32 %s37, %s38
      %p40 = scmp.eq.s32.totalorder %s39, 0
      %s42 = sadd.s32 %s41, 1
      %s43 = scalar_select %p40, %s41, %s42
      %p46 = pneg %p40
      %p47 = scmp.eq.s32.totalorder %s10, 1
      %p48 = por %p46, %p47
      %p49 = scmp.ne.s32.totalorder %s41, %s44
      %p50 = scmp.eq.s32.totalorder %s10, 0
      %p51 = por %p49, %p50
      %p52 = scmp.ne.s32.totalorder %s41, %s44
      %p53 = scmp.eq.s32.totalorder %s15, 1
      %p54 = por %p52, %p53
      %p55 = scmp.ne.s32.totalorder %s44, %s45
      %p56 = scmp.eq.s32.totalorder %s15, 0
      %p57 = por %p55, %p56
      %p58 = scmp.ne.s32.totalorder %s44, %s45
      %p59 = scmp.eq.s32.totalorder %s16, 1
      %p60 = por %p58, %p59
      %p62 = scmp.ne.s32.totalorder %s45, %s61
      %p63 = scmp.eq.s32.totalorder %s16, 0
      %p64 = por %p62, %p63
      %s65 = sadd.s32 %s18, 1
      %s66 = sadd.s32 %s32, 1
      %s67 = ssub.s32 %s17, %s36
      %s68 = ssub.s32 %s65, %s66
      %s69 = sor.u32 %s67, %s68
      %p70 = scmp.eq.s32.totalorder %s69, 0
      %s72 = sadd.s32 %s71, 1
      %s73 = scalar_select %p70, %s71, %s72
      %p76 = pneg %p70
      %p77 = scmp.eq.s32.totalorder %s10, 1
      %p78 = por %p76, %p77
      %p79 = scmp.ne.s32.totalorder %s71, %s74
      %p80 = scmp.eq.s32.totalorder %s10, 0
      %p81 = por %p79, %p80
      %p82 = scmp.ne.s32.totalorder %s71, %s74
      %p83 = scmp.eq.s32.totalorder %s15, 1
      %p84 = por %p82, %p83
      %p85 = scmp.ne.s32.totalorder %s74, %s75
      %p86 = scmp.eq.s32.totalorder %s15, 0
      %p87 = por %p85, %p86
      %p88 = scmp.ne.s32.totalorder %s74, %s75
      %p89 = scmp.eq.s32.totalorder %s16, 1
      %p90 = por %p88, %p89
      %p92 = scmp.ne.s32.totalorder %s75, %s91
      %p93 = scmp.eq.s32.totalorder %s16, 0
      %p94 = por %p92, %p93
      %s95 = ssub.s32 %s19, %s28
      %p96 = scmp.eq.s32.totalorder %s95, 0
      %s98 = sadd.s32 %s97, 1
      %s99 = scalar_select %p96, %s97, %s98
      %p102 = pneg %p96
      %p103 = scmp.eq.s32.totalorder %s10, 1
      %p104 = por %p102, %p103
      %p105 = scmp.ne.s32.totalorder %s97, %s100
      %p106 = scmp.eq.s32.totalorder %s10, 0
      %p107 = por %p105, %p106
      %p108 = scmp.ne.s32.totalorder %s97, %s100
      %p109 = scmp.eq.s32.totalorder %s15, 1
      %p110 = por %p108, %p109
      %p111 = scmp.ne.s32.totalorder %s100, %s101
      %p112 = scmp.eq.s32.totalorder %s15, 0
      %p113 = por %p111, %p112
      %p114 = scmp.ne.s32.totalorder %s100, %s101
      %p115 = scmp.eq.s32.totalorder %s16, 1
      %p116 = por %p114, %p115
      %p118 = scmp.ne.s32.totalorder %s101, %s117
      %p119 = scmp.eq.s32.totalorder %s16, 0
      %p120 = por %p118, %p119
      %s121 = ssub.s32 %s17, %s36
      %p122 = scmp.eq.s32.totalorder %s121, 0
      %s124 = sadd.s32 %s123, 1
      %s125 = scalar_select %p122, %s123, %s124
      %p128 = pneg %p122
      %p129 = scmp.eq.s32.totalorder %s10, 1
      %p130 = por %p128, %p129
      %p131 = scmp.ne.s32.totalorder %s123, %s126
      %p132 = scmp.eq.s32.totalorder %s10, 0
      %p133 = por %p131, %p132
      %p134 = scmp.ne.s32.totalorder %s123, %s126
      %p135 = scmp.eq.s32.totalorder %s15, 1
      %p136 = por %p134, %p135
      %p137 = scmp.ne.s32.totalorder %s126, %s127
      %p138 = scmp.eq.s32.totalorder %s15, 0
      %p139 = por %p137, %p138
      %p140 = scmp.ne.s32.totalorder %s126, %s127
      %p141 = scmp.eq.s32.totalorder %s16, 1
      %p142 = por %p140, %p141
      %p144 = scmp.ne.s32.totalorder %s127, %s143
      %p145 = scmp.eq.s32.totalorder %s16, 0
      %p146 = por %p144, %p145
      %s147 = ssub.s32 %s17, %s36
      %s148 = ssub.s32 %s19, %s28
      %s149 = sor.u32 %s147, %s148
      %s150 = ssub.s32 %s18, %s32
      %s151 = sor.u32 %s149, %s150
      %p152 = scmp.eq.s32.totalorder %s151, 0
      %s154 = sadd.s32 %s153, 1
      %s155 = scalar_select %p152, %s153, %s154
      %p158 = pneg %p152
      %p159 = scmp.eq.s32.totalorder %s10, 1
      %p160 = por %p158, %p159
      %p161 = scmp.ne.s32.totalorder %s153, %s156
      %p162 = scmp.eq.s32.totalorder %s10, 0
      %p163 = por %p161, %p162
      %p164 = scmp.ne.s32.totalorder %s153, %s156
      %p165 = scmp.eq.s32.totalorder %s15, 1
      %p166 = por %p164, %p165
      %p167 = scmp.ne.s32.totalorder %s156, %s157
      %p168 = scmp.eq.s32.totalorder %s15, 0
      %p169 = por %p167, %p168
      %p170 = scmp.ne.s32.totalorder %s156, %s157
      %p171 = scmp.eq.s32.totalorder %s16, 1
      %p172 = por %p170, %p171
      %p174 = scmp.ne.s32.totalorder %s157, %s173
      %p175 = scmp.eq.s32.totalorder %s16, 0
      %p176 = por %p174, %p175
      %p177 = scmp.le.s32.totalorder 1, %s10
      %p178 = scmp.lt.s32.totalorder %s10, 3
      %p179 = pnand %p177, %p178
      %p180 = pneg %p179
      // Predicated region
      $region9: #{unet_down_conv_forward.12} parent=5 // pred_check
        _
      $region10: #{unet_down_conv_forward.12} parent=5 // pred_check_branch
        %182 = sbr.rel (%p179) target = $region12
      $region11: #{unet_down_conv_forward.12} parent=5 // pred_region
        %s183 = ssub.s32 %s10, 1
        // Predicated region
        $region13: #{unet_down_conv_forward.12} parent=11 // pred_check
          %p184 = pneg %p113
        $region14: #{unet_down_conv_forward.12} parent=11 // pred_check_branch
          %186 = sbr.rel (%p184) target = $region16
        $region15: #{unet_down_conv_forward.12} parent=11 // pred_region
          %p187 = scmp.lt.s32.totalorder %s22, 0
          %s188 = scalar_select %p187, %s22, 0
          %s189 = smul.addr %s188, 4
          %s190 = scalar_lea.vmem %s2, %s189
        $region16: #{unet_down_conv_forward.12} parent=11 // pred_fallthru
          _
      $region12: #{unet_down_conv_forward.12} parent=5 // pred_fallthru
        _
      %p191 = scmp.lt.s32.totalorder %s10, 2
      // Predicated region
      $region17: #{unet_down_conv_forward.12} parent=5 // pred_check
        %p192 = pneg %p191
      $region18: #{unet_down_conv_forward.12} parent=5 // pred_check_branch
        %194 = sbr.rel (%p192) target = $region20
      $region19: #{unet_down_conv_forward.12} parent=5 // pred_region
        // Predicated region
        $region21: #{unet_down_conv_forward.12} parent=19 // pred_check
          %p195 = pneg %p51
        $region22: #{unet_down_conv_forward.12} parent=19 // pred_check_branch
          %197 = sbr.rel (%p195) target = $region24
        $region23: #{unet_down_conv_forward.12} parent=19 // pred_region
          %s198 = sand.u32 %s41, 1
          %s199 = sand.u32 %s41, 1
          %s200 = smul.addr %s199, 16
          %s201 = scalar_lea.vmem [#allocation2], %s200
          %s202 = smul.addr %s17, 8
          %s203 = sadd.s32 %s18, %s202
          %s204 = smul.addr %s203, 4
          %s205 = scalar_lea.vmem %s0, %s204
          // Predicated region
          $region25: #{unet_down_conv_forward.12} parent=23 // pred_check
            _
          $region26: #{unet_down_conv_forward.12} parent=23 // pred_check_branch
            %207 = sbr.rel (0) target = $region28
          $region27: #{unet_down_conv_forward.12} parent=23 // pred_region
            // Predicated region
            $region29: #{unet_down_conv_forward.12} parent=27 // pred_check
              _
            $region30: #{unet_down_conv_forward.12} parent=27 // pred_check_branch
              %209 = sbr.rel target = $region32
            $region31: #{unet_down_conv_forward.12} parent=27 // pred_region
              // Predicated region
              $region44: #{unet_down_conv_forward.12} parent=31 // pred_check
                _
              $region45: #{unet_down_conv_forward.12} parent=31 // pred_check_branch
                %231 = sbr.rel (0) target = $region47
              $region46: #{unet_down_conv_forward.12} parent=31 // pred_region
                loop: start=0, step=1, limit=1
                $region48: #{unet_down_conv_forward.12} parent=46 // loop_pre_header
                  _
                $region49: #{unet_down_conv_forward.12} parent=46 // loop_header
                  %s233 = sphi 0, %s237
                  %p234 = scmp.ge.s32.totalorder %s233, 1
                  %s238 = sphi %s205, %s205
                  %s239 = sphi %s201, %s201
                $region50: #{unet_down_conv_forward.12} parent=46 // loop_header_branch
                  %236 = sbr.rel (%p234) target = $region54
                $region51: #{unet_down_conv_forward.12} parent=46 // loop_body
                  _
                $region52: #{unet_down_conv_forward.12} parent=46 // loop_footer
                  %s237 = sadd.s32 1, %s233
                $region53: #{unet_down_conv_forward.12} parent=46 // loop_footer_branch
                  %232 = sbr.rel target = $region49
                $region54: #{unet_down_conv_forward.12} parent=46 // loop_exit
                  _
                %s241 = ssub.s32 16, 1
                loop: start=0, step=1, limit=1
                $region55: #{unet_down_conv_forward.12} parent=46 // loop_pre_header
                  _
                $region56: #{unet_down_conv_forward.12} parent=46 // loop_header
                  %s243 = sphi 0, %s247
                  %p244 = scmp.ge.s32.totalorder %s243, 1
                  %s248 = sphi %s205, %s205
                  %s249 = sphi %s201, %s201
                $region57: #{unet_down_conv_forward.12} parent=46 // loop_header_branch
                  %246 = sbr.rel (%p244) target = $region61
                $region58: #{unet_down_conv_forward.12} parent=46 // loop_body
                  %v250 = vld [vmem:[%s248] sm:%s241]
                  %251 = vst [vmem:[%s249] sm:%s241] %v250
                  %v252 = vld [vmem:[%s248 + $0x8] sm:%s241]
                  %253 = vst [vmem:[%s249 + $0x4] sm:%s241] %v252
                  %v254 = vld [vmem:[%s248 + $0x10] sm:%s241]
                  %255 = vst [vmem:[%s249 + $0x8] sm:%s241] %v254
                  %v256 = vld [vmem:[%s248 + $0x18] sm:%s241]
                  %257 = vst [vmem:[%s249 + $0xc] sm:%s241] %v256
                $region59: #{unet_down_conv_forward.12} parent=46 // loop_footer
                  %s247 = sadd.s32 1, %s243
                $region60: #{unet_down_conv_forward.12} parent=46 // loop_footer_branch
                  %242 = sbr.rel target = $region56
                $region61: #{unet_down_conv_forward.12} parent=46 // loop_exit
                  _
              $region47: #{unet_down_conv_forward.12} parent=31 // pred_fallthru
                _
            $region32: #{unet_down_conv_forward.12} parent=27 // pred_fallthru
              _
            // Predicated region
            $region33: #{unet_down_conv_forward.12} parent=27 // pred_check
              _
            $region34: #{unet_down_conv_forward.12} parent=27 // pred_check_branch
              %211 = sbr.rel (0) target = $region36
            $region35: #{unet_down_conv_forward.12} parent=27 // pred_region
              %s213 = ssub.s32 16, 1
              loop: start=0, step=1, limit=1
              $region37: #{unet_down_conv_forward.12} parent=35 // loop_pre_header
                _
              $region38: #{unet_down_conv_forward.12} parent=35 // loop_header
                %s215 = sphi 0, %s219
                %p216 = scmp.ge.s32.totalorder %s215, 1
                %s220 = sphi %s205, %s205
                %s221 = sphi %s201, %s201
              $region39: #{unet_down_conv_forward.12} parent=35 // loop_header_branch
                %218 = sbr.rel (%p216) target = $region43
              $region40: #{unet_down_conv_forward.12} parent=35 // loop_body
                %v222 = vld [vmem:[%s220] sm:%s213]
                %223 = vst [vmem:[%s221] sm:%s213] %v222
                %v224 = vld [vmem:[%s220 + $0x8] sm:%s213]
                %225 = vst [vmem:[%s221 + $0x4] sm:%s213] %v224
                %v226 = vld [vmem:[%s220 + $0x10] sm:%s213]
                %227 = vst [vmem:[%s221 + $0x8] sm:%s213] %v226
                %v228 = vld [vmem:[%s220 + $0x18] sm:%s213]
                %229 = vst [vmem:[%s221 + $0xc] sm:%s213] %v228
              $region41: #{unet_down_conv_forward.12} parent=35 // loop_footer
                %s219 = sadd.s32 1, %s215
              $region42: #{unet_down_conv_forward.12} parent=35 // loop_footer_branch
                %214 = sbr.rel target = $region38
              $region43: #{unet_down_conv_forward.12} parent=35 // loop_exit
                _
            $region36: #{unet_down_conv_forward.12} parent=27 // pred_fallthru
              _
          $region28: #{unet_down_conv_forward.12} parent=23 // pred_fallthru
            _
          %258 = vnop
        $region24: #{unet_down_conv_forward.12} parent=19 // pred_fallthru
          _
        // Predicated region
        $region62: #{unet_down_conv_forward.12} parent=19 // pred_check
          %p259 = pneg %p81
        $region63: #{unet_down_conv_forward.12} parent=19 // pred_check_branch
          %261 = sbr.rel (%p259) target = $region65
        $region64: #{unet_down_conv_forward.12} parent=19 // pred_region
          %s262 = sand.u32 %s71, 1
          %s263 = sand.u32 %s71, 1
          %s264 = smul.addr %s263, 16
          %s265 = scalar_lea.vmem [#allocation3], %s264
          %s266 = sadd.s32 %s18, 1
          %s267 = smul.addr %s17, 8
          %s268 = sadd.s32 %s266, %s267
          %s269 = smul.addr %s268, 4
          %s270 = scalar_lea.vmem %s1, %s269
          // Predicated region
          $region66: #{unet_down_conv_forward.12} parent=64 // pred_check
            _
          $region67: #{unet_down_conv_forward.12} parent=64 // pred_check_branch
            %272 = sbr.rel (0) target = $region69
          $region68: #{unet_down_conv_forward.12} parent=64 // pred_region
            // Predicated region
            $region70: #{unet_down_conv_forward.12} parent=68 // pred_check
              _
            $region71: #{unet_down_conv_forward.12} parent=68 // pred_check_branch
              %274 = sbr.rel target = $region73
            $region72: #{unet_down_conv_forward.12} parent=68 // pred_region
              // Predicated region
              $region85: #{unet_down_conv_forward.12} parent=72 // pred_check
                _
              $region86: #{unet_down_conv_forward.12} parent=72 // pred_check_branch
                %296 = sbr.rel (0) target = $region88
              $region87: #{unet_down_conv_forward.12} parent=72 // pred_region
                loop: start=0, step=1, limit=1
                $region89: #{unet_down_conv_forward.12} parent=87 // loop_pre_header
                  _
                $region90: #{unet_down_conv_forward.12} parent=87 // loop_header
                  %s298 = sphi 0, %s302
                  %p299 = scmp.ge.s32.totalorder %s298, 1
                  %s303 = sphi %s270, %s270
                  %s304 = sphi %s265, %s265
                $region91: #{unet_down_conv_forward.12} parent=87 // loop_header_branch
                  %301 = sbr.rel (%p299) target = $region95
                $region92: #{unet_down_conv_forward.12} parent=87 // loop_body
                  _
                $region93: #{unet_down_conv_forward.12} parent=87 // loop_footer
                  %s302 = sadd.s32 1, %s298
                $region94: #{unet_down_conv_forward.12} parent=87 // loop_footer_branch
                  %297 = sbr.rel target = $region90
                $region95: #{unet_down_conv_forward.12} parent=87 // loop_exit
                  _
                %s306 = ssub.s32 16, 1
                loop: start=0, step=1, limit=1
                $region96: #{unet_down_conv_forward.12} parent=87 // loop_pre_header
                  _
                $region97: #{unet_down_conv_forward.12} parent=87 // loop_header
                  %s308 = sphi 0, %s312
                  %p309 = scmp.ge.s32.totalorder %s308, 1
                  %s313 = sphi %s270, %s270
                  %s314 = sphi %s265, %s265
                $region98: #{unet_down_conv_forward.12} parent=87 // loop_header_branch
                  %311 = sbr.rel (%p309) target = $region102
                $region99: #{unet_down_conv_forward.12} parent=87 // loop_body
                  %v315 = vld [vmem:[%s313] sm:%s306]
                  %316 = vst [vmem:[%s314] sm:%s306] %v315
                  %v317 = vld [vmem:[%s313 + $0x8] sm:%s306]
                  %318 = vst [vmem:[%s314 + $0x4] sm:%s306] %v317
                  %v319 = vld [vmem:[%s313 + $0x10] sm:%s306]
                  %320 = vst [vmem:[%s314 + $0x8] sm:%s306] %v319
                  %v321 = vld [vmem:[%s313 + $0x18] sm:%s306]
                  %322 = vst [vmem:[%s314 + $0xc] sm:%s306] %v321
                $region100: #{unet_down_conv_forward.12} parent=87 // loop_footer
                  %s312 = sadd.s32 1, %s308
                $region101: #{unet_down_conv_forward.12} parent=87 // loop_footer_branch
                  %307 = sbr.rel target = $region97
                $region102: #{unet_down_conv_forward.12} parent=87 // loop_exit
                  _
              $region88: #{unet_down_conv_forward.12} parent=72 // pred_fallthru
                _
            $region73: #{unet_down_conv_forward.12} parent=68 // pred_fallthru
              _
            // Predicated region
            $region74: #{unet_down_conv_forward.12} parent=68 // pred_check
              _
            $region75: #{unet_down_conv_forward.12} parent=68 // pred_check_branch
              %276 = sbr.rel (0) target = $region77
            $region76: #{unet_down_conv_forward.12} parent=68 // pred_region
              %s278 = ssub.s32 16, 1
              loop: start=0, step=1, limit=1
              $region78: #{unet_down_conv_forward.12} parent=76 // loop_pre_header
                _
              $region79: #{unet_down_conv_forward.12} parent=76 // loop_header
                %s280 = sphi 0, %s284
                %p281 = scmp.ge.s32.totalorder %s280, 1
                %s285 = sphi %s270, %s270
                %s286 = sphi %s265, %s265
              $region80: #{unet_down_conv_forward.12} parent=76 // loop_header_branch
                %283 = sbr.rel (%p281) target = $region84
              $region81: #{unet_down_conv_forward.12} parent=76 // loop_body
                %v287 = vld [vmem:[%s285] sm:%s278]
                %288 = vst [vmem:[%s286] sm:%s278] %v287
                %v289 = vld [vmem:[%s285 + $0x8] sm:%s278]
                %290 = vst [vmem:[%s286 + $0x4] sm:%s278] %v289
                %v291 = vld [vmem:[%s285 + $0x10] sm:%s278]
                %292 = vst [vmem:[%s286 + $0x8] sm:%s278] %v291
                %v293 = vld [vmem:[%s285 + $0x18] sm:%s278]
                %294 = vst [vmem:[%s286 + $0xc] sm:%s278] %v293
              $region82: #{unet_down_conv_forward.12} parent=76 // loop_footer
                %s284 = sadd.s32 1, %s280
              $region83: #{unet_down_conv_forward.12} parent=76 // loop_footer_branch
                %279 = sbr.rel target = $region79
              $region84: #{unet_down_conv_forward.12} parent=76 // loop_exit
                _
            $region77: #{unet_down_conv_forward.12} parent=68 // pred_fallthru
              _
          $region69: #{unet_down_conv_forward.12} parent=64 // pred_fallthru
            _
          %323 = vnop
        $region65: #{unet_down_conv_forward.12} parent=19 // pred_fallthru
          _
        // Predicated region
        $region103: #{unet_down_conv_forward.12} parent=19 // pred_check
          %p324 = pneg %p133
        $region104: #{unet_down_conv_forward.12} parent=19 // pred_check_branch
          %326 = sbr.rel (%p324) target = $region106
        $region105: #{unet_down_conv_forward.12} parent=19 // pred_region
          %p327 = scmp.lt.s32.totalorder %s17, 1
          %s328 = scalar_select %p327, %s17, 1
          %s329 = smul.addr %s328, 4
          %s330 = scalar_lea.vmem %s3, %s329
        $region106: #{unet_down_conv_forward.12} parent=19 // pred_fallthru
          _
      $region20: #{unet_down_conv_forward.12} parent=5 // pred_fallthru
        _
      %p331 = scmp.le.s32.totalorder 1, %s10
      %p332 = scmp.lt.s32.totalorder %s10, 3
      %p333 = pnand %p331, %p332
      %p334 = pneg %p333
      // Predicated region
      $region107: #{unet_down_conv_forward.12} parent=5 // pred_check
        _
      $region108: #{unet_down_conv_forward.12} parent=5 // pred_check_branch
        %336 = sbr.rel (%p333) target = $region110
      $region109: #{unet_down_conv_forward.12} parent=5 // pred_region
        %s337 = ssub.s32 %s10, 1
        %s338 = sand.u32 %s44, 1
        %s339 = sand.u32 %s44, 1
        %s340 = smul.addr %s339, 16
        %s341 = scalar_lea.vmem [#allocation2], %s340
        // Predicated region
        $region111: #{unet_down_conv_forward.12} parent=109 // pred_check
          %p342 = pneg %p57
        $region112: #{unet_down_conv_forward.12} parent=109 // pred_check_branch
          %344 = sbr.rel (%p342) target = $region114
        $region113: #{unet_down_conv_forward.12} parent=109 // pred_region
          _
        $region114: #{unet_down_conv_forward.12} parent=109 // pred_fallthru
          _
        %s345 = sand.u32 %s74, 1
        %s346 = sand.u32 %s74, 1
        %s347 = smul.addr %s346, 16
        %s348 = scalar_lea.vmem [#allocation3], %s347
        // Predicated region
        $region115: #{unet_down_conv_forward.12} parent=109 // pred_check
          %p349 = pneg %p87
        $region116: #{unet_down_conv_forward.12} parent=109 // pred_check_branch
          %351 = sbr.rel (%p349) target = $region118
        $region117: #{unet_down_conv_forward.12} parent=109 // pred_region
          _
        $region118: #{unet_down_conv_forward.12} parent=109 // pred_fallthru
          _
        %s352 = sand.u32 %s44, 1
        %s353 = sand.u32 %s44, 1
        %s354 = smul.addr %s353, 16
        %s355 = scalar_lea.vmem [#allocation2], %s354
        %p356 = pneg %p57
        %p357 = pneg %p54
        %s358 = sand.u32 %s74, 1
        %s359 = sand.u32 %s74, 1
        %s360 = smul.addr %s359, 16
        %s361 = scalar_lea.vmem [#allocation3], %s360
        %p362 = pneg %p87
        %p363 = pneg %p84
        %p364 = scmp.lt.s32.totalorder %s22, 0
        %s365 = scalar_select %p364, %s22, 0
        %s366 = smul.addr %s365, 4
        %s367 = scalar_lea.vmem %s2, %s366
        %p368 = pneg %p113
        %p369 = pneg %p110
        %p370 = scmp.lt.s32.totalorder %s20, 1
        %s371 = scalar_select %p370, %s20, 1
        %s372 = smul.addr %s371, 4
        %s373 = scalar_lea.vmem %s3, %s372
        %p374 = pneg %p139
        %p375 = pneg %p136
        %p376 = pneg %p169
        %p377 = pneg %p166
        %p378 = scmp.lt.s32.totalorder %s20, 1
        %s379 = scalar_select %p378, %s20, 1
        %p380 = scmp.lt.s32.totalorder %s22, 0
        %s381 = scalar_select %p380, %s22, 0
        %p382 = scmp.lt.s32.totalorder %s21, 0
        %s383 = scalar_select %p382, %s21, 0
        %s384 = sadd.s32 %s383, %s381
        %s385 = sadd.s32 %s384, %s379
        %s386 = smul.addr %s385, 4
        %s387 = scalar_lea.vmem %s4, %s386
        %s388 = sadd.s32 %s21, 1
        %p389 = scmp.lt.s32.totalorder %s22, 0
        %s390 = scalar_select %p389, %s22, 0
        %s391 = smul.addr %s390, 4
        %s392 = scalar_lea.vmem %s2, %s391
        %p393 = scmp.lt.s32.totalorder %s20, 1
        %s394 = scalar_select %p393, %s20, 1
        %s395 = smul.addr %s394, 4
        %s396 = scalar_lea.vmem %s3, %s395
        %p397 = scmp.lt.s32.totalorder %s20, 1
        %s398 = scalar_select %p397, %s20, 1
        %p399 = scmp.lt.s32.totalorder %s22, 0
        %s400 = scalar_select %p399, %s22, 0
        %p401 = scmp.lt.s32.totalorder %s21, 0
        %s402 = scalar_select %p401, %s21, 0
        %s403 = sadd.s32 %s402, %s400
        %s404 = sadd.s32 %s403, %s398
        %s405 = smul.addr %s404, 4
        %s406 = scalar_lea.vmem %s4, %s405
        %v407 = vld [vmem:[%s341] sm:$0xf]
        %v408 = vld [vmem:[%s341 + $0x4] sm:$0xf]
        %v409 = vld [vmem:[%s341 + $0x8] sm:$0xf]
        %v410 = vld [vmem:[%s341 + $0xc] sm:$0xf]
        %v411 = vld [vmem:[%s348] sm:$0xf]
        %v412 = vld [vmem:[%s348 + $0x4] sm:$0xf]
        %v413 = vld [vmem:[%s348 + $0x8] sm:$0xf]
        %v414 = vld [vmem:[%s396] sm:$0xf]
        %v415 = vmax.f32 %v407, 0.0
        %v416 = vmax.f32 %v408, 0.0
        %v417 = vmax.f32 %v409, 0.0
        %v418 = vmax.f32 %v410, 0.0
        %420 = vset.pattern.permute.xlu0 0
        %421 = vperm.xlu0 %420, %v414
        %v422 = vpop.permute.xlu0 %421
        %v424 = vmul.f32 %v415, %v422
        %v425 = vmul.f32 %v416, %v422
        %v426 = vmul.f32 %v417, %v422
        %v427 = vmul.f32 %v418, %v422
        %v428 = vmax.f32 %v411, 0.0
        %v429 = vmax.f32 %v412, 0.0
        %v430 = vmax.f32 %v413, 0.0
        %v431 = vmul.f32 %v428, %v422
        %v432 = vmul.f32 %v429, %v422
        %v433 = vmul.f32 %v430, %v422
        %435 = vrot.lane.b32.xlu0 %v424, 127
        %v436 = vpop.permute.xlu0 %435
        %439 = vrot.lane.b32.xlu0 %v431, 127
        %v440 = vpop.permute.xlu0 %439
        %vm442 = vcmask 1039360
        %v443 = vsel %vm442, %v436, %v440
        %445 = vrot.lane.b32.xlu0 %v426, 127
        %v446 = vpop.permute.xlu0 %445
        %449 = vrot.lane.b32.xlu0 %v433, 127
        %v450 = vpop.permute.xlu0 %449
        %v452 = vsel %vm442, %v446, %v450
        %453 = vrot.lane.b32.xlu0 %v424, 119
        %v454 = vpop.permute.xlu0 %453
        %456 = vrot.lane.b32.xlu0 %v431, 119
        %v457 = vpop.permute.xlu0 %456
        %vm459 = vcmask 973824
        %v460 = vsel %vm459, %v454, %v457
        %462 = vrot.lane.b32.xlu0 %v425, 119
        %v463 = vpop.permute.xlu0 %462
        %466 = vrot.lane.b32.xlu0 %v432, 119
        %v467 = vpop.permute.xlu0 %466
        %v469 = vsel %vm459, %v463, %v467
        %470 = vrot.lane.b32.xlu0 %v424, 118
        %v471 = vpop.permute.xlu0 %470
        %473 = vrot.lane.b32.xlu0 %v431, 118
        %v474 = vpop.permute.xlu0 %473
        %vm476 = vcmask 965632
        %v477 = vsel %vm476, %v471, %v474
        %v478 = vrot.slane %v425, 4
        %v480 = vrot.slane %v426, 4
        %v483 = vrot.slane %v452, 4
        %v486 = vrot.slane %v469, 4
        %vm488 = vcmask 1043456
        %v489 = vsel %vm488, %v424, %v478
        %v490 = vsel %vm488, %v443, %v480
        %v491 = vsel %vm488, %v427, %v483
        %v492 = vsel %vm488, %v460, %v486
        %v493 = vld [vmem:[%s392] sm:$0xf]
        %vm494 = vcmask 293888
        %v496 = vsel %vm494, %v493, 0
        %v499 = vsel %vm488, %v477, 0
        %501 = vmatpush.msra.mxu0 0.0
        %502 = vmatpush.msra.mxu0 0.0
        %503 = vmatpush.msra.mxu0 0.0
        %504 = vmatpush.msra.mxu0 0.0
        %505 = vmatpush.msra.mxu0 0.0
        %506 = vmatpush.msra.mxu0 0.0
        %507 = vmatpush.msra.mxu0 0.0
        %508 = vmatpush.msra.mxu0 0.0
        %509 = vmatpush.msra.mxu0 0.0
        %510 = vmatpush.msra.mxu0 0.0
        %511 = vmatpush.msra.mxu0 0.0
        %512 = vmatpush.msra.mxu0 %v499
        %513 = vmatpush.msra.mxu0 %v492
        %514 = vmatpush.msra.mxu0 %v491
        %515 = vmatpush.msra.mxu0 %v490
        %516 = vmatpush.msra.mxu0 %v489
        %517 = vmatmul.f32.gmra.mxu0 %v496
        %v518 = vpop.f32.mrf.mxu0
        %v519 = vadd.f32 0.0, %v518
        %520 = vdwg.mxu0
        %521 = vst [vmem:[%s406] sm:$0xf] %v519
        %p522 = scmp.lt.s32.totalorder %s20, 1
        %s523 = scalar_select %p522, %s20, 1
        %p524 = scmp.lt.s32.totalorder %s22, 0
        %s525 = scalar_select %p524, %s22, 0
        %p526 = scmp.lt.s32.totalorder %s21, 0
        %s527 = scalar_select %p526, %s21, 0
        %s528 = sadd.s32 %s527, %s525
        %s529 = sadd.s32 %s528, %s523
        %s530 = smul.addr %s529, 4
        %s531 = scalar_lea.vmem %s4, %s530
        // Predicated region
        $region119: #{unet_down_conv_forward.12} parent=109 // pred_check
          %p532 = pneg %p166
        $region120: #{unet_down_conv_forward.12} parent=109 // pred_check_branch
          %534 = sbr.rel (%p532) target = $region122
        $region121: #{unet_down_conv_forward.12} parent=109 // pred_region
          _
        $region122: #{unet_down_conv_forward.12} parent=109 // pred_fallthru
          _
      $region110: #{unet_down_conv_forward.12} parent=5 // pred_fallthru
        _
      %p535 = scmp.le.s32.totalorder 2, %s10
      // Predicated region
      $region123: #{unet_down_conv_forward.12} parent=5 // pred_check
        %p536 = pneg %p535
      $region124: #{unet_down_conv_forward.12} parent=5 // pred_check_branch
        %538 = sbr.rel (%p536) target = $region126
      $region125: #{unet_down_conv_forward.12} parent=5 // pred_region
        %s539 = ssub.s32 %s10, 2
        // Predicated region
        $region127: #{unet_down_conv_forward.12} parent=125 // pred_check
          %p540 = pneg %p172
        $region128: #{unet_down_conv_forward.12} parent=125 // pred_check_branch
          %542 = sbr.rel (%p540) target = $region130
        $region129: #{unet_down_conv_forward.12} parent=125 // pred_region
          %p543 = scmp.lt.s32.totalorder %s23, 1
          %s544 = scalar_select %p543, %s23, 1
          %p545 = scmp.lt.s32.totalorder %s25, 0
          %s546 = scalar_select %p545, %s25, 0
          %p547 = scmp.lt.s32.totalorder %s24, 0
          %s548 = scalar_select %p547, %s24, 0
          %s549 = sadd.s32 %s548, %s546
          %s550 = sadd.s32 %s549, %s544
          %s551 = smul.addr %s550, 4
          %s552 = scalar_lea.vmem %s4, %s551
        $region130: #{unet_down_conv_forward.12} parent=125 // pred_fallthru
          _
      $region126: #{unet_down_conv_forward.12} parent=5 // pred_fallthru
        _
    $region6: #{unet_down_conv_forward.12} parent=1 // loop_footer
      %s14 = sadd.s32 1, %s10
    $region7: #{unet_down_conv_forward.12} parent=1 // loop_footer_branch
      %9 = sbr.rel target = $region3
    $region8: #{unet_down_conv_forward.12} parent=1 // loop_exit
      _

// kernel: unet_down_conv_forward.13
$region0: #{unet_down_conv_forward.13}
  #allocation0 [shape = 'u32[]', space=smem, size = 0x4, offset = 0x4, fixed_abs, tag = 'smem constant byte address 0x4 - core index']
  #allocation1 [shape = 'u32[72,128]{1,0:T(1,128)}', space=vmem, size = 0x9000, scoped, tag = 'internal scratch']
  %s0 = inlined_call_operand.vmem [shape: f32[8,64], index: 0, kind: input, shape index: {}]
  %s1 = inlined_call_operand.vmem [shape: f32[8,2], index: 1, kind: output, shape index: {}]
  %s2 = sld [smem:[#allocation0]]
  $region14: #{unet_down_conv_forward.13} parent=0
    _
  %s4 = ssub.s32 1, %s2
  %s5 = scalar_select 0, %s4, %s2
  // Predicated region
  $region2: #{unet_down_conv_forward.13} parent=0 // pred_check
    _
  $region3: #{unet_down_conv_forward.13} parent=0 // pred_check_branch
    %7 = sbr.rel (0) target = $region5
  $region4: #{unet_down_conv_forward.13} parent=0 // pred_region
    _
  $region5: #{unet_down_conv_forward.13} parent=0 // pred_fallthru
    _
  %v8 = vld [vmem:[%s0] sm:$0xff]
  %vm9 = vcmask 523264
  %v10 = vsel %vm9, %v8, 0.0
  %11 = vadd.xlane.f32.xlu0 %v10
  %v12 = vpop.xlane.xlu0 %11
  %v13 = vmul.f32 %v8, %v8
  %v14 = vsel %vm9, %v13, 0.0
  %15 = vadd.xlane.f32.xlu0 %v14
  %v16 = vpop.xlane.xlu0 %15
  %vm17 = vcmask 7168
  %v18 = vsel %vm17, %v12, %v16
  %vm19 = vcmask 15360
  %20 = vst.msk [vmem:[%s1] sm:$0xff] %vm19, %v18
  // Predicated region
  $region6: #{unet_down_conv_forward.13} parent=0 // pred_check
    _
  $region7: #{unet_down_conv_forward.13} parent=0 // pred_check_branch
    %22 = sbr.rel (0) target = $region9
  $region8: #{unet_down_conv_forward.13} parent=0 // pred_region
    _
  $region9: #{unet_down_conv_forward.13} parent=0 // pred_fallthru
    _
  // Predicated region
  $region10: #{unet_down_conv_forward.13} parent=0 // pred_check
    _
  $region11: #{unet_down_conv_forward.13} parent=0 // pred_check_branch
    %24 = sbr.rel (0) target = $region13
  $region12: #{unet_down_conv_forward.13} parent=0 // pred_region
    _
  $region13: #{unet_down_conv_forward.13} parent=0 // pred_fallthru
    _

// kernel: unet_down_conv_forward.16
$region0: #{unet_down_conv_forward.16}
  #allocation0 [shape = 'u32[]', space=smem, size = 0x4, offset = 0x4, fixed_abs, tag = 'smem constant byte address 0x4 - core index']
  #allocation1 [shape = 'u32[72,128]{1,0:T(1,128)}', space=vmem, size = 0x9000, scoped, tag = 'internal scratch']
  %s0 = inlined_call_operand.vmem [shape: f32[16,64], index: 0, kind: input, shape index: {}]
  %s1 = inlined_call_operand.vmem [shape: f32[16,2], index: 1, kind: output, shape index: {}]
  %s2 = sld [smem:[#allocation0]]
  $region14: #{unet_down_conv_forward.16} parent=0
    _
  %s4 = ssub.s32 1, %s2
  %s5 = scalar_select 0, %s4, %s2
  // Predicated region
  $region2: #{unet_down_conv_forward.16} parent=0 // pred_check
    _
  $region3: #{unet_down_conv_forward.16} parent=0 // pred_check_branch
    %7 = sbr.rel (0) target = $region5
  $region4: #{unet_down_conv_forward.16} parent=0 // pred_region
    _
  $region5: #{unet_down_conv_forward.16} parent=0 // pred_fallthru
    _
  %v8 = vld [vmem:[%s0] sm:$0xff]
  %v9 = vld [vmem:[%s0 + $0x8] sm:$0xff]
  %vm10 = vcmask 523264
  %v11 = vsel %vm10, %v8, 0.0
  %12 = vadd.xlane.f32.xlu0 %v11
  %v13 = vpop.xlane.xlu0 %12
  %v14 = vsel %vm10, %v9, 0.0
  %15 = vadd.xlane.f32.xlu0 %v14
  %v16 = vpop.xlane.xlu0 %15
  %v17 = vmul.f32 %v8, %v8
  %v18 = vmul.f32 %v9, %v9
  %v19 = vsel %vm10, %v17, 0.0
  %20 = vadd.xlane.f32.xlu0 %v19
  %v21 = vpop.xlane.xlu0 %20
  %v22 = vsel %vm10, %v18, 0.0
  %23 = vadd.xlane.f32.xlu0 %v22
  %v24 = vpop.xlane.xlu0 %23
  %vm25 = vcmask 7168
  %v26 = vsel %vm25, %v13, %v21
  %v27 = vsel %vm25, %v16, %v24
  %vm28 = vcmask 15360
  %29 = vst.msk [vmem:[%s1] sm:$0xff] %vm28, %v26
  %30 = vst.msk [vmem:[%s1 + $0x8] sm:$0xff] %vm28, %v27
  // Predicated region
  $region6: #{unet_down_conv_forward.16} parent=0 // pred_check
    _
  $region7: #{unet_down_conv_forward.16} parent=0 // pred_check_branch
    %32 = sbr.rel (0) target = $region9
  $region8: #{unet_down_conv_forward.16} parent=0 // pred_region
    _
  $region9: #{unet_down_conv_forward.16} parent=0 // pred_fallthru
    _
  // Predicated region
  $region10: #{unet_down_conv_forward.16} parent=0 // pred_check
    _
  $region11: #{unet_down_conv_forward.16} parent=0 // pred_check_branch
    %34 = sbr.rel (0) target = $region13
  $region12: #{unet_down_conv_forward.16} parent=0 // pred_region
    _
  $region13: #{unet_down_conv_forward.16} parent=0 // pred_fallthru
    _

// kernel: unet_down_conv_forward.14
$region0: #{unet_down_conv_forward.14}
  #allocation0 [shape = 'u32[]', space=smem, size = 0x4, offset = 0x4, fixed_abs, tag = 'smem constant byte address 0x4 - core index']
  #allocation1 [shape = 'u32[72,128]{1,0:T(1,128)}', space=vmem, size = 0x9000, scoped, tag = 'internal scratch']
  %s0 = inlined_call_operand.vmem [shape: f32[2,1,4,256], index: 0, kind: input, shape index: {}, may-alias: {0,1}]
  %s1 = inlined_call_operand.vmem [shape: f32[2,1,4,256], index: 1, kind: input, shape index: {}, may-alias: {0,1}]
  %s2 = inlined_call_operand.vmem [shape: f32[8,36], index: 2, kind: input, shape index: {}]
  %s3 = inlined_call_operand.vmem [shape: f32[2,4,1], index: 3, kind: input, shape index: {}]
  %s4 = inlined_call_operand.vmem [shape: f32[2,8,128], index: 4, kind: output, shape index: {}]
  %s5 = sld [smem:[#allocation0]]
  $region49: #{unet_down_conv_forward.14} parent=0
    _
  %s7 = ssub.s32 1, %s5
  %s8 = scalar_select 0, %s7, %s5
  loop: start=0, step=1, limit=4
  $region2: #{unet_down_conv_forward.14} parent=0 // loop_pre_header
    _
  $region3: #{unet_down_conv_forward.14} parent=0 // loop_header
    %s10 = sphi 0, %s14
    %p11 = scmp.ge.s32.totalorder %s10, 4
    %s17 = sphi 0, %s36
    %s18 = sphi 0, %s32
    %s19 = sphi 0, %s28
    %s20 = sphi 0, %s17
    %s21 = sphi 0, %s18
    %s22 = sphi 0, %s19
    %s23 = sphi 0, %s20
    %s24 = sphi 0, %s21
    %s25 = sphi 0, %s22
    %s41 = sphi 0, %s43
    %s44 = sphi 0, %s41
    %s45 = sphi 0, %s44
    %s61 = sphi 0, %s45
    %s71 = sphi 0, %s73
    %s74 = sphi 0, %s71
    %s75 = sphi 0, %s74
    %s91 = sphi 0, %s75
    %s97 = sphi 0, %s99
    %s100 = sphi 0, %s97
    %s101 = sphi 0, %s100
    %s117 = sphi 0, %s101
    %s123 = sphi 0, %s125
    %s126 = sphi 0, %s123
    %s127 = sphi 0, %s126
    %s143 = sphi 0, %s127
    %s153 = sphi 0, %s155
    %s156 = sphi 0, %s153
    %s157 = sphi 0, %s156
    %s173 = sphi 0, %s157
  $region4: #{unet_down_conv_forward.14} parent=0 // loop_header_branch
    %13 = sbr.rel (%p11) target = $region8
  $region5: #{unet_down_conv_forward.14} parent=0 // loop_body
    %s15 = ssub.s32 %s10, 1
    %s16 = ssub.s32 %s10, 2
    %s26 = sadd.s32 1, %s19
    %p27 = scmp.ge.s32.totalorder %s26, 1
    %s28 = scalar_select %p27, 0, %s26
    %s29 = sadd.s32 1, %s18
    %s30 = scalar_select %p27, %s29, %s18
    %p31 = scmp.ge.s32.totalorder %s30, 1
    %s32 = scalar_select %p31, 0, %s30
    %s33 = sadd.s32 1, %s17
    %s34 = scalar_select %p31, %s33, %s17
    %p35 = scmp.ge.s32.totalorder %s34, 2
    %s36 = scalar_select %p35, 0, %s34
    %s37 = ssub.s32 %s17, %s36
    %s38 = ssub.s32 %s18, %s32
    %s39 = sor.u32 %s37, %s38
    %p40 = scmp.eq.s32.totalorder %s39, 0
    %s42 = sadd.s32 %s41, 1
    %s43 = scalar_select %p40, %s41, %s42
    %p46 = pneg %p40
    %p47 = scmp.eq.s32.totalorder %s10, 1
    %p48 = por %p46, %p47
    %p49 = scmp.ne.s32.totalorder %s41, %s44
    %p50 = scmp.eq.s32.totalorder %s10, 0
    %p51 = por %p49, %p50
    %p52 = scmp.ne.s32.totalorder %s41, %s44
    %p53 = scmp.eq.s32.totalorder %s15, 1
    %p54 = por %p52, %p53
    %p55 = scmp.ne.s32.totalorder %s44, %s45
    %p56 = scmp.eq.s32.totalorder %s15, 0
    %p57 = por %p55, %p56
    %p58 = scmp.ne.s32.totalorder %s44, %s45
    %p59 = scmp.eq.s32.totalorder %s16, 1
    %p60 = por %p58, %p59
    %p62 = scmp.ne.s32.totalorder %s45, %s61
    %p63 = scmp.eq.s32.totalorder %s16, 0
    %p64 = por %p62, %p63
    %s65 = sadd.s32 %s18, 1
    %s66 = sadd.s32 %s32, 1
    %s67 = ssub.s32 %s17, %s36
    %s68 = ssub.s32 %s65, %s66
    %s69 = sor.u32 %s67, %s68
    %p70 = scmp.eq.s32.totalorder %s69, 0
    %s72 = sadd.s32 %s71, 1
    %s73 = scalar_select %p70, %s71, %s72
    %p76 = pneg %p70
    %p77 = scmp.eq.s32.totalorder %s10, 1
    %p78 = por %p76, %p77
    %p79 = scmp.ne.s32.totalorder %s71, %s74
    %p80 = scmp.eq.s32.totalorder %s10, 0
    %p81 = por %p79, %p80
    %p82 = scmp.ne.s32.totalorder %s71, %s74
    %p83 = scmp.eq.s32.totalorder %s15, 1
    %p84 = por %p82, %p83
    %p85 = scmp.ne.s32.totalorder %s74, %s75
    %p86 = scmp.eq.s32.totalorder %s15, 0
    %p87 = por %p85, %p86
    %p88 = scmp.ne.s32.totalorder %s74, %s75
    %p89 = scmp.eq.s32.totalorder %s16, 1
    %p90 = por %p88, %p89
    %p92 = scmp.ne.s32.totalorder %s75, %s91
    %p93 = scmp.eq.s32.totalorder %s16, 0
    %p94 = por %p92, %p93
    %s95 = ssub.s32 %s19, %s28
    %p96 = scmp.eq.s32.totalorder %s95, 0
    %s98 = sadd.s32 %s97, 1
    %s99 = scalar_select %p96, %s97, %s98
    %p102 = pneg %p96
    %p103 = scmp.eq.s32.totalorder %s10, 1
    %p104 = por %p102, %p103
    %p105 = scmp.ne.s32.totalorder %s97, %s100
    %p106 = scmp.eq.s32.totalorder %s10, 0
    %p107 = por %p105, %p106
    %p108 = scmp.ne.s32.totalorder %s97, %s100
    %p109 = scmp.eq.s32.totalorder %s15, 1
    %p110 = por %p108, %p109
    %p111 = scmp.ne.s32.totalorder %s100, %s101
    %p112 = scmp.eq.s32.totalorder %s15, 0
    %p113 = por %p111, %p112
    %p114 = scmp.ne.s32.totalorder %s100, %s101
    %p115 = scmp.eq.s32.totalorder %s16, 1
    %p116 = por %p114, %p115
    %p118 = scmp.ne.s32.totalorder %s101, %s117
    %p119 = scmp.eq.s32.totalorder %s16, 0
    %p120 = por %p118, %p119
    %s121 = ssub.s32 %s17, %s36
    %p122 = scmp.eq.s32.totalorder %s121, 0
    %s124 = sadd.s32 %s123, 1
    %s125 = scalar_select %p122, %s123, %s124
    %p128 = pneg %p122
    %p129 = scmp.eq.s32.totalorder %s10, 1
    %p130 = por %p128, %p129
    %p131 = scmp.ne.s32.totalorder %s123, %s126
    %p132 = scmp.eq.s32.totalorder %s10, 0
    %p133 = por %p131, %p132
    %p134 = scmp.ne.s32.totalorder %s123, %s126
    %p135 = scmp.eq.s32.totalorder %s15, 1
    %p136 = por %p134, %p135
    %p137 = scmp.ne.s32.totalorder %s126, %s127
    %p138 = scmp.eq.s32.totalorder %s15, 0
    %p139 = por %p137, %p138
    %p140 = scmp.ne.s32.totalorder %s126, %s127
    %p141 = scmp.eq.s32.totalorder %s16, 1
    %p142 = por %p140, %p141
    %p144 = scmp.ne.s32.totalorder %s127, %s143
    %p145 = scmp.eq.s32.totalorder %s16, 0
    %p146 = por %p144, %p145
    %s147 = ssub.s32 %s17, %s36
    %s148 = ssub.s32 %s19, %s28
    %s149 = sor.u32 %s147, %s148
    %s150 = ssub.s32 %s18, %s32
    %s151 = sor.u32 %s149, %s150
    %p152 = scmp.eq.s32.totalorder %s151, 0
    %s154 = sadd.s32 %s153, 1
    %s155 = scalar_select %p152, %s153, %s154
    %p158 = pneg %p152
    %p159 = scmp.eq.s32.totalorder %s10, 1
    %p160 = por %p158, %p159
    %p161 = scmp.ne.s32.totalorder %s153, %s156
    %p162 = scmp.eq.s32.totalorder %s10, 0
    %p163 = por %p161, %p162
    %p164 = scmp.ne.s32.totalorder %s153, %s156
    %p165 = scmp.eq.s32.totalorder %s15, 1
    %p166 = por %p164, %p165
    %p167 = scmp.ne.s32.totalorder %s156, %s157
    %p168 = scmp.eq.s32.totalorder %s15, 0
    %p169 = por %p167, %p168
    %p170 = scmp.ne.s32.totalorder %s156, %s157
    %p171 = scmp.eq.s32.totalorder %s16, 1
    %p172 = por %p170, %p171
    %p174 = scmp.ne.s32.totalorder %s157, %s173
    %p175 = scmp.eq.s32.totalorder %s16, 0
    %p176 = por %p174, %p175
    %p177 = scmp.le.s32.totalorder 1, %s10
    %p178 = scmp.lt.s32.totalorder %s10, 3
    %p179 = pnand %p177, %p178
    %p180 = pneg %p179
    // Predicated region
    $region9: #{unet_down_conv_forward.14} parent=5 // pred_check
      _
    $region10: #{unet_down_conv_forward.14} parent=5 // pred_check_branch
      %182 = sbr.rel (%p179) target = $region12
    $region11: #{unet_down_conv_forward.14} parent=5 // pred_region
      %s183 = ssub.s32 %s10, 1
      // Predicated region
      $region13: #{unet_down_conv_forward.14} parent=11 // pred_check
        %p184 = pneg %p113
      $region14: #{unet_down_conv_forward.14} parent=11 // pred_check_branch
        %186 = sbr.rel (%p184) target = $region16
      $region15: #{unet_down_conv_forward.14} parent=11 // pred_region
        %p187 = scmp.lt.s32.totalorder %s22, 0
        %s188 = scalar_select %p187, %s22, 0
        %s189 = smul.addr %s188, 8
        %s190 = scalar_lea.vmem %s2, %s189
      $region16: #{unet_down_conv_forward.14} parent=11 // pred_fallthru
        _
    $region12: #{unet_down_conv_forward.14} parent=5 // pred_fallthru
      _
    %p191 = scmp.lt.s32.totalorder %s10, 2
    // Predicated region
    $region17: #{unet_down_conv_forward.14} parent=5 // pred_check
      %p192 = pneg %p191
    $region18: #{unet_down_conv_forward.14} parent=5 // pred_check_branch
      %194 = sbr.rel (%p192) target = $region20
    $region19: #{unet_down_conv_forward.14} parent=5 // pred_region
      // Predicated region
      $region21: #{unet_down_conv_forward.14} parent=19 // pred_check
        %p195 = pneg %p51
      $region22: #{unet_down_conv_forward.14} parent=19 // pred_check_branch
        %197 = sbr.rel (%p195) target = $region24
      $region23: #{unet_down_conv_forward.14} parent=19 // pred_region
        %p198 = scmp.lt.s32.totalorder %s17, 1
        %s199 = scalar_select %p198, %s17, 1
        %p200 = scmp.lt.s32.totalorder %s18, 1
        %s201 = scalar_select %p200, %s18, 1
        %s202 = smul.addr %s199, 2
        %s203 = sadd.s32 %s201, %s202
        %s204 = smul.addr %s203, 4
        %s205 = scalar_lea.vmem %s0, %s204
      $region24: #{unet_down_conv_forward.14} parent=19 // pred_fallthru
        _
      // Predicated region
      $region25: #{unet_down_conv_forward.14} parent=19 // pred_check
        %p206 = pneg %p81
      $region26: #{unet_down_conv_forward.14} parent=19 // pred_check_branch
        %208 = sbr.rel (%p206) target = $region28
      $region27: #{unet_down_conv_forward.14} parent=19 // pred_region
        %s209 = sadd.s32 %s18, 1
        %p210 = scmp.lt.s32.totalorder %s17, 1
        %s211 = scalar_select %p210, %s17, 1
        %p212 = scmp.lt.s32.totalorder %s209, 1
        %s213 = scalar_select %p212, %s209, 1
        %s214 = smul.addr %s211, 2
        %s215 = sadd.s32 %s213, %s214
        %s216 = smul.addr %s215, 4
        %s217 = scalar_lea.vmem %s1, %s216
        %s218 = sadd.s32 %s18, 1
      $region28: #{unet_down_conv_forward.14} parent=19 // pred_fallthru
        _
      // Predicated region
      $region29: #{unet_down_conv_forward.14} parent=19 // pred_check
        %p219 = pneg %p133
      $region30: #{unet_down_conv_forward.14} parent=19 // pred_check_branch
        %221 = sbr.rel (%p219) target = $region32
      $region31: #{unet_down_conv_forward.14} parent=19 // pred_region
        %p222 = scmp.lt.s32.totalorder %s17, 1
        %s223 = scalar_select %p222, %s17, 1
        %s224 = smul.addr %s223, 4
        %s225 = scalar_lea.vmem %s3, %s224
      $region32: #{unet_down_conv_forward.14} parent=19 // pred_fallthru
        _
    $region20: #{unet_down_conv_forward.14} parent=5 // pred_fallthru
      _
    %p226 = scmp.le.s32.totalorder 1, %s10
    %p227 = scmp.lt.s32.totalorder %s10, 3
    %p228 = pnand %p226, %p227
    %p229 = pneg %p228
    // Predicated region
    $region33: #{unet_down_conv_forward.14} parent=5 // pred_check
      _
    $region34: #{unet_down_conv_forward.14} parent=5 // pred_check_branch
      %231 = sbr.rel (%p228) target = $region36
    $region35: #{unet_down_conv_forward.14} parent=5 // pred_region
      %s232 = ssub.s32 %s10, 1
      %p233 = scmp.lt.s32.totalorder %s20, 1
      %s234 = scalar_select %p233, %s20, 1
      %p235 = scmp.lt.s32.totalorder %s21, 1
      %s236 = scalar_select %p235, %s21, 1
      %s237 = smul.addr %s234, 2
      %s238 = sadd.s32 %s236, %s237
      %s239 = smul.addr %s238, 4
      %s240 = scalar_lea.vmem %s0, %s239
      %p241 = pneg %p57
      %p242 = pneg %p54
      %s243 = sadd.s32 %s21, 1
      %p244 = scmp.lt.s32.totalorder %s20, 1
      %s245 = scalar_select %p244, %s20, 1
      %p246 = scmp.lt.s32.totalorder %s243, 1
      %s247 = scalar_select %p246, %s243, 1
      %s248 = smul.addr %s245, 2
      %s249 = sadd.s32 %s247, %s248
      %s250 = smul.addr %s249, 4
      %s251 = scalar_lea.vmem %s1, %s250
      %p252 = pneg %p87
      %p253 = pneg %p84
      %p254 = scmp.lt.s32.totalorder %s22, 0
      %s255 = scalar_select %p254, %s22, 0
      %s256 = smul.addr %s255, 8
      %s257 = scalar_lea.vmem %s2, %s256
      %p258 = pneg %p113
      %p259 = pneg %p110
      %p260 = scmp.lt.s32.totalorder %s20, 1
      %s261 = scalar_select %p260, %s20, 1
      %s262 = smul.addr %s261, 4
      %s263 = scalar_lea.vmem %s3, %s262
      %p264 = pneg %p139
      %p265 = pneg %p136
      %p266 = pneg %p169
      %p267 = pneg %p166
      %p268 = scmp.lt.s32.totalorder %s20, 1
      %s269 = scalar_select %p268, %s20, 1
      %p270 = scmp.lt.s32.totalorder %s22, 0
      %s271 = scalar_select %p270, %s22, 0
      %p272 = scmp.lt.s32.totalorder %s21, 0
      %s273 = scalar_select %p272, %s21, 0
      %s274 = sadd.s32 %s273, %s271
      %s275 = sadd.s32 %s274, %s269
      %s276 = smul.addr %s275, 8
      %s277 = scalar_lea.vmem %s4, %s276
      %p278 = scmp.lt.s32.totalorder %s20, 1
      %s279 = scalar_select %p278, %s20, 1
      %p280 = scmp.lt.s32.totalorder %s21, 1
      %s281 = scalar_select %p280, %s21, 1
      %s282 = smul.addr %s279, 2
      %s283 = sadd.s32 %s281, %s282
      %s284 = smul.addr %s283, 4
      %s285 = scalar_lea.vmem %s0, %s284
      %s286 = sadd.s32 %s21, 1
      %p287 = scmp.lt.s32.totalorder %s20, 1
      %s288 = scalar_select %p287, %s20, 1
      %p289 = scmp.lt.s32.totalorder %s286, 1
      %s290 = scalar_select %p289, %s286, 1
      %s291 = smul.addr %s288, 2
      %s292 = sadd.s32 %s290, %s291
      %s293 = smul.addr %s292, 4
      %s294 = scalar_lea.vmem %s1, %s293
      %s295 = sadd.s32 %s21, 1
      %p296 = scmp.lt.s32.totalorder %s22, 0
      %s297 = scalar_select %p296, %s22, 0
      %s298 = smul.addr %s297, 8
      %s299 = scalar_lea.vmem %s2, %s298
      %p300 = scmp.lt.s32.totalorder %s20, 1
      %s301 = scalar_select %p300, %s20, 1
      %s302 = smul.addr %s301, 4
      %s303 = scalar_lea.vmem %s3, %s302
      %p304 = scmp.lt.s32.totalorder %s20, 1
      %s305 = scalar_select %p304, %s20, 1
      %p306 = scmp.lt.s32.totalorder %s22, 0
      %s307 = scalar_select %p306, %s22, 0
      %p308 = scmp.lt.s32.totalorder %s21, 0
      %s309 = scalar_select %p308, %s21, 0
      %s310 = sadd.s32 %s309, %s307
      %s311 = sadd.s32 %s310, %s305
      %s312 = smul.addr %s311, 8
      %s313 = scalar_lea.vmem %s4, %s312
      %v314 = vld [vmem:[%s285] sm:$0xf]
      %v315 = vld [vmem:[%s294] sm:$0xf]
      %v316 = vld [vmem:[%s303] sm:$0xf]
      %v317 = vmax.f32 %v314, 0.0
      %319 = vset.pattern.permute.xlu0 0
      %320 = vperm.xlu0 %319, %v316
      %v321 = vpop.permute.xlu0 %320
      %v323 = vmul.f32 %v317, %v321
      %v324 = vmax.f32 %v315, 0.0
      %v325 = vmul.f32 %v324, %v321
      %327 = vrot.lane.b32.xlu0 %v323, 127
      %v328 = vpop.permute.xlu0 %327
      %331 = vrot.lane.b32.xlu0 %v325, 127
      %v332 = vpop.permute.xlu0 %331
      %vm334 = vcmask 1039360
      %v335 = vsel %vm334, %v328, %v332
      %336 = vrot.lane.b32.xlu0 %v323, 126
      %v337 = vpop.permute.xlu0 %336
      %339 = vrot.lane.b32.xlu0 %v325, 126
      %v340 = vpop.permute.xlu0 %339
      %vm342 = vcmask 1031168
      %v343 = vsel %vm342, %v337, %v340
      %344 = vrot.lane.b32.xlu0 %v323, 118
      %v345 = vpop.permute.xlu0 %344
      %347 = vrot.lane.b32.xlu0 %v325, 118
      %v348 = vpop.permute.xlu0 %347
      %vm350 = vcmask 965632
      %v351 = vsel %vm350, %v345, %v348
      %352 = vrot.lane.b32.xlu0 %v323, 117
      %v353 = vpop.permute.xlu0 %352
      %355 = vrot.lane.b32.xlu0 %v325, 117
      %v356 = vpop.permute.xlu0 %355
      %vm358 = vcmask 957440
      %v359 = vsel %vm358, %v353, %v356
      %360 = vrot.lane.b32.xlu0 %v323, 116
      %v361 = vpop.permute.xlu0 %360
      %363 = vrot.lane.b32.xlu0 %v325, 116
      %v364 = vpop.permute.xlu0 %363
      %vm366 = vcmask 949248
      %v367 = vsel %vm366, %v361, %v364
      %368 = vrot.lane.b32.xlu0 %v323, 108
      %v369 = vpop.permute.xlu0 %368
      %371 = vrot.lane.b32.xlu0 %v325, 108
      %v372 = vpop.permute.xlu0 %371
      %vm374 = vcmask 883712
      %v375 = vsel %vm374, %v369, %v372
      %376 = vrot.lane.b32.xlu0 %v323, 107
      %v377 = vpop.permute.xlu0 %376
      %379 = vrot.lane.b32.xlu0 %v325, 107
      %v380 = vpop.permute.xlu0 %379
      %vm382 = vcmask 875520
      %v383 = vsel %vm382, %v377, %v380
      %384 = vrot.lane.b32.xlu0 %v323, 106
      %v385 = vpop.permute.xlu0 %384
      %387 = vrot.lane.b32.xlu0 %v325, 106
      %v388 = vpop.permute.xlu0 %387
      %vm390 = vcmask 867328
      %v391 = vsel %vm390, %v385, %v388
      %v393 = vrot.slane %v335, 4
      %v396 = vrot.slane %v351, 4
      %v399 = vrot.slane %v367, 4
      %v402 = vrot.slane %v383, 4
      %vm404 = vcmask 1043456
      %v405 = vsel %vm404, %v323, %v393
      %v406 = vsel %vm404, %v343, %v396
      %v407 = vsel %vm404, %v359, %v399
      %v408 = vsel %vm404, %v375, %v402
      %v409 = vld [vmem:[%s299] sm:$0xff]
      %vm410 = vcmask 293888
      %v412 = vsel %vm410, %v409, 0
      %v415 = vsel %vm404, %v391, 0
      %417 = vmatpush.msra.mxu0 0.0
      %418 = vmatpush.msra.mxu0 0.0
      %419 = vmatpush.msra.mxu0 0.0
      %420 = vmatpush.msra.mxu0 0.0
      %421 = vmatpush.msra.mxu0 0.0
      %422 = vmatpush.msra.mxu0 0.0
      %423 = vmatpush.msra.mxu0 0.0
      %424 = vmatpush.msra.mxu0 0.0
      %425 = vmatpush.msra.mxu0 0.0
      %426 = vmatpush.msra.mxu0 0.0
      %427 = vmatpush.msra.mxu0 0.0
      %428 = vmatpush.msra.mxu0 %v415
      %429 = vmatpush.msra.mxu0 %v408
      %430 = vmatpush.msra.mxu0 %v407
      %431 = vmatpush.msra.mxu0 %v406
      %432 = vmatpush.msra.mxu0 %v405
      %433 = vmatmul.f32.gmra.mxu0 %v412
      %v434 = vpop.f32.mrf.mxu0
      %v435 = vadd.f32 0.0, %v434
      %436 = vdwg.mxu0
      %437 = vst [vmem:[%s313] sm:$0xff] %v435
      %p438 = scmp.lt.s32.totalorder %s20, 1
      %s439 = scalar_select %p438, %s20, 1
      %p440 = scmp.lt.s32.totalorder %s22, 0
      %s441 = scalar_select %p440, %s22, 0
      %p442 = scmp.lt.s32.totalorder %s21, 0
      %s443 = scalar_select %p442, %s21, 0
      %s444 = sadd.s32 %s443, %s441
      %s445 = sadd.s32 %s444, %s439
      %s446 = smul.addr %s445, 8
      %s447 = scalar_lea.vmem %s4, %s446
      // Predicated region
      $region37: #{unet_down_conv_forward.14} parent=35 // pred_check
        %p448 = pneg %p166
      $region38: #{unet_down_conv_forward.14} parent=35 // pred_check_branch
        %450 = sbr.rel (%p448) target = $region40
      $region39: #{unet_down_conv_forward.14} parent=35 // pred_region
        _
      $region40: #{unet_down_conv_forward.14} parent=35 // pred_fallthru
        _
    $region36: #{unet_down_conv_forward.14} parent=5 // pred_fallthru
      _
    %p451 = scmp.le.s32.totalorder 2, %s10
    // Predicated region
    $region41: #{unet_down_conv_forward.14} parent=5 // pred_check
      %p452 = pneg %p451
    $region42: #{unet_down_conv_forward.14} parent=5 // pred_check_branch
      %454 = sbr.rel (%p452) target = $region44
    $region43: #{unet_down_conv_forward.14} parent=5 // pred_region
      %s455 = ssub.s32 %s10, 2
      // Predicated region
      $region45: #{unet_down_conv_forward.14} parent=43 // pred_check
        %p456 = pneg %p172
      $region46: #{unet_down_conv_forward.14} parent=43 // pred_check_branch
        %458 = sbr.rel (%p456) target = $region48
      $region47: #{unet_down_conv_forward.14} parent=43 // pred_region
        %p459 = scmp.lt.s32.totalorder %s23, 1
        %s460 = scalar_select %p459, %s23, 1
        %p461 = scmp.lt.s32.totalorder %s25, 0
        %s462 = scalar_select %p461, %s25, 0
        %p463 = scmp.lt.s32.totalorder %s24, 0
        %s464 = scalar_select %p463, %s24, 0
        %s465 = sadd.s32 %s464, %s462
        %s466 = sadd.s32 %s465, %s460
        %s467 = smul.addr %s466, 8
        %s468 = scalar_lea.vmem %s4, %s467
      $region48: #{unet_down_conv_forward.14} parent=43 // pred_fallthru
        _
    $region44: #{unet_down_conv_forward.14} parent=5 // pred_fallthru
      _
  $region6: #{unet_down_conv_forward.14} parent=0 // loop_footer
    %s14 = sadd.s32 1, %s10
  $region7: #{unet_down_conv_forward.14} parent=0 // loop_footer_branch
    %9 = sbr.rel target = $region3
  $region8: #{unet_down_conv_forward.14} parent=0 // loop_exit
    _

// kernel: unet_down_conv_forward.15
$region0: #{unet_down_conv_forward.15}
  #allocation0 [shape = 'u32[]', space=smem, size = 0x4, offset = 0x4, fixed_abs, tag = 'smem constant byte address 0x4 - core index']
  #allocation1 [shape = 'u32[72,128]{1,0:T(1,128)}', space=vmem, size = 0x9000, scoped, tag = 'internal scratch']
  %s0 = inlined_call_operand.vmem [shape: f32[2,4,4,256], index: 0, kind: input, shape index: {}, may-alias: {0,1}]
  %s1 = inlined_call_operand.vmem [shape: f32[2,4,4,256], index: 1, kind: input, shape index: {}, may-alias: {0,1}]
  %s2 = inlined_call_operand.vmem [shape: f32[8,36], index: 2, kind: input, shape index: {}]
  %s3 = inlined_call_operand.vmem [shape: f32[2,4,1], index: 3, kind: input, shape index: {}]
  %s4 = inlined_call_operand.vmem [shape: f32[2,8,128], index: 4, kind: output, shape index: {}]
  %s5 = sld [smem:[#allocation0]]
  $region131: #{unet_down_conv_forward.15} parent=0
    _
  %s7 = ssub.s32 1, %s5
  %s8 = scalar_select 0, %s7, %s5
  $region1: #{unet_down_conv_forward.15} parent=0
    #allocation2 [shape = 'u8[16384]{0}', space=vmem, size = 0x4000, scoped, tag = 'input window, operand 0']
    #allocation3 [shape = 'u8[16384]{0}', space=vmem, size = 0x4000, scoped, tag = 'input window, operand 1']
    loop: start=0, step=1, limit=4
    $region2: #{unet_down_conv_forward.15} parent=1 // loop_pre_header
      _
    $region3: #{unet_down_conv_forward.15} parent=1 // loop_header
      %s10 = sphi 0, %s14
      %p11 = scmp.ge.s32.totalorder %s10, 4
      %s17 = sphi 0, %s36
      %s18 = sphi 0, %s32
      %s19 = sphi 0, %s28
      %s20 = sphi 0, %s17
      %s21 = sphi 0, %s18
      %s22 = sphi 0, %s19
      %s23 = sphi 0, %s20
      %s24 = sphi 0, %s21
      %s25 = sphi 0, %s22
      %s41 = sphi 0, %s43
      %s44 = sphi 0, %s41
      %s45 = sphi 0, %s44
      %s61 = sphi 0, %s45
      %s71 = sphi 0, %s73
      %s74 = sphi 0, %s71
      %s75 = sphi 0, %s74
      %s91 = sphi 0, %s75
      %s97 = sphi 0, %s99
      %s100 = sphi 0, %s97
      %s101 = sphi 0, %s100
      %s117 = sphi 0, %s101
      %s123 = sphi 0, %s125
      %s126 = sphi 0, %s123
      %s127 = sphi 0, %s126
      %s143 = sphi 0, %s127
      %s153 = sphi 0, %s155
      %s156 = sphi 0, %s153
      %s157 = sphi 0, %s156
      %s173 = sphi 0, %s157
    $region4: #{unet_down_conv_forward.15} parent=1 // loop_header_branch
      %13 = sbr.rel (%p11) target = $region8
    $region5: #{unet_down_conv_forward.15} parent=1 // loop_body
      %s15 = ssub.s32 %s10, 1
      %s16 = ssub.s32 %s10, 2
      %s26 = sadd.s32 1, %s19
      %p27 = scmp.ge.s32.totalorder %s26, 1
      %s28 = scalar_select %p27, 0, %s26
      %s29 = sadd.s32 1, %s18
      %s30 = scalar_select %p27, %s29, %s18
      %p31 = scmp.ge.s32.totalorder %s30, 1
      %s32 = scalar_select %p31, 0, %s30
      %s33 = sadd.s32 1, %s17
      %s34 = scalar_select %p31, %s33, %s17
      %p35 = scmp.ge.s32.totalorder %s34, 2
      %s36 = scalar_select %p35, 0, %s34
      %s37 = ssub.s32 %s17, %s36
      %s38 = ssub.s32 %s18, %s32
      %s39 = sor.u32 %s37, %s38
      %p40 = scmp.eq.s32.totalorder %s39, 0
      %s42 = sadd.s32 %s41, 1
      %s43 = scalar_select %p40, %s41, %s42
      %p46 = pneg %p40
      %p47 = scmp.eq.s32.totalorder %s10, 1
      %p48 = por %p46, %p47
      %p49 = scmp.ne.s32.totalorder %s41, %s44
      %p50 = scmp.eq.s32.totalorder %s10, 0
      %p51 = por %p49, %p50
      %p52 = scmp.ne.s32.totalorder %s41, %s44
      %p53 = scmp.eq.s32.totalorder %s15, 1
      %p54 = por %p52, %p53
      %p55 = scmp.ne.s32.totalorder %s44, %s45
      %p56 = scmp.eq.s32.totalorder %s15, 0
      %p57 = por %p55, %p56
      %p58 = scmp.ne.s32.totalorder %s44, %s45
      %p59 = scmp.eq.s32.totalorder %s16, 1
      %p60 = por %p58, %p59
      %p62 = scmp.ne.s32.totalorder %s45, %s61
      %p63 = scmp.eq.s32.totalorder %s16, 0
      %p64 = por %p62, %p63
      %s65 = sadd.s32 %s18, 1
      %s66 = sadd.s32 %s32, 1
      %s67 = ssub.s32 %s17, %s36
      %s68 = ssub.s32 %s65, %s66
      %s69 = sor.u32 %s67, %s68
      %p70 = scmp.eq.s32.totalorder %s69, 0
      %s72 = sadd.s32 %s71, 1
      %s73 = scalar_select %p70, %s71, %s72
      %p76 = pneg %p70
      %p77 = scmp.eq.s32.totalorder %s10, 1
      %p78 = por %p76, %p77
      %p79 = scmp.ne.s32.totalorder %s71, %s74
      %p80 = scmp.eq.s32.totalorder %s10, 0
      %p81 = por %p79, %p80
      %p82 = scmp.ne.s32.totalorder %s71, %s74
      %p83 = scmp.eq.s32.totalorder %s15, 1
      %p84 = por %p82, %p83
      %p85 = scmp.ne.s32.totalorder %s74, %s75
      %p86 = scmp.eq.s32.totalorder %s15, 0
      %p87 = por %p85, %p86
      %p88 = scmp.ne.s32.totalorder %s74, %s75
      %p89 = scmp.eq.s32.totalorder %s16, 1
      %p90 = por %p88, %p89
      %p92 = scmp.ne.s32.totalorder %s75, %s91
      %p93 = scmp.eq.s32.totalorder %s16, 0
      %p94 = por %p92, %p93
      %s95 = ssub.s32 %s19, %s28
      %p96 = scmp.eq.s32.totalorder %s95, 0
      %s98 = sadd.s32 %s97, 1
      %s99 = scalar_select %p96, %s97, %s98
      %p102 = pneg %p96
      %p103 = scmp.eq.s32.totalorder %s10, 1
      %p104 = por %p102, %p103
      %p105 = scmp.ne.s32.totalorder %s97, %s100
      %p106 = scmp.eq.s32.totalorder %s10, 0
      %p107 = por %p105, %p106
      %p108 = scmp.ne.s32.totalorder %s97, %s100
      %p109 = scmp.eq.s32.totalorder %s15, 1
      %p110 = por %p108, %p109
      %p111 = scmp.ne.s32.totalorder %s100, %s101
      %p112 = scmp.eq.s32.totalorder %s15, 0
      %p113 = por %p111, %p112
      %p114 = scmp.ne.s32.totalorder %s100, %s101
      %p115 = scmp.eq.s32.totalorder %s16, 1
      %p116 = por %p114, %p115
      %p118 = scmp.ne.s32.totalorder %s101, %s117
      %p119 = scmp.eq.s32.totalorder %s16, 0
      %p120 = por %p118, %p119
      %s121 = ssub.s32 %s17, %s36
      %p122 = scmp.eq.s32.totalorder %s121, 0
      %s124 = sadd.s32 %s123, 1
      %s125 = scalar_select %p122, %s123, %s124
      %p128 = pneg %p122
      %p129 = scmp.eq.s32.totalorder %s10, 1
      %p130 = por %p128, %p129
      %p131 = scmp.ne.s32.totalorder %s123, %s126
      %p132 = scmp.eq.s32.totalorder %s10, 0
      %p133 = por %p131, %p132
      %p134 = scmp.ne.s32.totalorder %s123, %s126
      %p135 = scmp.eq.s32.totalorder %s15, 1
      %p136 = por %p134, %p135
      %p137 = scmp.ne.s32.totalorder %s126, %s127
      %p138 = scmp.eq.s32.totalorder %s15, 0
      %p139 = por %p137, %p138
      %p140 = scmp.ne.s32.totalorder %s126, %s127
      %p141 = scmp.eq.s32.totalorder %s16, 1
      %p142 = por %p140, %p141
      %p144 = scmp.ne.s32.totalorder %s127, %s143
      %p145 = scmp.eq.s32.totalorder %s16, 0
      %p146 = por %p144, %p145
      %s147 = ssub.s32 %s17, %s36
      %s148 = ssub.s32 %s19, %s28
      %s149 = sor.u32 %s147, %s148
      %s150 = ssub.s32 %s18, %s32
      %s151 = sor.u32 %s149, %s150
      %p152 = scmp.eq.s32.totalorder %s151, 0
      %s154 = sadd.s32 %s153, 1
      %s155 = scalar_select %p152, %s153, %s154
      %p158 = pneg %p152
      %p159 = scmp.eq.s32.totalorder %s10, 1
      %p160 = por %p158, %p159
      %p161 = scmp.ne.s32.totalorder %s153, %s156
      %p162 = scmp.eq.s32.totalorder %s10, 0
      %p163 = por %p161, %p162
      %p164 = scmp.ne.s32.totalorder %s153, %s156
      %p165 = scmp.eq.s32.totalorder %s15, 1
      %p166 = por %p164, %p165
      %p167 = scmp.ne.s32.totalorder %s156, %s157
      %p168 = scmp.eq.s32.totalorder %s15, 0
      %p169 = por %p167, %p168
      %p170 = scmp.ne.s32.totalorder %s156, %s157
      %p171 = scmp.eq.s32.totalorder %s16, 1
      %p172 = por %p170, %p171
      %p174 = scmp.ne.s32.totalorder %s157, %s173
      %p175 = scmp.eq.s32.totalorder %s16, 0
      %p176 = por %p174, %p175
      %p177 = scmp.le.s32.totalorder 1, %s10
      %p178 = scmp.lt.s32.totalorder %s10, 3
      %p179 = pnand %p177, %p178
      %p180 = pneg %p179
      // Predicated region
      $region9: #{unet_down_conv_forward.15} parent=5 // pred_check
        _
      $region10: #{unet_down_conv_forward.15} parent=5 // pred_check_branch
        %182 = sbr.rel (%p179) target = $region12
      $region11: #{unet_down_conv_forward.15} parent=5 // pred_region
        %s183 = ssub.s32 %s10, 1
        // Predicated region
        $region13: #{unet_down_conv_forward.15} parent=11 // pred_check
          %p184 = pneg %p113
        $region14: #{unet_down_conv_forward.15} parent=11 // pred_check_branch
          %186 = sbr.rel (%p184) target = $region16
        $region15: #{unet_down_conv_forward.15} parent=11 // pred_region
          %p187 = scmp.lt.s32.totalorder %s22, 0
          %s188 = scalar_select %p187, %s22, 0
          %s189 = smul.addr %s188, 8
          %s190 = scalar_lea.vmem %s2, %s189
        $region16: #{unet_down_conv_forward.15} parent=11 // pred_fallthru
          _
      $region12: #{unet_down_conv_forward.15} parent=5 // pred_fallthru
        _
      %p191 = scmp.lt.s32.totalorder %s10, 2
      // Predicated region
      $region17: #{unet_down_conv_forward.15} parent=5 // pred_check
        %p192 = pneg %p191
      $region18: #{unet_down_conv_forward.15} parent=5 // pred_check_branch
        %194 = sbr.rel (%p192) target = $region20
      $region19: #{unet_down_conv_forward.15} parent=5 // pred_region
        // Predicated region
        $region21: #{unet_down_conv_forward.15} parent=19 // pred_check
          %p195 = pneg %p51
        $region22: #{unet_down_conv_forward.15} parent=19 // pred_check_branch
          %197 = sbr.rel (%p195) target = $region24
        $region23: #{unet_down_conv_forward.15} parent=19 // pred_region
          %s198 = sand.u32 %s41, 1
          %s199 = sand.u32 %s41, 1
          %s200 = smul.addr %s199, 16
          %s201 = scalar_lea.vmem [#allocation2], %s200
          %s202 = smul.addr %s17, 8
          %s203 = sadd.s32 %s18, %s202
          %s204 = smul.addr %s203, 4
          %s205 = scalar_lea.vmem %s0, %s204
          // Predicated region
          $region25: #{unet_down_conv_forward.15} parent=23 // pred_check
            _
          $region26: #{unet_down_conv_forward.15} parent=23 // pred_check_branch
            %207 = sbr.rel (0) target = $region28
          $region27: #{unet_down_conv_forward.15} parent=23 // pred_region
            // Predicated region
            $region29: #{unet_down_conv_forward.15} parent=27 // pred_check
              _
            $region30: #{unet_down_conv_forward.15} parent=27 // pred_check_branch
              %209 = sbr.rel target = $region32
            $region31: #{unet_down_conv_forward.15} parent=27 // pred_region
              // Predicated region
              $region44: #{unet_down_conv_forward.15} parent=31 // pred_check
                _
              $region45: #{unet_down_conv_forward.15} parent=31 // pred_check_branch
                %231 = sbr.rel (0) target = $region47
              $region46: #{unet_down_conv_forward.15} parent=31 // pred_region
                loop: start=0, step=1, limit=1
                $region48: #{unet_down_conv_forward.15} parent=46 // loop_pre_header
                  _
                $region49: #{unet_down_conv_forward.15} parent=46 // loop_header
                  %s233 = sphi 0, %s237
                  %p234 = scmp.ge.s32.totalorder %s233, 1
                  %s238 = sphi %s205, %s205
                  %s239 = sphi %s201, %s201
                $region50: #{unet_down_conv_forward.15} parent=46 // loop_header_branch
                  %236 = sbr.rel (%p234) target = $region54
                $region51: #{unet_down_conv_forward.15} parent=46 // loop_body
                  _
                $region52: #{unet_down_conv_forward.15} parent=46 // loop_footer
                  %s237 = sadd.s32 1, %s233
                $region53: #{unet_down_conv_forward.15} parent=46 // loop_footer_branch
                  %232 = sbr.rel target = $region49
                $region54: #{unet_down_conv_forward.15} parent=46 // loop_exit
                  _
                %s241 = ssub.s32 16, 1
                loop: start=0, step=1, limit=1
                $region55: #{unet_down_conv_forward.15} parent=46 // loop_pre_header
                  _
                $region56: #{unet_down_conv_forward.15} parent=46 // loop_header
                  %s243 = sphi 0, %s247
                  %p244 = scmp.ge.s32.totalorder %s243, 1
                  %s248 = sphi %s205, %s205
                  %s249 = sphi %s201, %s201
                $region57: #{unet_down_conv_forward.15} parent=46 // loop_header_branch
                  %246 = sbr.rel (%p244) target = $region61
                $region58: #{unet_down_conv_forward.15} parent=46 // loop_body
                  %v250 = vld [vmem:[%s248] sm:%s241]
                  %251 = vst [vmem:[%s249] sm:%s241] %v250
                  %v252 = vld [vmem:[%s248 + $0x8] sm:%s241]
                  %253 = vst [vmem:[%s249 + $0x4] sm:%s241] %v252
                  %v254 = vld [vmem:[%s248 + $0x10] sm:%s241]
                  %255 = vst [vmem:[%s249 + $0x8] sm:%s241] %v254
                  %v256 = vld [vmem:[%s248 + $0x18] sm:%s241]
                  %257 = vst [vmem:[%s249 + $0xc] sm:%s241] %v256
                $region59: #{unet_down_conv_forward.15} parent=46 // loop_footer
                  %s247 = sadd.s32 1, %s243
                $region60: #{unet_down_conv_forward.15} parent=46 // loop_footer_branch
                  %242 = sbr.rel target = $region56
                $region61: #{unet_down_conv_forward.15} parent=46 // loop_exit
                  _
              $region47: #{unet_down_conv_forward.15} parent=31 // pred_fallthru
                _
            $region32: #{unet_down_conv_forward.15} parent=27 // pred_fallthru
              _
            // Predicated region
            $region33: #{unet_down_conv_forward.15} parent=27 // pred_check
              _
            $region34: #{unet_down_conv_forward.15} parent=27 // pred_check_branch
              %211 = sbr.rel (0) target = $region36
            $region35: #{unet_down_conv_forward.15} parent=27 // pred_region
              %s213 = ssub.s32 16, 1
              loop: start=0, step=1, limit=1
              $region37: #{unet_down_conv_forward.15} parent=35 // loop_pre_header
                _
              $region38: #{unet_down_conv_forward.15} parent=35 // loop_header
                %s215 = sphi 0, %s219
                %p216 = scmp.ge.s32.totalorder %s215, 1
                %s220 = sphi %s205, %s205
                %s221 = sphi %s201, %s201
              $region39: #{unet_down_conv_forward.15} parent=35 // loop_header_branch
                %218 = sbr.rel (%p216) target = $region43
              $region40: #{unet_down_conv_forward.15} parent=35 // loop_body
                %v222 = vld [vmem:[%s220] sm:%s213]
                %223 = vst [vmem:[%s221] sm:%s213] %v222
                %v224 = vld [vmem:[%s220 + $0x8] sm:%s213]
                %225 = vst [vmem:[%s221 + $0x4] sm:%s213] %v224
                %v226 = vld [vmem:[%s220 + $0x10] sm:%s213]
                %227 = vst [vmem:[%s221 + $0x8] sm:%s213] %v226
                %v228 = vld [vmem:[%s220 + $0x18] sm:%s213]
                %229 = vst [vmem:[%s221 + $0xc] sm:%s213] %v228
              $region41: #{unet_down_conv_forward.15} parent=35 // loop_footer
                %s219 = sadd.s32 1, %s215
              $region42: #{unet_down_conv_forward.15} parent=35 // loop_footer_branch
                %214 = sbr.rel target = $region38
              $region43: #{unet_down_conv_forward.15} parent=35 // loop_exit
                _
            $region36: #{unet_down_conv_forward.15} parent=27 // pred_fallthru
              _
          $region28: #{unet_down_conv_forward.15} parent=23 // pred_fallthru
            _
          %258 = vnop
        $region24: #{unet_down_conv_forward.15} parent=19 // pred_fallthru
          _
        // Predicated region
        $region62: #{unet_down_conv_forward.15} parent=19 // pred_check
          %p259 = pneg %p81
        $region63: #{unet_down_conv_forward.15} parent=19 // pred_check_branch
          %261 = sbr.rel (%p259) target = $region65
        $region64: #{unet_down_conv_forward.15} parent=19 // pred_region
          %s262 = sand.u32 %s71, 1
          %s263 = sand.u32 %s71, 1
          %s264 = smul.addr %s263, 16
          %s265 = scalar_lea.vmem [#allocation3], %s264
          %s266 = sadd.s32 %s18, 1
          %s267 = smul.addr %s17, 8
          %s268 = sadd.s32 %s266, %s267
          %s269 = smul.addr %s268, 4
          %s270 = scalar_lea.vmem %s1, %s269
          // Predicated region
          $region66: #{unet_down_conv_forward.15} parent=64 // pred_check
            _
          $region67: #{unet_down_conv_forward.15} parent=64 // pred_check_branch
            %272 = sbr.rel (0) target = $region69
          $region68: #{unet_down_conv_forward.15} parent=64 // pred_region
            // Predicated region
            $region70: #{unet_down_conv_forward.15} parent=68 // pred_check
              _
            $region71: #{unet_down_conv_forward.15} parent=68 // pred_check_branch
              %274 = sbr.rel target = $region73
            $region72: #{unet_down_conv_forward.15} parent=68 // pred_region
              // Predicated region
              $region85: #{unet_down_conv_forward.15} parent=72 // pred_check
                _
              $region86: #{unet_down_conv_forward.15} parent=72 // pred_check_branch
                %296 = sbr.rel (0) target = $region88
              $region87: #{unet_down_conv_forward.15} parent=72 // pred_region
                loop: start=0, step=1, limit=1
                $region89: #{unet_down_conv_forward.15} parent=87 // loop_pre_header
                  _
                $region90: #{unet_down_conv_forward.15} parent=87 // loop_header
                  %s298 = sphi 0, %s302
                  %p299 = scmp.ge.s32.totalorder %s298, 1
                  %s303 = sphi %s270, %s270
                  %s304 = sphi %s265, %s265
                $region91: #{unet_down_conv_forward.15} parent=87 // loop_header_branch
                  %301 = sbr.rel (%p299) target = $region95
                $region92: #{unet_down_conv_forward.15} parent=87 // loop_body
                  _
                $region93: #{unet_down_conv_forward.15} parent=87 // loop_footer
                  %s302 = sadd.s32 1, %s298
                $region94: #{unet_down_conv_forward.15} parent=87 // loop_footer_branch
                  %297 = sbr.rel target = $region90
                $region95: #{unet_down_conv_forward.15} parent=87 // loop_exit
                  _
                %s306 = ssub.s32 16, 1
                loop: start=0, step=1, limit=1
                $region96: #{unet_down_conv_forward.15} parent=87 // loop_pre_header
                  _
                $region97: #{unet_down_conv_forward.15} parent=87 // loop_header
                  %s308 = sphi 0, %s312
                  %p309 = scmp.ge.s32.totalorder %s308, 1
                  %s313 = sphi %s270, %s270
                  %s314 = sphi %s265, %s265
                $region98: #{unet_down_conv_forward.15} parent=87 // loop_header_branch
                  %311 = sbr.rel (%p309) target = $region102
                $region99: #{unet_down_conv_forward.15} parent=87 // loop_body
                  %v315 = vld [vmem:[%s313] sm:%s306]
                  %316 = vst [vmem:[%s314] sm:%s306] %v315
                  %v317 = vld [vmem:[%s313 + $0x8] sm:%s306]
                  %318 = vst [vmem:[%s314 + $0x4] sm:%s306] %v317
                  %v319 = vld [vmem:[%s313 + $0x10] sm:%s306]
                  %320 = vst [vmem:[%s314 + $0x8] sm:%s306] %v319
                  %v321 = vld [vmem:[%s313 + $0x18] sm:%s306]
                  %322 = vst [vmem:[%s314 + $0xc] sm:%s306] %v321
                $region100: #{unet_down_conv_forward.15} parent=87 // loop_footer
                  %s312 = sadd.s32 1, %s308
                $region101: #{unet_down_conv_forward.15} parent=87 // loop_footer_branch
                  %307 = sbr.rel target = $region97
                $region102: #{unet_down_conv_forward.15} parent=87 // loop_exit
                  _
              $region88: #{unet_down_conv_forward.15} parent=72 // pred_fallthru
                _
            $region73: #{unet_down_conv_forward.15} parent=68 // pred_fallthru
              _
            // Predicated region
            $region74: #{unet_down_conv_forward.15} parent=68 // pred_check
              _
            $region75: #{unet_down_conv_forward.15} parent=68 // pred_check_branch
              %276 = sbr.rel (0) target = $region77
            $region76: #{unet_down_conv_forward.15} parent=68 // pred_region
              %s278 = ssub.s32 16, 1
              loop: start=0, step=1, limit=1
              $region78: #{unet_down_conv_forward.15} parent=76 // loop_pre_header
                _
              $region79: #{unet_down_conv_forward.15} parent=76 // loop_header
                %s280 = sphi 0, %s284
                %p281 = scmp.ge.s32.totalorder %s280, 1
                %s285 = sphi %s270, %s270
                %s286 = sphi %s265, %s265
              $region80: #{unet_down_conv_forward.15} parent=76 // loop_header_branch
                %283 = sbr.rel (%p281) target = $region84
              $region81: #{unet_down_conv_forward.15} parent=76 // loop_body
                %v287 = vld [vmem:[%s285] sm:%s278]
                %288 = vst [vmem:[%s286] sm:%s278] %v287
                %v289 = vld [vmem:[%s285 + $0x8] sm:%s278]
                %290 = vst [vmem:[%s286 + $0x4] sm:%s278] %v289
                %v291 = vld [vmem:[%s285 + $0x10] sm:%s278]
                %292 = vst [vmem:[%s286 + $0x8] sm:%s278] %v291
                %v293 = vld [vmem:[%s285 + $0x18] sm:%s278]
                %294 = vst [vmem:[%s286 + $0xc] sm:%s278] %v293
              $region82: #{unet_down_conv_forward.15} parent=76 // loop_footer
                %s284 = sadd.s32 1, %s280
              $region83: #{unet_down_conv_forward.15} parent=76 // loop_footer_branch
                %279 = sbr.rel target = $region79
              $region84: #{unet_down_conv_forward.15} parent=76 // loop_exit
                _
            $region77: #{unet_down_conv_forward.15} parent=68 // pred_fallthru
              _
          $region69: #{unet_down_conv_forward.15} parent=64 // pred_fallthru
            _
          %323 = vnop
        $region65: #{unet_down_conv_forward.15} parent=19 // pred_fallthru
          _
        // Predicated region
        $region103: #{unet_down_conv_forward.15} parent=19 // pred_check
          %p324 = pneg %p133
        $region104: #{unet_down_conv_forward.15} parent=19 // pred_check_branch
          %326 = sbr.rel (%p324) target = $region106
        $region105: #{unet_down_conv_forward.15} parent=19 // pred_region
          %p327 = scmp.lt.s32.totalorder %s17, 1
          %s328 = scalar_select %p327, %s17, 1
          %s329 = smul.addr %s328, 4
          %s330 = scalar_lea.vmem %s3, %s329
        $region106: #{unet_down_conv_forward.15} parent=19 // pred_fallthru
          _
      $region20: #{unet_down_conv_forward.15} parent=5 // pred_fallthru
        _
      %p331 = scmp.le.s32.totalorder 1, %s10
      %p332 = scmp.lt.s32.totalorder %s10, 3
      %p333 = pnand %p331, %p332
      %p334 = pneg %p333
      // Predicated region
      $region107: #{unet_down_conv_forward.15} parent=5 // pred_check
        _
      $region108: #{unet_down_conv_forward.15} parent=5 // pred_check_branch
        %336 = sbr.rel (%p333) target = $region110
      $region109: #{unet_down_conv_forward.15} parent=5 // pred_region
        %s337 = ssub.s32 %s10, 1
        %s338 = sand.u32 %s44, 1
        %s339 = sand.u32 %s44, 1
        %s340 = smul.addr %s339, 16
        %s341 = scalar_lea.vmem [#allocation2], %s340
        // Predicated region
        $region111: #{unet_down_conv_forward.15} parent=109 // pred_check
          %p342 = pneg %p57
        $region112: #{unet_down_conv_forward.15} parent=109 // pred_check_branch
          %344 = sbr.rel (%p342) target = $region114
        $region113: #{unet_down_conv_forward.15} parent=109 // pred_region
          _
        $region114: #{unet_down_conv_forward.15} parent=109 // pred_fallthru
          _
        %s345 = sand.u32 %s74, 1
        %s346 = sand.u32 %s74, 1
        %s347 = smul.addr %s346, 16
        %s348 = scalar_lea.vmem [#allocation3], %s347
        // Predicated region
        $region115: #{unet_down_conv_forward.15} parent=109 // pred_check
          %p349 = pneg %p87
        $region116: #{unet_down_conv_forward.15} parent=109 // pred_check_branch
          %351 = sbr.rel (%p349) target = $region118
        $region117: #{unet_down_conv_forward.15} parent=109 // pred_region
          _
        $region118: #{unet_down_conv_forward.15} parent=109 // pred_fallthru
          _
        %s352 = sand.u32 %s44, 1
        %s353 = sand.u32 %s44, 1
        %s354 = smul.addr %s353, 16
        %s355 = scalar_lea.vmem [#allocation2], %s354
        %p356 = pneg %p57
        %p357 = pneg %p54
        %s358 = sand.u32 %s74, 1
        %s359 = sand.u32 %s74, 1
        %s360 = smul.addr %s359, 16
        %s361 = scalar_lea.vmem [#allocation3], %s360
        %p362 = pneg %p87
        %p363 = pneg %p84
        %p364 = scmp.lt.s32.totalorder %s22, 0
        %s365 = scalar_select %p364, %s22, 0
        %s366 = smul.addr %s365, 8
        %s367 = scalar_lea.vmem %s2, %s366
        %p368 = pneg %p113
        %p369 = pneg %p110
        %p370 = scmp.lt.s32.totalorder %s20, 1
        %s371 = scalar_select %p370, %s20, 1
        %s372 = smul.addr %s371, 4
        %s373 = scalar_lea.vmem %s3, %s372
        %p374 = pneg %p139
        %p375 = pneg %p136
        %p376 = pneg %p169
        %p377 = pneg %p166
        %p378 = scmp.lt.s32.totalorder %s20, 1
        %s379 = scalar_select %p378, %s20, 1
        %p380 = scmp.lt.s32.totalorder %s22, 0
        %s381 = scalar_select %p380, %s22, 0
        %p382 = scmp.lt.s32.totalorder %s21, 0
        %s383 = scalar_select %p382, %s21, 0
        %s384 = sadd.s32 %s383, %s381
        %s385 = sadd.s32 %s384, %s379
        %s386 = smul.addr %s385, 8
        %s387 = scalar_lea.vmem %s4, %s386
        %s388 = sadd.s32 %s21, 1
        %p389 = scmp.lt.s32.totalorder %s22, 0
        %s390 = scalar_select %p389, %s22, 0
        %s391 = smul.addr %s390, 8
        %s392 = scalar_lea.vmem %s2, %s391
        %p393 = scmp.lt.s32.totalorder %s20, 1
        %s394 = scalar_select %p393, %s20, 1
        %s395 = smul.addr %s394, 4
        %s396 = scalar_lea.vmem %s3, %s395
        %p397 = scmp.lt.s32.totalorder %s20, 1
        %s398 = scalar_select %p397, %s20, 1
        %p399 = scmp.lt.s32.totalorder %s22, 0
        %s400 = scalar_select %p399, %s22, 0
        %p401 = scmp.lt.s32.totalorder %s21, 0
        %s402 = scalar_select %p401, %s21, 0
        %s403 = sadd.s32 %s402, %s400
        %s404 = sadd.s32 %s403, %s398
        %s405 = smul.addr %s404, 8
        %s406 = scalar_lea.vmem %s4, %s405
        %v407 = vld [vmem:[%s341] sm:$0xf]
        %v408 = vld [vmem:[%s341 + $0x4] sm:$0xf]
        %v409 = vld [vmem:[%s341 + $0x8] sm:$0xf]
        %v410 = vld [vmem:[%s341 + $0xc] sm:$0xf]
        %v411 = vld [vmem:[%s348] sm:$0xf]
        %v412 = vld [vmem:[%s348 + $0x4] sm:$0xf]
        %v413 = vld [vmem:[%s348 + $0x8] sm:$0xf]
        %415 = vrot.lane.b32.xlu0 %v407, 127
        %v416 = vpop.permute.xlu0 %415
        %419 = vrot.lane.b32.xlu0 %v411, 127
        %v420 = vpop.permute.xlu0 %419
        %vm422 = vcmask 1039360
        %v423 = vsel %vm422, %v416, %v420
        %425 = vrot.lane.b32.xlu0 %v409, 127
        %v426 = vpop.permute.xlu0 %425
        %429 = vrot.lane.b32.xlu0 %v413, 127
        %v430 = vpop.permute.xlu0 %429
        %v432 = vsel %vm422, %v426, %v430
        %433 = vrot.lane.b32.xlu0 %v407, 119
        %v434 = vpop.permute.xlu0 %433
        %436 = vrot.lane.b32.xlu0 %v411, 119
        %v437 = vpop.permute.xlu0 %436
        %vm439 = vcmask 973824
        %v440 = vsel %vm439, %v434, %v437
        %442 = vrot.lane.b32.xlu0 %v408, 119
        %v443 = vpop.permute.xlu0 %442
        %446 = vrot.lane.b32.xlu0 %v412, 119
        %v447 = vpop.permute.xlu0 %446
        %v449 = vsel %vm439, %v443, %v447
        %450 = vrot.lane.b32.xlu0 %v407, 118
        %v451 = vpop.permute.xlu0 %450
        %453 = vrot.lane.b32.xlu0 %v411, 118
        %v454 = vpop.permute.xlu0 %453
        %vm456 = vcmask 965632
        %v457 = vsel %vm456, %v451, %v454
        %v458 = vrot.slane %v408, 4
        %v460 = vrot.slane %v409, 4
        %v463 = vrot.slane %v432, 4
        %v466 = vrot.slane %v449, 4
        %vm468 = vcmask 1043456
        %v469 = vsel %vm468, %v407, %v458
        %v470 = vsel %vm468, %v423, %v460
        %v471 = vsel %vm468, %v410, %v463
        %v472 = vsel %vm468, %v440, %v466
        %v473 = vld [vmem:[%s392] sm:$0xff]
        %vm474 = vcmask 293888
        %v476 = vsel %vm474, %v473, 0
        %v479 = vsel %vm468, %v457, 0
        %481 = vmatpush.msra.mxu0 0.0
        %482 = vmatpush.msra.mxu0 0.0
        %483 = vmatpush.msra.mxu0 0.0
        %484 = vmatpush.msra.mxu0 0.0
        %485 = vmatpush.msra.mxu0 0.0
        %486 = vmatpush.msra.mxu0 0.0
        %487 = vmatpush.msra.mxu0 0.0
        %488 = vmatpush.msra.mxu0 0.0
        %489 = vmatpush.msra.mxu0 0.0
        %490 = vmatpush.msra.mxu0 0.0
        %491 = vmatpush.msra.mxu0 0.0
        %492 = vmatpush.msra.mxu0 %v479
        %493 = vmatpush.msra.mxu0 %v472
        %494 = vmatpush.msra.mxu0 %v471
        %495 = vmatpush.msra.mxu0 %v470
        %496 = vmatpush.msra.mxu0 %v469
        %497 = vmatmul.f32.gmra.mxu0 %v476
        %v498 = vpop.f32.mrf.mxu0
        %v499 = vadd.f32 0.0, %v498
        %500 = vdwg.mxu0
        %501 = vst [vmem:[%s406] sm:$0xff] %v499
        %p502 = scmp.lt.s32.totalorder %s20, 1
        %s503 = scalar_select %p502, %s20, 1
        %p504 = scmp.lt.s32.totalorder %s22, 0
        %s505 = scalar_select %p504, %s22, 0
        %p506 = scmp.lt.s32.totalorder %s21, 0
        %s507 = scalar_select %p506, %s21, 0
        %s508 = sadd.s32 %s507, %s505
        %s509 = sadd.s32 %s508, %s503
        %s510 = smul.addr %s509, 8
        %s511 = scalar_lea.vmem %s4, %s510
        // Predicated region
        $region119: #{unet_down_conv_forward.15} parent=109 // pred_check
          %p512 = pneg %p166
        $region120: #{unet_down_conv_forward.15} parent=109 // pred_check_branch
          %514 = sbr.rel (%p512) target = $region122
        $region121: #{unet_down_conv_forward.15} parent=109 // pred_region
          _
        $region122: #{unet_down_conv_forward.15} parent=109 // pred_fallthru
          _
      $region110: #{unet_down_conv_forward.15} parent=5 // pred_fallthru
        _
      %p515 = scmp.le.s32.totalorder 2, %s10
      // Predicated region
      $region123: #{unet_down_conv_forward.15} parent=5 // pred_check
        %p516 = pneg %p515
      $region124: #{unet_down_conv_forward.15} parent=5 // pred_check_branch
        %518 = sbr.rel (%p516) target = $region126
      $region125: #{unet_down_conv_forward.15} parent=5 // pred_region
        %s519 = ssub.s32 %s10, 2
        // Predicated region
        $region127: #{unet_down_conv_forward.15} parent=125 // pred_check
          %p520 = pneg %p172
        $region128: #{unet_down_conv_forward.15} parent=125 // pred_check_branch
          %522 = sbr.rel (%p520) target = $region130
        $region129: #{unet_down_conv_forward.15} parent=125 // pred_region
          %p523 = scmp.lt.s32.totalorder %s23, 1
          %s524 = scalar_select %p523, %s23, 1
          %p525 = scmp.lt.s32.totalorder %s25, 0
          %s526 = scalar_select %p525, %s25, 0
          %p527 = scmp.lt.s32.totalorder %s24, 0
          %s528 = scalar_select %p527, %s24, 0
          %s529 = sadd.s32 %s528, %s526
          %s530 = sadd.s32 %s529, %s524
          %s531 = smul.addr %s530, 8
          %s532 = scalar_lea.vmem %s4, %s531
        $region130: #{unet_down_conv_forward.15} parent=125 // pred_fallthru
          _
      $region126: #{unet_down_conv_forward.15} parent=5 // pred_fallthru
        _
    $region6: #{unet_down_conv_forward.15} parent=1 // loop_footer
      %s14 = sadd.s32 1, %s10
    $region7: #{unet_down_conv_forward.15} parent=1 // loop_footer_branch
      %9 = sbr.rel target = $region3
    $region8: #{unet_down_conv_forward.15} parent=1 // loop_exit
      _

// kernel: unet_down_conv_forward.17
$region0: #{unet_down_conv_forward.17}
  #allocation0 [shape = 'u32[]', space=smem, size = 0x4, offset = 0x4, fixed_abs, tag = 'smem constant byte address 0x4 - core index']
  #allocation1 [shape = 'u32[72,128]{1,0:T(1,128)}', space=vmem, size = 0x9000, scoped, tag = 'internal scratch']
  %s0 = inlined_call_operand.vmem [shape: f32[16,64], index: 0, kind: input, shape index: {}]
  %s1 = inlined_call_operand.vmem [shape: f32[16,64], index: 1, kind: input, shape index: {}]
  %s2 = inlined_call_operand.vmem [shape: f32[16,2], index: 2, kind: input, shape index: {}]
  %s3 = inlined_call_operand.vmem [shape: f32[16,64], index: 3, kind: output, shape index: {}]
  %s4 = sld [smem:[#allocation0]]
  $region22: #{unet_down_conv_forward.17} parent=0
    _
  %s6 = ssub.s32 1, %s4
  %s7 = scalar_select 0, %s6, %s4
  // Predicated region
  $region2: #{unet_down_conv_forward.17} parent=0 // pred_check
    _
  $region3: #{unet_down_conv_forward.17} parent=0 // pred_check_branch
    %9 = sbr.rel (0) target = $region5
  $region4: #{unet_down_conv_forward.17} parent=0 // pred_region
    _
  $region5: #{unet_down_conv_forward.17} parent=0 // pred_fallthru
    _
  // Predicated region
  $region6: #{unet_down_conv_forward.17} parent=0 // pred_check
    _
  $region7: #{unet_down_conv_forward.17} parent=0 // pred_check_branch
    %11 = sbr.rel (0) target = $region9
  $region8: #{unet_down_conv_forward.17} parent=0 // pred_region
    _
  $region9: #{unet_down_conv_forward.17} parent=0 // pred_fallthru
    _
  // Predicated region
  $region10: #{unet_down_conv_forward.17} parent=0 // pred_check
    _
  $region11: #{unet_down_conv_forward.17} parent=0 // pred_check_branch
    %13 = sbr.rel (0) target = $region13
  $region12: #{unet_down_conv_forward.17} parent=0 // pred_region
    _
  $region13: #{unet_down_conv_forward.17} parent=0 // pred_fallthru
    _
  %v14 = vld [vmem:[%s1] sm:$0xff]
  %v15 = vld [vmem:[%s1 + $0x8] sm:$0xff]
  %v16 = vld [vmem:[%s0] sm:$0xff]
  %v17 = vld [vmem:[%s0 + $0x8] sm:$0xff]
  %v18 = vld [vmem:[%s2] sm:$0xff]
  %v19 = vld [vmem:[%s2 + $0x8] sm:$0xff]
  %21 = vset.pattern.permute.xlu0 0
  %22 = vperm.xlu0 %21, %v18
  %v23 = vpop.permute.xlu0 %22
  %26 = vset.pattern.permute.xlu0 0
  %27 = vperm.xlu0 %26, %v19
  %v28 = vpop.permute.xlu0 %27
  %v30 = vsub.f32 %v16, %v23
  %v31 = vsub.f32 %v17, %v28
  %32 = vset.pattern.permute.xlu0 1
  %33 = vperm.xlu0 %32, %v18
  %v34 = vpop.permute.xlu0 %33
  %36 = vset.pattern.permute.xlu0 1
  %37 = vperm.xlu0 %36, %v19
  %v38 = vpop.permute.xlu0 %37
  %v40 = vmul.f32 %v30, %v34
  %v41 = vmul.f32 %v31, %v38
  %v42 = vadd.f32 %v14, %v40
  %v43 = vadd.f32 %v15, %v41
  %vm44 = vcmask 523264
  %45 = vst.msk [vmem:[%s3] sm:$0xff] %vm44, %v42
  %46 = vst.msk [vmem:[%s3 + $0x8] sm:$0xff] %vm44, %v43
  // Predicated region
  $region14: #{unet_down_conv_forward.17} parent=0 // pred_check
    _
  $region15: #{unet_down_conv_forward.17} parent=0 // pred_check_branch
    %48 = sbr.rel (0) target = $region17
  $region16: #{unet_down_conv_forward.17} parent=0 // pred_region
    _
  $region17: #{unet_down_conv_forward.17} parent=0 // pred_fallthru
    _
  // Predicated region
  $region18: #{unet_down_conv_forward.17} parent=0 // pred_check
    _
  $region19: #{unet_down_conv_forward.17} parent=0 // pred_check_branch
    %50 = sbr.rel (0) target = $region21
  $region20: #{unet_down_conv_forward.17} parent=0 // pred_region
    _
  $region21: #{unet_down_conv_forward.17} parent=0 // pred_fallthru
    _

</llo_original>
